<compile_context>
chip_gen: v5e
topology: v5e:2x2
jax: 0.10.0
libtpu: 0.0.40
codegen_flags: <defaults>
</compile_context>

<pallas_src>
import functools

import numpy as np
import jax
import jax.numpy as jnp
from jax.experimental import pallas as pl
from jax.experimental.pallas import tpu as pltpu

SR = 16000
N_FFT = 400
HOP = 200
N_FREQ = N_FFT // 2 + 1          # 201
N_FREQ_PAD = 256                 # freq bins padded to 2*128 lanes (per re/im half)
CHUNK = HOP                      # 200 raw samples per hop-chunk
CHUNK_PAD = 256                  # chunk padded to 2*128 lanes
N_MELS = 128
N_MFCC = 40
VGG_PATCH = 8                    # log-mel frames per stand-in VGGish patch
VGG_DIM = 128
TOP_DB = 80.0


# ----------------------------------------------------------------------------
# Fused kernel
# ----------------------------------------------------------------------------
def fused_extractor_kernel(chunks_ref, csw_top_ref, csw_bot_ref, fb_ref, cw_ref,
                           bias_ref, w1_ref, b1_ref, w2_ref, b2_ref,
                           out_ref, mel_ref, *, nf, fd, min_len, n_patch):
    """STFT power -> mel -> log2/dB -> folded MFCC -> VGGish stand-in -> pooled concat."""
    # Frame f = [chunk f | chunk f+1]; Hann window + DFT are folded into
    # csw_top/csw_bot, so the overlapped [nf,512] frame matrix never exists:
    # two summed matmuls on the chunk array replace it.  The offset-1 read is a
    # single sublane-shift pass (same XLU work as an explicit pltpu.roll).
    ch_lo = chunks_ref[pl.ds(0, nf), :]                       # [nf, 256] bf16
    ch_hi = chunks_ref[pl.ds(1, nf), :]                       # chunk f+1
    spec = (jnp.dot(ch_lo, csw_top_ref[...], preferred_element_type=jnp.float32)
            + jnp.dot(ch_hi, csw_bot_ref[...], preferred_element_type=jnp.float32))
    re = spec[:, :N_FREQ_PAD]
    im = spec[:, N_FREQ_PAD:]
    power = re * re + im * im                                 # [nf, 256] f32

    mel = jnp.dot(power.astype(jnp.bfloat16), fb_ref[...],
                  preferred_element_type=jnp.float32)         # [nf, 128]
    mel_log2 = jnp.log2(mel + 1e-6)                           # _extract_mel

    # Stash the patch rows in VMEM for the strided VGGish reads below (no HBM).
    mel_ref[...] = mel_log2[:n_patch * VGG_PATCH, :]

    # MFCC path: AmplitudeToDB(power, top_db=80).  The whole clip is in this one
    # block, so jnp.max(db) is the true GLOBAL max (matches torchaudio).
    db = 10.0 * jnp.log10(jnp.maximum(mel, 1e-10))
    db = jnp.maximum(db, jnp.max(db) - TOP_DB)
    # Folded DCT(128->40) @ Linear(40->128): one [128,128] weight + bias.
    mfcc = jnp.dot(db.astype(jnp.bfloat16), cw_ref[...],
                   preferred_element_type=jnp.float32) + bias_ref[...]

    # Reference quirk, reproduced exactly: features are transposed, truncated to
    # [:min_len, :fd], then mean(0) -> mean over the first `min_len` CHANNELS for
    # each of the first `fd` time frames.  Done as a masked matvec contracting
    # the lane (channel) axis, so the result lands lane-dense in the output and
    # no transposed copy ever exists.
    lane = jax.lax.broadcasted_iota(jnp.int32, (1, N_MELS), 1)
    m_row = jnp.where(lane < min_len, 1.0 / min_len, 0.0).astype(jnp.float32)
    dn = (((1,), (1,)), ((), ()))                             # contract lane axes
    pooled_mfcc = jax.lax.dot_general(m_row, mfcc[:fd, :], dn,
                                      preferred_element_type=jnp.float32)  # [1, fd]
    pooled_mel = jax.lax.dot_general(m_row, mel_log2[:fd, :], dn,
                                     preferred_element_type=jnp.float32)   # [1, fd]

    # VGGish stand-in MLP on 8-frame log-mel patches.  patches @ w1 is computed
    # as 8 accumulated [n_patch,128]x[128,128] matmuls over stride-8 row slices
    # of the VMEM scratch (w1 pre-reshaped to (8,128,128) host-side), so the
    # [n_patch, 1024] patch matrix is never materialized.  w2 is applied after
    # the mean (linearity), shrinking it to a single [1,128]x[128,128] matvec.
    acc = jnp.zeros((n_patch, VGG_DIM), jnp.float32)
    for r in range(VGG_PATCH):
        m_r = mel_ref[pl.ds(r, n_patch, stride=VGG_PATCH), :]    # rows r, r+8, ...
        acc = acc + jnp.dot(m_r.astype(jnp.bfloat16), w1_ref[r],
                            preferred_element_type=jnp.float32)
    h = jnp.maximum(acc + b1_ref[...], 0.0)                      # [n_patch, 128]
    h_mean = jnp.mean(h, axis=0, keepdims=True)                  # [1, 128]
    vgg_mean = jnp.dot(h_mean.astype(jnp.bfloat16), w2_ref[...],
                       preferred_element_type=jnp.float32) + b2_ref[...]

    out_ref[...] = jnp.concatenate([pooled_mfcc, pooled_mel, vgg_mean], axis=1)


# ----------------------------------------------------------------------------
# pallas_call wrapper
# ----------------------------------------------------------------------------
def _full_spec(shape):
    return pl.BlockSpec(shape, lambda i: (0,) * len(shape))


def fused_forward(chunks, params, *, nf, fd, min_len, n_patch):
    kern = functools.partial(fused_extractor_kernel, nf=nf, fd=fd,
                             min_len=min_len, n_patch=n_patch)
    out_dim = 2 * fd + VGG_DIM
    inputs = (chunks, params["csw_top"], params["csw_bot"], params["fb"],
              params["cw"], params["bias"], params["vgg_w1"], params["vgg_b1"],
              params["vgg_w2"], params["vgg_b2"])

    in_bytes = sum(int(np.prod(a.shape)) * a.dtype.itemsize for a in inputs)
    out_bytes = out_dim * 4
    flops = (4 * nf * CHUNK_PAD * 2 * N_FREQ_PAD          # two summed DFT matmuls
             + 2 * nf * N_FREQ_PAD * N_MELS               # mel filterbank
             + 2 * nf * N_MELS * N_MELS                   # folded DCT + proj
             + 2 * VGG_PATCH * n_patch * N_MELS * VGG_DIM # vgg layer 1
             + 2 * VGG_DIM * VGG_DIM                      # vgg layer 2 (post-mean)
             + 4 * fd * N_MELS)                           # pooled matvecs
    cost = pl.CostEstimate(flops=flops, transcendentals=2 * nf * N_MELS,
                           bytes_accessed=in_bytes + out_bytes)

    # Whole-clip single block: size the scoped VMEM limit to the actual working
    # set (v5e's default scoped limit is only 16 MiB) with generous headroom,
    # capped well under v7x's 64 MiB physical VMEM.
    scratch_bytes = n_patch * VGG_PATCH * N_MELS * 4
    interm_bytes = 6 * nf * 2 * N_FREQ_PAD * 4
    ws = 2 * in_bytes + out_bytes + scratch_bytes + interm_bytes
    vmem_limit = int(min(48 * 1024 * 1024, max(16 * 1024 * 1024, 4 * ws)))

    return pl.pallas_call(
        kern,
        out_shape=jax.ShapeDtypeStruct((1, out_dim), jnp.float32),
        grid=(1,),
        in_specs=[_full_spec(a.shape) for a in inputs],
        out_specs=_full_spec((1, out_dim)),
        scratch_shapes=[pltpu.VMEM((n_patch * VGG_PATCH, N_MELS), jnp.float32)],
        compiler_params=pltpu.CompilerParams(
            dimension_semantics=("arbitrary",),
            vmem_limit_bytes=vmem_limit),
        cost_estimate=cost,
    )(*inputs)


# ----------------------------------------------------------------------------
# Deterministic parameter / constant construction (host-side folding)
# ----------------------------------------------------------------------------
def _stft_weights():
    """Split halves of [hann*cos | hann*sin]: csw_top / csw_bot, [256, 512] each.

    Row layout matches the hop-chunk operands: window samples 0..199 multiply
    chunk f (top), samples 200..399 multiply chunk f+1 (bottom)."""
    n = np.arange(N_FFT, dtype=np.float64)
    hann = 0.5 * (1.0 - np.cos(2.0 * np.pi * n / N_FFT))        # periodic hann
    k = np.arange(N_FREQ, dtype=np.float64)
    ang = 2.0 * np.pi * n[:, None] * k[None, :] / N_FFT
    cosm = np.cos(ang) * hann[:, None]                          # [400, 201]
    sinm = -np.sin(ang) * hann[:, None]
    top = np.zeros((CHUNK_PAD, 2 * N_FREQ_PAD), np.float32)
    bot = np.zeros((CHUNK_PAD, 2 * N_FREQ_PAD), np.float32)
    top[:CHUNK, :N_FREQ] = cosm[:CHUNK]
    top[:CHUNK, N_FREQ_PAD:N_FREQ_PAD + N_FREQ] = sinm[:CHUNK]
    bot[:CHUNK, :N_FREQ] = cosm[CHUNK:]
    bot[:CHUNK, N_FREQ_PAD:N_FREQ_PAD + N_FREQ] = sinm[CHUNK:]
    return top, bot


def _mel_filterbank():
    """torchaudio melscale_fbanks (htk, norm=None), padded to N_FREQ_PAD rows."""
    all_freqs = np.linspace(0.0, SR / 2.0, N_FREQ)
    hz2mel = lambda f: 2595.0 * np.log10(1.0 + f / 700.0)
    mel2hz = lambda m: 700.0 * (10.0 ** (m / 2595.0) - 1.0)
    m_pts = np.linspace(hz2mel(0.0), hz2mel(SR / 2.0), N_MELS + 2)
    f_pts = mel2hz(m_pts)
    f_diff = f_pts[1:] - f_pts[:-1]
    slopes = f_pts[None, :] - all_freqs[:, None]
    down = -slopes[:, :-2] / f_diff[:-1]
    up = slopes[:, 2:] / f_diff[1:]
    fb = np.maximum(0.0, np.minimum(down, up)).astype(np.float32)   # [201, 128]
    fb_pad = np.zeros((N_FREQ_PAD, N_MELS), np.float32)
    fb_pad[:N_FREQ] = fb
    return fb_pad


def _dct_matrix():
    """torchaudio.functional.create_dct(n_mfcc=40, n_mels=128, norm='ortho') -> [128, 40]."""
    n = np.arange(N_MELS, dtype=np.float64)[:, None]
    k = np.arange(N_MFCC, dtype=np.float64)[None, :]
    dct = np.cos(np.pi / N_MELS * (n + 0.5) * k)                    # [128, 40]
    dct[:, 0] *= 1.0 / np.sqrt(2.0)
    dct *= np.sqrt(2.0 / N_MELS)
    return dct.astype(np.float32)


def init_params(key):
    k1, k2, k3, k4, k5, k6 = jax.random.split(key, 6)
    params = {}
    # bf16 weights + f32 MXU accumulation (perf review): default TPU matmul
    # precision is a single bf16 pass anyway, so f32 storage only paid bandwidth.
    top, bot = _stft_weights()
    params["csw_top"] = jnp.asarray(top, jnp.bfloat16)              # [256, 512]
    params["csw_bot"] = jnp.asarray(bot, jnp.bfloat16)              # [256, 512]
    params["fb"] = jnp.asarray(_mel_filterbank(), jnp.bfloat16)     # [256, 128]
    # mfcc_proj = nn.Linear(40, 128); fold with the DCT: cw = dct @ W.T (exact).
    bound = 1.0 / np.sqrt(N_MFCC)
    w = jax.random.uniform(k1, (128, N_MFCC), jnp.float32, -bound, bound)
    b = jax.random.uniform(k2, (128,), jnp.float32, -bound, bound)
    params["cw"] = jnp.dot(jnp.asarray(_dct_matrix()), w.T).astype(jnp.bfloat16)
    params["bias"] = b.reshape(1, 128)                              # f32
    # VGGish stand-in (deterministic; see TODO at top).  w1 is pre-reshaped to
    # (8, 128, 128) so patch row r maps to slice w1[r].
    d_in = VGG_PATCH * N_MELS
    b1 = 1.0 / np.sqrt(d_in)
    b2 = 1.0 / np.sqrt(VGG_DIM)
    w1 = jax.random.uniform(k3, (d_in, VGG_DIM), jnp.float32, -b1, b1)
    params["vgg_w1"] = w1.reshape(VGG_PATCH, N_MELS, VGG_DIM).astype(jnp.bfloat16)
    params["vgg_b1"] = jax.random.uniform(k4, (1, VGG_DIM), jnp.float32, -b1, b1)
    params["vgg_w2"] = jax.random.uniform(k5, (VGG_DIM, VGG_DIM), jnp.float32,
                                          -b2, b2).astype(jnp.bfloat16)
    params["vgg_b2"] = jax.random.uniform(k6, (1, VGG_DIM), jnp.float32, -b2, b2)
    return params


# ----------------------------------------------------------------------------
# Forward pass (mirrors AudioFeatureExtractor.forward)
# ----------------------------------------------------------------------------
def audio_feature_extractor(waveform, params):
    t = waveform.shape[0]
    if t < 1:
        return jnp.zeros((296,), jnp.float32)      # reference's own quirk
    if t < 960:
        waveform = jnp.pad(waveform, (0, 960 - t))
        t = 960
    wav = jnp.clip(waveform.astype(jnp.float32), -1.0, 1.0)

    # Center reflect pad, then split into hop-sized chunks; overlapping frames
    # are reconstructed inside the kernel via the split-csw matmuls (hop == win//2).
    padded = jnp.pad(wav, (N_FFT // 2, N_FFT // 2), mode="reflect")
    nf = 1 + t // HOP                              # STFT frame count
    nc = nf + 1                                    # hop-sized chunks
    nc_pad = ((nc + 7) // 8) * 8
    chunks = padded[: nc * HOP].reshape(nc, HOP)
    chunks = jnp.pad(chunks, ((0, nc_pad - nc), (0, CHUNK_PAD - HOP)))
    chunks = chunks.astype(jnp.bfloat16)           # [nc_pad, 256]

    n_patch = nf // VGG_PATCH
    fd = min(VGG_DIM, nf)                          # feature_dim in reference
    min_len = min(n_patch, N_MELS)                 # min_length in reference
    if n_patch == 0:
        # TODO(synk): clip shorter than one VGGish patch — reference path is
        # degenerate; return zeros of the concatenated width.
        return jnp.zeros((2 * fd + VGG_DIM,), jnp.float32)

    out = fused_forward(chunks, params, nf=nf, fd=fd,
                        min_len=min_len, n_patch=n_patch)
    return out[0]


# ----------------------------------------------------------------------------
if __name__ == "__main__":
    key = jax.random.PRNGKey(0)
    pkey, wkey = jax.random.split(key)
    params = init_params(pkey)
    # 1.6 s of audio at 16 kHz -> 129 STFT frames -> feature_dim = 128 -> 384-d output
    waveform = jax.random.uniform(wkey, (25600,), jnp.float32, -1.0, 1.0)

    feats = audio_feature_extractor(waveform, params)
    feats = jax.block_until_ready(feats)

    assert feats.shape == (2 * 128 + 128,), feats.shape
    assert bool(jnp.all(jnp.isfinite(feats)))
    print("KERNEL_OK")
</pallas_src>

<mosaic_0001>
module attributes {stable_mosaic.version = 11 : i64} {
  func.func @fused_extractor_kernel(%arg0: i32, %arg1: memref<136x256xbf16, #tpu.memory_space<vmem>>, %arg2: memref<256x512xbf16, #tpu.memory_space<vmem>>, %arg3: memref<256x512xbf16, #tpu.memory_space<vmem>>, %arg4: memref<256x128xbf16, #tpu.memory_space<vmem>>, %arg5: memref<128x128xbf16, #tpu.memory_space<vmem>>, %arg6: memref<1x128xf32, #tpu.memory_space<vmem>>, %arg7: memref<8x128x128xbf16, #tpu.memory_space<vmem>>, %arg8: memref<1x128xf32, #tpu.memory_space<vmem>>, %arg9: memref<128x128xbf16, #tpu.memory_space<vmem>>, %arg10: memref<1x128xf32, #tpu.memory_space<vmem>>, %arg11: memref<1x384xf32, #tpu.memory_space<vmem>>, %arg12: memref<128x128xf32, #tpu.memory_space<vmem>>) attributes {dimension_semantics = [#tpu.dimension_semantics<arbitrary>], iteration_bounds = array<i64: 1>, scalar_prefetch = 0 : i64, scratch_operands = 1 : i64, tpu.core_type = #tpu.core_type<tc>, window_params = [{pipeline_mode = #tpu.pipeline_mode<synchronous>, transform_indices = @transform_0, window_bounds = array<i64: 136, 256>}, {pipeline_mode = #tpu.pipeline_mode<synchronous>, transform_indices = @transform_1, window_bounds = array<i64: 256, 512>}, {pipeline_mode = #tpu.pipeline_mode<synchronous>, transform_indices = @transform_2, window_bounds = array<i64: 256, 512>}, {pipeline_mode = #tpu.pipeline_mode<synchronous>, transform_indices = @transform_3, window_bounds = array<i64: 256, 128>}, {pipeline_mode = #tpu.pipeline_mode<synchronous>, transform_indices = @transform_4, window_bounds = array<i64: 128, 128>}, {pipeline_mode = #tpu.pipeline_mode<synchronous>, transform_indices = @transform_5, window_bounds = array<i64: 1, 128>}, {pipeline_mode = #tpu.pipeline_mode<synchronous>, transform_indices = @transform_6, window_bounds = array<i64: 8, 128, 128>}, {pipeline_mode = #tpu.pipeline_mode<synchronous>, transform_indices = @transform_7, window_bounds = array<i64: 1, 128>}, {pipeline_mode = #tpu.pipeline_mode<synchronous>, transform_indices = @transform_8, window_bounds = array<i64: 128, 128>}, {pipeline_mode = #tpu.pipeline_mode<synchronous>, transform_indices = @transform_9, window_bounds = array<i64: 1, 128>}, {pipeline_mode = #tpu.pipeline_mode<synchronous>, transform_indices = @transform_10, window_bounds = array<i64: 1, 384>}]} {
    %c0 = arith.constant 0 : index
    %c0_0 = arith.constant 0 : index
    %0 = vector.load %arg1[%c0, %c0_0] : memref<136x256xbf16, #tpu.memory_space<vmem>>, vector<129x256xbf16>
    %c1 = arith.constant 1 : index
    %c0_1 = arith.constant 0 : index
    %1 = vector.load %arg1[%c1, %c0_1] : memref<136x256xbf16, #tpu.memory_space<vmem>>, vector<129x256xbf16>
    %c0_2 = arith.constant 0 : index
    %c0_3 = arith.constant 0 : index
    %2 = vector.load %arg2[%c0_2, %c0_3] : memref<256x512xbf16, #tpu.memory_space<vmem>>, vector<256x512xbf16>
    %cst = arith.constant dense<0.000000e+00> : vector<129x512xf32>
    %3 = tpu.matmul %0, %2, %cst {dimension_numbers = #tpu.dot_dimension_numbers<[1], [0], [0], [1], [0, 0, 1, 1], [], []>} : vector<129x256xbf16>, vector<256x512xbf16>, vector<129x512xf32> -> vector<129x512xf32>
    %c0_4 = arith.constant 0 : index
    %c0_5 = arith.constant 0 : index
    %4 = vector.load %arg3[%c0_4, %c0_5] : memref<256x512xbf16, #tpu.memory_space<vmem>>, vector<256x512xbf16>
    %cst_6 = arith.constant dense<0.000000e+00> : vector<129x512xf32>
    %5 = tpu.matmul %1, %4, %cst_6 {dimension_numbers = #tpu.dot_dimension_numbers<[1], [0], [0], [1], [0, 0, 1, 1], [], []>} : vector<129x256xbf16>, vector<256x512xbf16>, vector<129x512xf32> -> vector<129x512xf32>
    %6 = arith.addf %3, %5 : vector<129x512xf32>
    %7 = vector.extract_strided_slice %6 {offsets = [0, 0], sizes = [129, 256], strides = [1, 1]} : vector<129x512xf32> to vector<129x256xf32>
    %8 = vector.extract_strided_slice %6 {offsets = [0, 256], sizes = [129, 256], strides = [1, 1]} : vector<129x512xf32> to vector<129x256xf32>
    %9 = arith.mulf %7, %7 : vector<129x256xf32>
    %10 = arith.mulf %8, %8 : vector<129x256xf32>
    %11 = arith.addf %9, %10 : vector<129x256xf32>
    %12 = arith.truncf %11 : vector<129x256xf32> to vector<129x256xbf16>
    %c0_7 = arith.constant 0 : index
    %c0_8 = arith.constant 0 : index
    %13 = vector.load %arg4[%c0_7, %c0_8] : memref<256x128xbf16, #tpu.memory_space<vmem>>, vector<256x128xbf16>
    %cst_9 = arith.constant dense<0.000000e+00> : vector<129x128xf32>
    %14 = tpu.matmul %12, %13, %cst_9 {dimension_numbers = #tpu.dot_dimension_numbers<[1], [0], [0], [1], [0, 0, 1, 1], [], []>} : vector<129x256xbf16>, vector<256x128xbf16>, vector<129x128xf32> -> vector<129x128xf32>
    %cst_10 = arith.constant 9.99999997E-7 : f32
    %15 = vector.broadcast %cst_10 : f32 to vector<129x128xf32>
    %16 = arith.addf %14, %15 : vector<129x128xf32>
    %17 = math.log %16 : vector<129x128xf32>
    %cst_11 = arith.constant 2.000000e+00 : f32
    %18 = math.log %cst_11 : f32
    %19 = vector.broadcast %18 : f32 to vector<129x128xf32>
    %20 = arith.divf %17, %19 : vector<129x128xf32>
    %21 = vector.extract_strided_slice %20 {offsets = [0, 0], sizes = [128, 128], strides = [1, 1]} : vector<129x128xf32> to vector<128x128xf32>
    %c0_12 = arith.constant 0 : index
    %c0_13 = arith.constant 0 : index
    %22 = vector.load %arg12[%c0_12, %c0_13] : memref<128x128xf32, #tpu.memory_space<vmem>>, vector<128x128xf32>
    tpu.vector_store %arg12[%c0_12, %c0_13], %21 {strides = array<i32>} : memref<128x128xf32, #tpu.memory_space<vmem>>, vector<128x128xf32>,
    %cst_14 = arith.constant 1.000000e-10 : f32
    %23 = vector.broadcast %cst_14 : f32 to vector<129x128xf32>
    %24 = arith.maximumf %14, %23 : vector<129x128xf32>
    %25 = math.log %24 : vector<129x128xf32>
    %cst_15 = arith.constant 0.434294492 : f32
    %26 = vector.broadcast %cst_15 : f32 to vector<129x128xf32>
    %27 = arith.mulf %25, %26 : vector<129x128xf32>
    %cst_16 = arith.constant 1.000000e+01 : f32
    %28 = vector.broadcast %cst_16 : f32 to vector<129x128xf32>
    %29 = arith.mulf %28, %27 : vector<129x128xf32>
    %30 = vector.shape_cast %29 : vector<129x128xf32> to vector<1x129x128xf32>
    %cst_17 = arith.constant dense<0xFF800000> : vector<1xf32>
    %31 = vector.multi_reduction <maximumf>, %30, %cst_17 [1, 2] : vector<1x129x128xf32> to vector<1xf32>
    %32 = vector.shape_cast %31 : vector<1xf32> to vector<1x1x1xf32>
    %33 = vector.extract %32[0, 0, 0] : f32 from vector<1x1x1xf32>
    %cst_18 = arith.constant 8.000000e+01 : f32
    %34 = arith.subf %33, %cst_18 : f32
    %35 = vector.broadcast %34 : f32 to vector<129x128xf32>
    %36 = arith.maximumf %29, %35 : vector<129x128xf32>
    %37 = arith.truncf %36 : vector<129x128xf32> to vector<129x128xbf16>
    %c0_19 = arith.constant 0 : index
    %c0_20 = arith.constant 0 : index
    %38 = vector.load %arg5[%c0_19, %c0_20] : memref<128x128xbf16, #tpu.memory_space<vmem>>, vector<128x128xbf16>
    %cst_21 = arith.constant dense<0.000000e+00> : vector<129x128xf32>
    %39 = tpu.matmul %37, %38, %cst_21 {dimension_numbers = #tpu.dot_dimension_numbers<[1], [0], [0], [1], [0, 0, 1, 1], [], []>} : vector<129x128xbf16>, vector<128x128xbf16>, vector<129x128xf32> -> vector<129x128xf32>
    %c0_22 = arith.constant 0 : index
    %c0_23 = arith.constant 0 : index
    %40 = vector.load %arg6[%c0_22, %c0_23] : memref<1x128xf32, #tpu.memory_space<vmem>>, vector<1x128xf32>
    %41 = vector.broadcast %40 : vector<1x128xf32> to vector<129x128xf32>
    %42 = arith.addf %39, %41 : vector<129x128xf32>
    %43 = tpu.iota {dimensions = array<i32: 1>} : vector<1x128xi32>
    %c16_i32 = arith.constant 16 : i32
    %44 = vector.broadcast %c16_i32 : i32 to vector<1x128xi32>
    %45 = arith.cmpi slt, %43, %44 : vector<1x128xi32>
    %cst_24 = arith.constant 6.250000e-02 : f32
    %cst_25 = arith.constant 0.000000e+00 : f32
    %46 = vector.broadcast %cst_24 : f32 to vector<1x128xf32>
    %47 = vector.broadcast %cst_25 : f32 to vector<1x128xf32>
    %48 = arith.select %45, %46, %47 : vector<1x128xi1>, vector<1x128xf32>
    %49 = vector.extract_strided_slice %42 {offsets = [0, 0], sizes = [128, 128], strides = [1, 1]} : vector<129x128xf32> to vector<128x128xf32>
    %cst_26 = arith.constant dense<0.000000e+00> : vector<1x128xf32>
    %50 = tpu.matmul %48, %49, %cst_26 {dimension_numbers = #tpu.dot_dimension_numbers<[1], [1], [0], [0], [0, 0, 1, 0], [], []>} : vector<1x128xf32>, vector<128x128xf32>, vector<1x128xf32> -> vector<1x128xf32>
    %51 = vector.extract_strided_slice %20 {offsets = [0, 0], sizes = [128, 128], strides = [1, 1]} : vector<129x128xf32> to vector<128x128xf32>
    %cst_27 = arith.constant dense<0.000000e+00> : vector<1x128xf32>
    %52 = tpu.matmul %48, %51, %cst_27 {dimension_numbers = #tpu.dot_dimension_numbers<[1], [1], [0], [0], [0, 0, 1, 0], [], []>} : vector<1x128xf32>, vector<128x128xf32>, vector<1x128xf32> -> vector<1x128xf32>
    %cst_28 = arith.constant 0.000000e+00 : f32
    %53 = vector.broadcast %cst_28 : f32 to vector<16x128xf32>
    %c0_29 = arith.constant 0 : index
    %c0_30 = arith.constant 0 : index
    %54 = tpu.strided_load %arg12[%c0_29, %c0_30] {strides = array<i32: 8, 1>} : memref<128x128xf32, #tpu.memory_space<vmem>>, vector<16x128xf32>
    %55 = arith.truncf %54 : vector<16x128xf32> to vector<16x128xbf16>
    %c0_31 = arith.constant 0 : index
    %c0_32 = arith.constant 0 : index
    %c0_33 = arith.constant 0 : index
    %56 = vector.load %arg7[%c0_31, %c0_32, %c0_33] : memref<8x128x128xbf16, #tpu.memory_space<vmem>>, vector<1x128x128xbf16>
    %57 = vector.shape_cast %56 : vector<1x128x128xbf16> to vector<128x128xbf16>
    %cst_34 = arith.constant dense<0.000000e+00> : vector<16x128xf32>
    %58 = tpu.matmul %55, %57, %cst_34 {dimension_numbers = #tpu.dot_dimension_numbers<[1], [0], [0], [1], [0, 0, 1, 1], [], []>} : vector<16x128xbf16>, vector<128x128xbf16>, vector<16x128xf32> -> vector<16x128xf32>
    %59 = arith.addf %53, %58 : vector<16x128xf32>
    %c1_35 = arith.constant 1 : index
    %c0_36 = arith.constant 0 : index
    %60 = tpu.strided_load %arg12[%c1_35, %c0_36] {strides = array<i32: 8, 1>} : memref<128x128xf32, #tpu.memory_space<vmem>>, vector<16x128xf32>
    %61 = arith.truncf %60 : vector<16x128xf32> to vector<16x128xbf16>
    %c1_37 = arith.constant 1 : index
    %c0_38 = arith.constant 0 : index
    %c0_39 = arith.constant 0 : index
    %62 = vector.load %arg7[%c1_37, %c0_38, %c0_39] : memref<8x128x128xbf16, #tpu.memory_space<vmem>>, vector<1x128x128xbf16>
    %63 = vector.shape_cast %62 : vector<1x128x128xbf16> to vector<128x128xbf16>
    %cst_40 = arith.constant dense<0.000000e+00> : vector<16x128xf32>
    %64 = tpu.matmul %61, %63, %cst_40 {dimension_numbers = #tpu.dot_dimension_numbers<[1], [0], [0], [1], [0, 0, 1, 1], [], []>} : vector<16x128xbf16>, vector<128x128xbf16>, vector<16x128xf32> -> vector<16x128xf32>
    %65 = arith.addf %59, %64 : vector<16x128xf32>
    %c2 = arith.constant 2 : index
    %c0_41 = arith.constant 0 : index
    %66 = tpu.strided_load %arg12[%c2, %c0_41] {strides = array<i32: 8, 1>} : memref<128x128xf32, #tpu.memory_space<vmem>>, vector<16x128xf32>
    %67 = arith.truncf %66 : vector<16x128xf32> to vector<16x128xbf16>
    %c2_42 = arith.constant 2 : index
    %c0_43 = arith.constant 0 : index
    %c0_44 = arith.constant 0 : index
    %68 = vector.load %arg7[%c2_42, %c0_43, %c0_44] : memref<8x128x128xbf16, #tpu.memory_space<vmem>>, vector<1x128x128xbf16>
    %69 = vector.shape_cast %68 : vector<1x128x128xbf16> to vector<128x128xbf16>
    %cst_45 = arith.constant dense<0.000000e+00> : vector<16x128xf32>
    %70 = tpu.matmul %67, %69, %cst_45 {dimension_numbers = #tpu.dot_dimension_numbers<[1], [0], [0], [1], [0, 0, 1, 1], [], []>} : vector<16x128xbf16>, vector<128x128xbf16>, vector<16x128xf32> -> vector<16x128xf32>
    %71 = arith.addf %65, %70 : vector<16x128xf32>
    %c3 = arith.constant 3 : index
    %c0_46 = arith.constant 0 : index
    %72 = tpu.strided_load %arg12[%c3, %c0_46] {strides = array<i32: 8, 1>} : memref<128x128xf32, #tpu.memory_space<vmem>>, vector<16x128xf32>
    %73 = arith.truncf %72 : vector<16x128xf32> to vector<16x128xbf16>
    %c3_47 = arith.constant 3 : index
    %c0_48 = arith.constant 0 : index
    %c0_49 = arith.constant 0 : index
    %74 = vector.load %arg7[%c3_47, %c0_48, %c0_49] : memref<8x128x128xbf16, #tpu.memory_space<vmem>>, vector<1x128x128xbf16>
    %75 = vector.shape_cast %74 : vector<1x128x128xbf16> to vector<128x128xbf16>
    %cst_50 = arith.constant dense<0.000000e+00> : vector<16x128xf32>
    %76 = tpu.matmul %73, %75, %cst_50 {dimension_numbers = #tpu.dot_dimension_numbers<[1], [0], [0], [1], [0, 0, 1, 1], [], []>} : vector<16x128xbf16>, vector<128x128xbf16>, vector<16x128xf32> -> vector<16x128xf32>
    %77 = arith.addf %71, %76 : vector<16x128xf32>
    %c4 = arith.constant 4 : index
    %c0_51 = arith.constant 0 : index
    %78 = tpu.strided_load %arg12[%c4, %c0_51] {strides = array<i32: 8, 1>} : memref<128x128xf32, #tpu.memory_space<vmem>>, vector<16x128xf32>
    %79 = arith.truncf %78 : vector<16x128xf32> to vector<16x128xbf16>
    %c4_52 = arith.constant 4 : index
    %c0_53 = arith.constant 0 : index
    %c0_54 = arith.constant 0 : index
    %80 = vector.load %arg7[%c4_52, %c0_53, %c0_54] : memref<8x128x128xbf16, #tpu.memory_space<vmem>>, vector<1x128x128xbf16>
    %81 = vector.shape_cast %80 : vector<1x128x128xbf16> to vector<128x128xbf16>
    %cst_55 = arith.constant dense<0.000000e+00> : vector<16x128xf32>
    %82 = tpu.matmul %79, %81, %cst_55 {dimension_numbers = #tpu.dot_dimension_numbers<[1], [0], [0], [1], [0, 0, 1, 1], [], []>} : vector<16x128xbf16>, vector<128x128xbf16>, vector<16x128xf32> -> vector<16x128xf32>
    %83 = arith.addf %77, %82 : vector<16x128xf32>
    %c5 = arith.constant 5 : index
    %c0_56 = arith.constant 0 : index
    %84 = tpu.strided_load %arg12[%c5, %c0_56] {strides = array<i32: 8, 1>} : memref<128x128xf32, #tpu.memory_space<vmem>>, vector<16x128xf32>
    %85 = arith.truncf %84 : vector<16x128xf32> to vector<16x128xbf16>
    %c5_57 = arith.constant 5 : index
    %c0_58 = arith.constant 0 : index
    %c0_59 = arith.constant 0 : index
    %86 = vector.load %arg7[%c5_57, %c0_58, %c0_59] : memref<8x128x128xbf16, #tpu.memory_space<vmem>>, vector<1x128x128xbf16>
    %87 = vector.shape_cast %86 : vector<1x128x128xbf16> to vector<128x128xbf16>
    %cst_60 = arith.constant dense<0.000000e+00> : vector<16x128xf32>
    %88 = tpu.matmul %85, %87, %cst_60 {dimension_numbers = #tpu.dot_dimension_numbers<[1], [0], [0], [1], [0, 0, 1, 1], [], []>} : vector<16x128xbf16>, vector<128x128xbf16>, vector<16x128xf32> -> vector<16x128xf32>
    %89 = arith.addf %83, %88 : vector<16x128xf32>
    %c6 = arith.constant 6 : index
    %c0_61 = arith.constant 0 : index
    %90 = tpu.strided_load %arg12[%c6, %c0_61] {strides = array<i32: 8, 1>} : memref<128x128xf32, #tpu.memory_space<vmem>>, vector<16x128xf32>
    %91 = arith.truncf %90 : vector<16x128xf32> to vector<16x128xbf16>
    %c6_62 = arith.constant 6 : index
    %c0_63 = arith.constant 0 : index
    %c0_64 = arith.constant 0 : index
    %92 = vector.load %arg7[%c6_62, %c0_63, %c0_64] : memref<8x128x128xbf16, #tpu.memory_space<vmem>>, vector<1x128x128xbf16>
    %93 = vector.shape_cast %92 : vector<1x128x128xbf16> to vector<128x128xbf16>
    %cst_65 = arith.constant dense<0.000000e+00> : vector<16x128xf32>
    %94 = tpu.matmul %91, %93, %cst_65 {dimension_numbers = #tpu.dot_dimension_numbers<[1], [0], [0], [1], [0, 0, 1, 1], [], []>} : vector<16x128xbf16>, vector<128x128xbf16>, vector<16x128xf32> -> vector<16x128xf32>
    %95 = arith.addf %89, %94 : vector<16x128xf32>
    %c7 = arith.constant 7 : index
    %c0_66 = arith.constant 0 : index
    %96 = tpu.strided_load %arg12[%c7, %c0_66] {strides = array<i32: 8, 1>} : memref<128x128xf32, #tpu.memory_space<vmem>>, vector<16x128xf32>
    %97 = arith.truncf %96 : vector<16x128xf32> to vector<16x128xbf16>
    %c7_67 = arith.constant 7 : index
    %c0_68 = arith.constant 0 : index
    %c0_69 = arith.constant 0 : index
    %98 = vector.load %arg7[%c7_67, %c0_68, %c0_69] : memref<8x128x128xbf16, #tpu.memory_space<vmem>>, vector<1x128x128xbf16>
    %99 = vector.shape_cast %98 : vector<1x128x128xbf16> to vector<128x128xbf16>
    %cst_70 = arith.constant dense<0.000000e+00> : vector<16x128xf32>
    %100 = tpu.matmul %97, %99, %cst_70 {dimension_numbers = #tpu.dot_dimension_numbers<[1], [0], [0], [1], [0, 0, 1, 1], [], []>} : vector<16x128xbf16>, vector<128x128xbf16>, vector<16x128xf32> -> vector<16x128xf32>
    %101 = arith.addf %95, %100 : vector<16x128xf32>
    %c0_71 = arith.constant 0 : index
    %c0_72 = arith.constant 0 : index
    %102 = vector.load %arg8[%c0_71, %c0_72] : memref<1x128xf32, #tpu.memory_space<vmem>>, vector<1x128xf32>
    %103 = vector.broadcast %102 : vector<1x128xf32> to vector<16x128xf32>
    %104 = arith.addf %101, %103 : vector<16x128xf32>
    %cst_73 = arith.constant 0.000000e+00 : f32
    %105 = vector.broadcast %cst_73 : f32 to vector<16x128xf32>
    %106 = arith.maximumf %104, %105 : vector<16x128xf32>
    %cst_74 = arith.constant dense<0.000000e+00> : vector<128xf32>
    %107 = vector.multi_reduction <add>, %106, %cst_74 [0] : vector<16x128xf32> to vector<128xf32>
    %108 = vector.shape_cast %107 : vector<128xf32> to vector<1x128xf32>
    %cst_75 = arith.constant 1.600000e+01 : f32
    %109 = vector.broadcast %cst_75 : f32 to vector<1x128xf32>
    %110 = arith.divf %108, %109 : vector<1x128xf32>
    %111 = arith.truncf %110 : vector<1x128xf32> to vector<1x128xbf16>
    %c0_76 = arith.constant 0 : index
    %c0_77 = arith.constant 0 : index
    %112 = vector.load %arg9[%c0_76, %c0_77] : memref<128x128xbf16, #tpu.memory_space<vmem>>, vector<128x128xbf16>
    %cst_78 = arith.constant dense<0.000000e+00> : vector<1x128xf32>
    %113 = tpu.matmul %111, %112, %cst_78 {dimension_numbers = #tpu.dot_dimension_numbers<[1], [0], [0], [1], [0, 0, 1, 1], [], []>} : vector<1x128xbf16>, vector<128x128xbf16>, vector<1x128xf32> -> vector<1x128xf32>
    %c0_79 = arith.constant 0 : index
    %c0_80 = arith.constant 0 : index
    %114 = vector.load %arg10[%c0_79, %c0_80] : memref<1x128xf32, #tpu.memory_space<vmem>>, vector<1x128xf32>
    %115 = arith.addf %113, %114 : vector<1x128xf32>
    %116 = tpu.concatenate %50, %52, %115 in 1 : vector<1x128xf32>, vector<1x128xf32>, vector<1x128xf32> -> vector<1x384xf32>
    %c0_81 = arith.constant 0 : index
    %c0_82 = arith.constant 0 : index
    %117 = vector.load %arg11[%c0_81, %c0_82] : memref<1x384xf32, #tpu.memory_space<vmem>>, vector<1x384xf32>
    tpu.vector_store %arg11[%c0_81, %c0_82], %116 {strides = array<i32>} : memref<1x384xf32, #tpu.memory_space<vmem>>, vector<1x384xf32>,
    return
  }
  func.func @transform_0(%arg0: i32) -> (i32, i32) {
    %c0_i32 = arith.constant 0 : i32
    %c0_i32_0 = arith.constant 0 : i32
    %c0_i32_1 = arith.constant 0 : i32
    return %c0_i32, %c0_i32_0 : i32, i32
  }
  func.func @transform_1(%arg0: i32) -> (i32, i32) {
    %c0_i32 = arith.constant 0 : i32
    %c0_i32_0 = arith.constant 0 : i32
    %c0_i32_1 = arith.constant 0 : i32
    return %c0_i32, %c0_i32_0 : i32, i32
  }
  func.func @transform_2(%arg0: i32) -> (i32, i32) {
    %c0_i32 = arith.constant 0 : i32
    %c0_i32_0 = arith.constant 0 : i32
    %c0_i32_1 = arith.constant 0 : i32
    return %c0_i32, %c0_i32_0 : i32, i32
  }
  func.func @transform_3(%arg0: i32) -> (i32, i32) {
    %c0_i32 = arith.constant 0 : i32
    %c0_i32_0 = arith.constant 0 : i32
    %c0_i32_1 = arith.constant 0 : i32
    return %c0_i32, %c0_i32_0 : i32, i32
  }
  func.func @transform_4(%arg0: i32) -> (i32, i32) {
    %c0_i32 = arith.constant 0 : i32
    %c0_i32_0 = arith.constant 0 : i32
    %c0_i32_1 = arith.constant 0 : i32
    return %c0_i32, %c0_i32_0 : i32, i32
  }
  func.func @transform_5(%arg0: i32) -> (i32, i32) {
    %c0_i32 = arith.constant 0 : i32
    %c0_i32_0 = arith.constant 0 : i32
    %c0_i32_1 = arith.constant 0 : i32
    return %c0_i32, %c0_i32_0 : i32, i32
  }
  func.func @transform_6(%arg0: i32) -> (i32, i32, i32) {
    %c0_i32 = arith.constant 0 : i32
    %c0_i32_0 = arith.constant 0 : i32
    %c0_i32_1 = arith.constant 0 : i32
    %c0_i32_2 = arith.constant 0 : i32
    return %c0_i32, %c0_i32_0, %c0_i32_1 : i32, i32, i32
  }
  func.func @transform_7(%arg0: i32) -> (i32, i32) {
    %c0_i32 = arith.constant 0 : i32
    %c0_i32_0 = arith.constant 0 : i32
    %c0_i32_1 = arith.constant 0 : i32
    return %c0_i32, %c0_i32_0 : i32, i32
  }
  func.func @transform_8(%arg0: i32) -> (i32, i32) {
    %c0_i32 = arith.constant 0 : i32
    %c0_i32_0 = arith.constant 0 : i32
    %c0_i32_1 = arith.constant 0 : i32
    return %c0_i32, %c0_i32_0 : i32, i32
  }
  func.func @transform_9(%arg0: i32) -> (i32, i32) {
    %c0_i32 = arith.constant 0 : i32
    %c0_i32_0 = arith.constant 0 : i32
    %c0_i32_1 = arith.constant 0 : i32
    return %c0_i32, %c0_i32_0 : i32, i32
  }
  func.func @transform_10(%arg0: i32) -> (i32, i32) {
    %c0_i32 = arith.constant 0 : i32
    %c0_i32_0 = arith.constant 0 : i32
    %c0_i32_1 = arith.constant 0 : i32
    return %c0_i32, %c0_i32_0 : i32, i32
  }
}

</mosaic_0001>

<llo_original>
// kernel: tpu_custom_call.1
$region0: #{tpu_custom_call.1}
  #allocation0 [shape = 'u32[]', space=smem, size = 0x4, offset = 0x4, fixed_abs, tag = 'smem constant byte address 0x4 - core index']
  #allocation1 [shape = 'u32[72,128]{1,0:T(1,128)}', space=vmem, size = 0x9000, scoped, tag = 'internal scratch']
  #allocation2 [shape = 'f32[128,128]{1,0:T(8,128)}', space=vmem, size = 0x10000, scoped, tag = 'scratch operand']
  %s0 = inlined_call_operand.hbm [shape: bf16[136,256], index: 0, kind: input, shape index: {}]
  %s1 = inlined_call_operand.hbm [shape: bf16[256,512], index: 1, kind: input, shape index: {}]
  %s2 = inlined_call_operand.hbm [shape: bf16[256,512], index: 2, kind: input, shape index: {}]
  %s3 = inlined_call_operand.hbm [shape: bf16[256,128], index: 3, kind: input, shape index: {}]
  %s4 = inlined_call_operand.hbm [shape: bf16[128,128], index: 4, kind: input, shape index: {}]
  %s5 = inlined_call_operand.vmem [shape: f32[1,128], index: 5, kind: input, shape index: {}]
  %s6 = inlined_call_operand.hbm [shape: bf16[8,128,128], index: 6, kind: input, shape index: {}]
  %s7 = inlined_call_operand.vmem [shape: f32[1,128], index: 7, kind: input, shape index: {}]
  %s8 = inlined_call_operand.hbm [shape: bf16[128,128], index: 8, kind: input, shape index: {}]
  %s9 = inlined_call_operand.vmem [shape: f32[1,128], index: 9, kind: input, shape index: {}]
  %s10 = inlined_call_operand.hbm [shape: f32[1,384], index: 10, kind: output, shape index: {}]
  %s11 = sld [smem:[#allocation0]]
  $region78: #{tpu_custom_call.1} parent=0
    _
  %s13 = ssub.s32 1, %s11
  %s14 = scalar_select 0, %s13, %s11
  $region1: #{tpu_custom_call.1} parent=0
    #allocation3 [shape = 'u8[69632]{0}', space=vmem, size = 0x11000, scoped, tag = 'input window, operand 0, single buffered']
    #allocation4 [shape = 's32[1]{0}', space=sflag, size = 0x4, scoped, tag = 'scoped memory for tpu_custom_call.1']
    #allocation5 [shape = 's32[1]{0}', space=sflag, size = 0x4, scoped, tag = 'scoped memory for tpu_custom_call.1']
    #allocation6 [shape = 'u8[262144]{0}', space=vmem, size = 0x40000, scoped, tag = 'input window, operand 1, single buffered']
    #allocation7 [shape = 's32[1]{0}', space=sflag, size = 0x4, scoped, tag = 'scoped memory for tpu_custom_call.1']
    #allocation8 [shape = 'u8[262144]{0}', space=vmem, size = 0x40000, scoped, tag = 'input window, operand 2, single buffered']
    #allocation9 [shape = 'u8[65536]{0}', space=vmem, size = 0x10000, scoped, tag = 'input window, operand 3, single buffered']
    #allocation10 [shape = 's32[1]{0}', space=sflag, size = 0x4, scoped, tag = 'scoped memory for tpu_custom_call.1']
    #allocation11 [shape = 'u8[32768]{0}', space=vmem, size = 0x8000, scoped, tag = 'input window, operand 4, single buffered']
    #allocation12 [shape = 'u8[262144]{0}', space=vmem, size = 0x40000, scoped, tag = 'input window, operand 6, single buffered']
    #allocation13 [shape = 's32[1]{0}', space=sflag, size = 0x4, scoped, tag = 'scoped memory for tpu_custom_call.1']
    #allocation14 [shape = 'u8[32768]{0}', space=vmem, size = 0x8000, scoped, tag = 'input window, operand 8, single buffered']
    #allocation15 [shape = 'u8[1536]{0}', space=vmem, size = 0x800, scoped, tag = 'output window, operand 0, single buffered']
    %15 = vsyncpa [#allocation4], 0
    %16 = vsyncpa [#allocation7], 0
    %17 = vsyncpa [#allocation10], 0
    %18 = vsyncpa [#allocation13], 0
    %19 = vsyncpa [#allocation5], 0
    // Predicated region
    $region2: #{tpu_custom_call.1} parent=1 // pred_check
      _
    $region3: #{tpu_custom_call.1} parent=1 // pred_check_branch
      %21 = sbr.rel (0) target = $region5
    $region4: #{tpu_custom_call.1} parent=1 // pred_region
      %23 = vsyncadd [#allocation4], 0
      %s24 = sshll.u32 %s0, 4
      %s25 = int_to_ptr.hbm [resolvable:$true] %s24
      %s26 = sshll.u32 [#allocation3], 4
      %s27 = int_to_ptr.vmem [resolvable:$true] %s26
      %32 = dma.hbm_to_vmem [thread:$0]  %s25, 2176, %s27, [#allocation4], 128, 128, 8
    $region5: #{tpu_custom_call.1} parent=1 // pred_fallthru
      _
    // Predicated region
    $region6: #{tpu_custom_call.1} parent=1 // pred_check
      _
    $region7: #{tpu_custom_call.1} parent=1 // pred_check_branch
      %34 = sbr.rel (0) target = $region9
    $region8: #{tpu_custom_call.1} parent=1 // pred_region
      %36 = vsyncadd [#allocation7], 0
      %s37 = sshll.u32 %s1, 4
      %s38 = int_to_ptr.hbm [resolvable:$true] %s37
      %s39 = sshll.u32 [#allocation6], 4
      %s40 = int_to_ptr.vmem [resolvable:$true] %s39
      %45 = dma.hbm_to_vmem [thread:$0]  %s38, 8192, %s40, [#allocation7], 256, 256, 16
    $region9: #{tpu_custom_call.1} parent=1 // pred_fallthru
      _
    // Predicated region
    $region10: #{tpu_custom_call.1} parent=1 // pred_check
      _
    $region11: #{tpu_custom_call.1} parent=1 // pred_check_branch
      %47 = sbr.rel (0) target = $region13
    $region12: #{tpu_custom_call.1} parent=1 // pred_region
      %49 = vsyncadd [#allocation7], 0
      %s50 = sshll.u32 %s2, 4
      %s51 = int_to_ptr.hbm [resolvable:$true] %s50
      %s52 = sshll.u32 [#allocation8], 4
      %s53 = int_to_ptr.vmem [resolvable:$true] %s52
      %58 = dma.hbm_to_vmem [thread:$0]  %s51, 8192, %s53, [#allocation7], 256, 256, 16
    $region13: #{tpu_custom_call.1} parent=1 // pred_fallthru
      _
    // Predicated region
    $region14: #{tpu_custom_call.1} parent=1 // pred_check
      _
    $region15: #{tpu_custom_call.1} parent=1 // pred_check_branch
      %60 = sbr.rel (0) target = $region17
    $region16: #{tpu_custom_call.1} parent=1 // pred_region
      %62 = vsyncadd [#allocation10], 0
      %s63 = sshll.u32 %s3, 4
      %s64 = int_to_ptr.hbm [resolvable:$true] %s63
      %s65 = sshll.u32 [#allocation9], 4
      %s66 = int_to_ptr.vmem [resolvable:$true] %s65
      %71 = dma.hbm_to_vmem [thread:$0]  %s64, 2048, %s66, [#allocation10], 64, 64, 4
    $region17: #{tpu_custom_call.1} parent=1 // pred_fallthru
      _
    // Predicated region
    $region18: #{tpu_custom_call.1} parent=1 // pred_check
      _
    $region19: #{tpu_custom_call.1} parent=1 // pred_check_branch
      %73 = sbr.rel (0) target = $region21
    $region20: #{tpu_custom_call.1} parent=1 // pred_region
      %75 = vsyncadd [#allocation10], 0
      %s76 = sshll.u32 %s4, 4
      %s77 = int_to_ptr.hbm [resolvable:$true] %s76
      %s78 = sshll.u32 [#allocation11], 4
      %s79 = int_to_ptr.vmem [resolvable:$true] %s78
      %84 = dma.hbm_to_vmem [thread:$0]  %s77, 1024, %s79, [#allocation10], 64, 64, 4
    $region21: #{tpu_custom_call.1} parent=1 // pred_fallthru
      _
    // Predicated region
    $region22: #{tpu_custom_call.1} parent=1 // pred_check
      _
    $region23: #{tpu_custom_call.1} parent=1 // pred_check_branch
      %86 = sbr.rel (0) target = $region25
    $region24: #{tpu_custom_call.1} parent=1 // pred_region
      _
    $region25: #{tpu_custom_call.1} parent=1 // pred_fallthru
      _
    // Predicated region
    $region26: #{tpu_custom_call.1} parent=1 // pred_check
      _
    $region27: #{tpu_custom_call.1} parent=1 // pred_check_branch
      %88 = sbr.rel (0) target = $region29
    $region28: #{tpu_custom_call.1} parent=1 // pred_region
      %90 = vsyncadd [#allocation13], 0
      %s91 = sshll.u32 %s6, 4
      %s92 = int_to_ptr.hbm [resolvable:$true] %s91
      %s93 = sshll.u32 [#allocation12], 4
      %s94 = int_to_ptr.vmem [resolvable:$true] %s93
      %99 = dma.hbm_to_vmem [thread:$0]  %s92, 8192, %s94, [#allocation13], 64, 64, 4
    $region29: #{tpu_custom_call.1} parent=1 // pred_fallthru
      _
    // Predicated region
    $region30: #{tpu_custom_call.1} parent=1 // pred_check
      _
    $region31: #{tpu_custom_call.1} parent=1 // pred_check_branch
      %101 = sbr.rel (0) target = $region33
    $region32: #{tpu_custom_call.1} parent=1 // pred_region
      _
    $region33: #{tpu_custom_call.1} parent=1 // pred_fallthru
      _
    // Predicated region
    $region34: #{tpu_custom_call.1} parent=1 // pred_check
      _
    $region35: #{tpu_custom_call.1} parent=1 // pred_check_branch
      %103 = sbr.rel (0) target = $region37
    $region36: #{tpu_custom_call.1} parent=1 // pred_region
      %105 = vsyncadd [#allocation13], 0
      %s106 = sshll.u32 %s8, 4
      %s107 = int_to_ptr.hbm [resolvable:$true] %s106
      %s108 = sshll.u32 [#allocation14], 4
      %s109 = int_to_ptr.vmem [resolvable:$true] %s108
      %114 = dma.hbm_to_vmem [thread:$0]  %s107, 1024, %s109, [#allocation13], 64, 64, 4
    $region37: #{tpu_custom_call.1} parent=1 // pred_fallthru
      _
    // Predicated region
    $region38: #{tpu_custom_call.1} parent=1 // pred_check
      _
    $region39: #{tpu_custom_call.1} parent=1 // pred_check_branch
      %116 = sbr.rel (0) target = $region41
    $region40: #{tpu_custom_call.1} parent=1 // pred_region
      _
    $region41: #{tpu_custom_call.1} parent=1 // pred_fallthru
      _
    // Predicated region
    $region42: #{tpu_custom_call.1} parent=1 // pred_check
      _
    $region43: #{tpu_custom_call.1} parent=1 // pred_check_branch
      %118 = sbr.rel (0) target = $region45
    $region44: #{tpu_custom_call.1} parent=1 // pred_region
      %120 = dma.done [#allocation4], 2176
    $region45: #{tpu_custom_call.1} parent=1 // pred_fallthru
      _
    // Predicated region
    $region46: #{tpu_custom_call.1} parent=1 // pred_check
      _
    $region47: #{tpu_custom_call.1} parent=1 // pred_check_branch
      %122 = sbr.rel (0) target = $region49
    $region48: #{tpu_custom_call.1} parent=1 // pred_region
      %124 = dma.done [#allocation7], 8192
    $region49: #{tpu_custom_call.1} parent=1 // pred_fallthru
      _
    // Predicated region
    $region50: #{tpu_custom_call.1} parent=1 // pred_check
      _
    $region51: #{tpu_custom_call.1} parent=1 // pred_check_branch
      %126 = sbr.rel (0) target = $region53
    $region52: #{tpu_custom_call.1} parent=1 // pred_region
      %128 = dma.done [#allocation7], 8192
    $region53: #{tpu_custom_call.1} parent=1 // pred_fallthru
      _
    // Predicated region
    $region54: #{tpu_custom_call.1} parent=1 // pred_check
      _
    $region55: #{tpu_custom_call.1} parent=1 // pred_check_branch
      %130 = sbr.rel (0) target = $region57
    $region56: #{tpu_custom_call.1} parent=1 // pred_region
      %132 = dma.done [#allocation10], 2048
    $region57: #{tpu_custom_call.1} parent=1 // pred_fallthru
      _
    // Predicated region
    $region58: #{tpu_custom_call.1} parent=1 // pred_check
      _
    $region59: #{tpu_custom_call.1} parent=1 // pred_check_branch
      %134 = sbr.rel (0) target = $region61
    $region60: #{tpu_custom_call.1} parent=1 // pred_region
      %136 = dma.done [#allocation10], 1024
    $region61: #{tpu_custom_call.1} parent=1 // pred_fallthru
      _
    // Predicated region
    $region62: #{tpu_custom_call.1} parent=1 // pred_check
      _
    $region63: #{tpu_custom_call.1} parent=1 // pred_check_branch
      %138 = sbr.rel (0) target = $region65
    $region64: #{tpu_custom_call.1} parent=1 // pred_region
      %140 = dma.done [#allocation13], 8192
    $region65: #{tpu_custom_call.1} parent=1 // pred_fallthru
      _
    // Predicated region
    $region66: #{tpu_custom_call.1} parent=1 // pred_check
      _
    $region67: #{tpu_custom_call.1} parent=1 // pred_check_branch
      %142 = sbr.rel (0) target = $region69
    $region68: #{tpu_custom_call.1} parent=1 // pred_region
      %144 = dma.done [#allocation13], 1024
    $region69: #{tpu_custom_call.1} parent=1 // pred_fallthru
      _
    %v145 = vld [vmem:[#allocation3] sm:$0xff]
    %v146 = vld [vmem:[#allocation3 + $0x8] sm:$0xff]
    %v147 = vld [vmem:[#allocation3 + $0x10] sm:$0xff]
    %v148 = vld [vmem:[#allocation3 + $0x18] sm:$0xff]
    %v149 = vld [vmem:[#allocation3 + $0x20] sm:$0xff]
    %v150 = vld [vmem:[#allocation3 + $0x28] sm:$0xff]
    %v151 = vld [vmem:[#allocation3 + $0x30] sm:$0xff]
    %v152 = vld [vmem:[#allocation3 + $0x38] sm:$0xff]
    %v153 = vld [vmem:[#allocation3 + $0x40] sm:$0xff]
    %v154 = vld [vmem:[#allocation3 + $0x48] sm:$0xff]
    %v155 = vld [vmem:[#allocation3 + $0x50] sm:$0xff]
    %v156 = vld [vmem:[#allocation3 + $0x58] sm:$0xff]
    %v157 = vld [vmem:[#allocation3 + $0x60] sm:$0xff]
    %v158 = vld [vmem:[#allocation3 + $0x68] sm:$0xff]
    %v159 = vld [vmem:[#allocation3 + $0x70] sm:$0xff]
    %v160 = vld [vmem:[#allocation3 + $0x78] sm:$0xff]
    %v161 = vld [vmem:[#allocation3 + $0x80] sm:$0x11]
    %v162 = vld [vmem:[#allocation6] sm:$0xff]
    %v163 = vld [vmem:[#allocation6 + $0x8] sm:$0xff]
    %v164 = vld [vmem:[#allocation6 + $0x10] sm:$0xff]
    %v165 = vld [vmem:[#allocation6 + $0x18] sm:$0xff]
    %v166 = vld [vmem:[#allocation6 + $0x20] sm:$0xff]
    %v167 = vld [vmem:[#allocation6 + $0x28] sm:$0xff]
    %v168 = vld [vmem:[#allocation6 + $0x30] sm:$0xff]
    %v169 = vld [vmem:[#allocation6 + $0x38] sm:$0xff]
    %v170 = vld [vmem:[#allocation6 + $0x40] sm:$0xff]
    %v171 = vld [vmem:[#allocation6 + $0x48] sm:$0xff]
    %v172 = vld [vmem:[#allocation6 + $0x50] sm:$0xff]
    %v173 = vld [vmem:[#allocation6 + $0x58] sm:$0xff]
    %v174 = vld [vmem:[#allocation6 + $0x60] sm:$0xff]
    %v175 = vld [vmem:[#allocation6 + $0x68] sm:$0xff]
    %v176 = vld [vmem:[#allocation6 + $0x70] sm:$0xff]
    %v177 = vld [vmem:[#allocation6 + $0x78] sm:$0xff]
    %v178 = vld [vmem:[#allocation6 + $0x80] sm:$0xff]
    %v179 = vld [vmem:[#allocation6 + $0x88] sm:$0xff]
    %v180 = vld [vmem:[#allocation6 + $0x90] sm:$0xff]
    %v181 = vld [vmem:[#allocation6 + $0x98] sm:$0xff]
    %v182 = vld [vmem:[#allocation6 + $0xa0] sm:$0xff]
    %v183 = vld [vmem:[#allocation6 + $0xa8] sm:$0xff]
    %v184 = vld [vmem:[#allocation6 + $0xb0] sm:$0xff]
    %v185 = vld [vmem:[#allocation6 + $0xb8] sm:$0xff]
    %v186 = vld [vmem:[#allocation6 + $0xc0] sm:$0xff]
    %v187 = vld [vmem:[#allocation6 + $0xc8] sm:$0xff]
    %v188 = vld [vmem:[#allocation6 + $0xd0] sm:$0xff]
    %v189 = vld [vmem:[#allocation6 + $0xd8] sm:$0xff]
    %v190 = vld [vmem:[#allocation6 + $0xe0] sm:$0xff]
    %v191 = vld [vmem:[#allocation6 + $0xe8] sm:$0xff]
    %v192 = vld [vmem:[#allocation6 + $0xf0] sm:$0xff]
    %v193 = vld [vmem:[#allocation6 + $0xf8] sm:$0xff]
    %v194 = vld [vmem:[#allocation6 + $0x100] sm:$0xff]
    %v195 = vld [vmem:[#allocation6 + $0x108] sm:$0xff]
    %v196 = vld [vmem:[#allocation6 + $0x110] sm:$0xff]
    %v197 = vld [vmem:[#allocation6 + $0x118] sm:$0xff]
    %v198 = vld [vmem:[#allocation6 + $0x120] sm:$0xff]
    %v199 = vld [vmem:[#allocation6 + $0x128] sm:$0xff]
    %v200 = vld [vmem:[#allocation6 + $0x130] sm:$0xff]
    %v201 = vld [vmem:[#allocation6 + $0x138] sm:$0xff]
    %v202 = vld [vmem:[#allocation6 + $0x140] sm:$0xff]
    %v203 = vld [vmem:[#allocation6 + $0x148] sm:$0xff]
    %v204 = vld [vmem:[#allocation6 + $0x150] sm:$0xff]
    %v205 = vld [vmem:[#allocation6 + $0x158] sm:$0xff]
    %v206 = vld [vmem:[#allocation6 + $0x160] sm:$0xff]
    %v207 = vld [vmem:[#allocation6 + $0x168] sm:$0xff]
    %v208 = vld [vmem:[#allocation6 + $0x170] sm:$0xff]
    %v209 = vld [vmem:[#allocation6 + $0x178] sm:$0xff]
    %v210 = vld [vmem:[#allocation6 + $0x180] sm:$0xff]
    %v211 = vld [vmem:[#allocation6 + $0x188] sm:$0xff]
    %v212 = vld [vmem:[#allocation6 + $0x190] sm:$0xff]
    %v213 = vld [vmem:[#allocation6 + $0x198] sm:$0xff]
    %v214 = vld [vmem:[#allocation6 + $0x1a0] sm:$0xff]
    %v215 = vld [vmem:[#allocation6 + $0x1a8] sm:$0xff]
    %v216 = vld [vmem:[#allocation6 + $0x1b0] sm:$0xff]
    %v217 = vld [vmem:[#allocation6 + $0x1b8] sm:$0xff]
    %v218 = vld [vmem:[#allocation6 + $0x1c0] sm:$0xff]
    %v219 = vld [vmem:[#allocation6 + $0x1c8] sm:$0xff]
    %v220 = vld [vmem:[#allocation6 + $0x1d0] sm:$0xff]
    %v221 = vld [vmem:[#allocation6 + $0x1d8] sm:$0xff]
    %v222 = vld [vmem:[#allocation6 + $0x1e0] sm:$0xff]
    %v223 = vld [vmem:[#allocation6 + $0x1e8] sm:$0xff]
    %v224 = vld [vmem:[#allocation6 + $0x1f0] sm:$0xff]
    %v225 = vld [vmem:[#allocation6 + $0x1f8] sm:$0xff]
    %v226 = vld [vmem:[#allocation8] sm:$0xff]
    %v227 = vld [vmem:[#allocation8 + $0x8] sm:$0xff]
    %v228 = vld [vmem:[#allocation8 + $0x10] sm:$0xff]
    %v229 = vld [vmem:[#allocation8 + $0x18] sm:$0xff]
    %v230 = vld [vmem:[#allocation8 + $0x20] sm:$0xff]
    %v231 = vld [vmem:[#allocation8 + $0x28] sm:$0xff]
    %v232 = vld [vmem:[#allocation8 + $0x30] sm:$0xff]
    %v233 = vld [vmem:[#allocation8 + $0x38] sm:$0xff]
    %v234 = vld [vmem:[#allocation8 + $0x40] sm:$0xff]
    %v235 = vld [vmem:[#allocation8 + $0x48] sm:$0xff]
    %v236 = vld [vmem:[#allocation8 + $0x50] sm:$0xff]
    %v237 = vld [vmem:[#allocation8 + $0x58] sm:$0xff]
    %v238 = vld [vmem:[#allocation8 + $0x60] sm:$0xff]
    %v239 = vld [vmem:[#allocation8 + $0x68] sm:$0xff]
    %v240 = vld [vmem:[#allocation8 + $0x70] sm:$0xff]
    %v241 = vld [vmem:[#allocation8 + $0x78] sm:$0xff]
    %v242 = vld [vmem:[#allocation8 + $0x80] sm:$0xff]
    %v243 = vld [vmem:[#allocation8 + $0x88] sm:$0xff]
    %v244 = vld [vmem:[#allocation8 + $0x90] sm:$0xff]
    %v245 = vld [vmem:[#allocation8 + $0x98] sm:$0xff]
    %v246 = vld [vmem:[#allocation8 + $0xa0] sm:$0xff]
    %v247 = vld [vmem:[#allocation8 + $0xa8] sm:$0xff]
    %v248 = vld [vmem:[#allocation8 + $0xb0] sm:$0xff]
    %v249 = vld [vmem:[#allocation8 + $0xb8] sm:$0xff]
    %v250 = vld [vmem:[#allocation8 + $0xc0] sm:$0xff]
    %v251 = vld [vmem:[#allocation8 + $0xc8] sm:$0xff]
    %v252 = vld [vmem:[#allocation8 + $0xd0] sm:$0xff]
    %v253 = vld [vmem:[#allocation8 + $0xd8] sm:$0xff]
    %v254 = vld [vmem:[#allocation8 + $0xe0] sm:$0xff]
    %v255 = vld [vmem:[#allocation8 + $0xe8] sm:$0xff]
    %v256 = vld [vmem:[#allocation8 + $0xf0] sm:$0xff]
    %v257 = vld [vmem:[#allocation8 + $0xf8] sm:$0xff]
    %v258 = vld [vmem:[#allocation8 + $0x100] sm:$0xff]
    %v259 = vld [vmem:[#allocation8 + $0x108] sm:$0xff]
    %v260 = vld [vmem:[#allocation8 + $0x110] sm:$0xff]
    %v261 = vld [vmem:[#allocation8 + $0x118] sm:$0xff]
    %v262 = vld [vmem:[#allocation8 + $0x120] sm:$0xff]
    %v263 = vld [vmem:[#allocation8 + $0x128] sm:$0xff]
    %v264 = vld [vmem:[#allocation8 + $0x130] sm:$0xff]
    %v265 = vld [vmem:[#allocation8 + $0x138] sm:$0xff]
    %v266 = vld [vmem:[#allocation8 + $0x140] sm:$0xff]
    %v267 = vld [vmem:[#allocation8 + $0x148] sm:$0xff]
    %v268 = vld [vmem:[#allocation8 + $0x150] sm:$0xff]
    %v269 = vld [vmem:[#allocation8 + $0x158] sm:$0xff]
    %v270 = vld [vmem:[#allocation8 + $0x160] sm:$0xff]
    %v271 = vld [vmem:[#allocation8 + $0x168] sm:$0xff]
    %v272 = vld [vmem:[#allocation8 + $0x170] sm:$0xff]
    %v273 = vld [vmem:[#allocation8 + $0x178] sm:$0xff]
    %v274 = vld [vmem:[#allocation8 + $0x180] sm:$0xff]
    %v275 = vld [vmem:[#allocation8 + $0x188] sm:$0xff]
    %v276 = vld [vmem:[#allocation8 + $0x190] sm:$0xff]
    %v277 = vld [vmem:[#allocation8 + $0x198] sm:$0xff]
    %v278 = vld [vmem:[#allocation8 + $0x1a0] sm:$0xff]
    %v279 = vld [vmem:[#allocation8 + $0x1a8] sm:$0xff]
    %v280 = vld [vmem:[#allocation8 + $0x1b0] sm:$0xff]
    %v281 = vld [vmem:[#allocation8 + $0x1b8] sm:$0xff]
    %v282 = vld [vmem:[#allocation8 + $0x1c0] sm:$0xff]
    %v283 = vld [vmem:[#allocation8 + $0x1c8] sm:$0xff]
    %v284 = vld [vmem:[#allocation8 + $0x1d0] sm:$0xff]
    %v285 = vld [vmem:[#allocation8 + $0x1d8] sm:$0xff]
    %v286 = vld [vmem:[#allocation8 + $0x1e0] sm:$0xff]
    %v287 = vld [vmem:[#allocation8 + $0x1e8] sm:$0xff]
    %v288 = vld [vmem:[#allocation8 + $0x1f0] sm:$0xff]
    %v289 = vld [vmem:[#allocation8 + $0x1f8] sm:$0xff]
    %v307 = vunpack.c.l.b16 %v145
    %v308 = vunpack.c.h.b16 %v145
    %v309 = vunpack.c.l.b16 %v146
    %v310 = vunpack.c.h.b16 %v146
    %v311 = vunpack.c.l.b16 %v147
    %v312 = vunpack.c.h.b16 %v147
    %v313 = vunpack.c.l.b16 %v148
    %v314 = vunpack.c.h.b16 %v148
    %v315 = vunpack.c.l.b16 %v149
    %v316 = vunpack.c.h.b16 %v149
    %v317 = vunpack.c.l.b16 %v150
    %v318 = vunpack.c.h.b16 %v150
    %v319 = vunpack.c.l.b16 %v151
    %v320 = vunpack.c.h.b16 %v151
    %v321 = vunpack.c.l.b16 %v152
    %v322 = vunpack.c.h.b16 %v152
    %v323 = vunpack.c.l.b16 %v153
    %v324 = vunpack.c.h.b16 %v153
    %v325 = vunpack.c.l.b16 %v154
    %v326 = vunpack.c.h.b16 %v154
    %v327 = vunpack.c.l.b16 %v155
    %v328 = vunpack.c.h.b16 %v155
    %v329 = vunpack.c.l.b16 %v156
    %v330 = vunpack.c.h.b16 %v156
    %v331 = vunpack.c.l.b16 %v157
    %v332 = vunpack.c.h.b16 %v157
    %v333 = vunpack.c.l.b16 %v158
    %v334 = vunpack.c.h.b16 %v158
    %v335 = vunpack.c.l.b16 %v159
    %v336 = vunpack.c.h.b16 %v159
    %v337 = vunpack.c.l.b16 %v160
    %v338 = vunpack.c.h.b16 %v160
    %v339 = vunpack.c.l.b16 %v161
    %v340 = vunpack.c.h.b16 %v161
    %v341 = vpack.c.b16 %v309, %v307
    %v342 = vpack.c.b16 %v310, %v308
    %v343 = vpack.c.b16 %v313, %v311
    %v344 = vpack.c.b16 %v314, %v312
    %v345 = vpack.c.b16 %v317, %v315
    %v346 = vpack.c.b16 %v318, %v316
    %v347 = vpack.c.b16 %v321, %v319
    %v348 = vpack.c.b16 %v322, %v320
    %v349 = vpack.c.b16 %v325, %v323
    %v350 = vpack.c.b16 %v326, %v324
    %v351 = vpack.c.b16 %v329, %v327
    %v352 = vpack.c.b16 %v330, %v328
    %v353 = vpack.c.b16 %v333, %v331
    %v354 = vpack.c.b16 %v334, %v332
    %v355 = vpack.c.b16 %v337, %v335
    %v356 = vpack.c.b16 %v338, %v336
    %v357 = vpack.c.b16 %v339, %v339
    %v358 = vpack.c.b16 %v340, %v340
    %vm359 = vsmask.f32 7424
    %v361 = vshrl.u32 %v341, 16
    %v363 = vshll.u32 %v341, 16
    %v365 = vrot.slane %v363, 1
    %v366 = vor.u32 %v361, %v365
    %v368 = vshll.u32 %v343, 16
    %v370 = vrot.slane %v368, 1
    %v371 = vsel %vm359, %v366, %v370
    %v373 = vshrl.u32 %v342, 16
    %v375 = vshll.u32 %v342, 16
    %v377 = vrot.slane %v375, 1
    %v378 = vor.u32 %v373, %v377
    %v380 = vshll.u32 %v344, 16
    %v382 = vrot.slane %v380, 1
    %v383 = vsel %vm359, %v378, %v382
    %v384 = vshrl.u32 %v343, 16
    %v386 = vor.u32 %v384, %v370
    %v388 = vshll.u32 %v345, 16
    %v390 = vrot.slane %v388, 1
    %v391 = vsel %vm359, %v386, %v390
    %v392 = vshrl.u32 %v344, 16
    %v394 = vor.u32 %v392, %v382
    %v396 = vshll.u32 %v346, 16
    %v398 = vrot.slane %v396, 1
    %v399 = vsel %vm359, %v394, %v398
    %v400 = vshrl.u32 %v345, 16
    %v402 = vor.u32 %v400, %v390
    %v404 = vshll.u32 %v347, 16
    %v406 = vrot.slane %v404, 1
    %v407 = vsel %vm359, %v402, %v406
    %v408 = vshrl.u32 %v346, 16
    %v410 = vor.u32 %v408, %v398
    %v412 = vshll.u32 %v348, 16
    %v414 = vrot.slane %v412, 1
    %v415 = vsel %vm359, %v410, %v414
    %v416 = vshrl.u32 %v347, 16
    %v418 = vor.u32 %v416, %v406
    %v420 = vshll.u32 %v349, 16
    %v422 = vrot.slane %v420, 1
    %v423 = vsel %vm359, %v418, %v422
    %v424 = vshrl.u32 %v348, 16
    %v426 = vor.u32 %v424, %v414
    %v428 = vshll.u32 %v350, 16
    %v430 = vrot.slane %v428, 1
    %v431 = vsel %vm359, %v426, %v430
    %v432 = vshrl.u32 %v349, 16
    %v434 = vor.u32 %v432, %v422
    %v436 = vshll.u32 %v351, 16
    %v438 = vrot.slane %v436, 1
    %v439 = vsel %vm359, %v434, %v438
    %v440 = vshrl.u32 %v350, 16
    %v442 = vor.u32 %v440, %v430
    %v444 = vshll.u32 %v352, 16
    %v446 = vrot.slane %v444, 1
    %v447 = vsel %vm359, %v442, %v446
    %v448 = vshrl.u32 %v351, 16
    %v450 = vor.u32 %v448, %v438
    %v452 = vshll.u32 %v353, 16
    %v454 = vrot.slane %v452, 1
    %v455 = vsel %vm359, %v450, %v454
    %v456 = vshrl.u32 %v352, 16
    %v458 = vor.u32 %v456, %v446
    %v460 = vshll.u32 %v354, 16
    %v462 = vrot.slane %v460, 1
    %v463 = vsel %vm359, %v458, %v462
    %v464 = vshrl.u32 %v353, 16
    %v466 = vor.u32 %v464, %v454
    %v468 = vshll.u32 %v355, 16
    %v470 = vrot.slane %v468, 1
    %v471 = vsel %vm359, %v466, %v470
    %v472 = vshrl.u32 %v354, 16
    %v474 = vor.u32 %v472, %v462
    %v476 = vshll.u32 %v356, 16
    %v478 = vrot.slane %v476, 1
    %v479 = vsel %vm359, %v474, %v478
    %v480 = vshrl.u32 %v355, 16
    %v482 = vor.u32 %v480, %v470
    %v484 = vshll.u32 %v357, 16
    %v486 = vrot.slane %v484, 1
    %v487 = vsel %vm359, %v482, %v486
    %v488 = vshrl.u32 %v356, 16
    %v490 = vor.u32 %v488, %v478
    %v492 = vshll.u32 %v358, 16
    %v494 = vrot.slane %v492, 1
    %v495 = vsel %vm359, %v490, %v494
    %v496 = vshrl.u32 %v357, 16
    %v498 = vshrl.u32 %v358, 16
    %v582 = vunpack.c.l.b16 %v226
    %v583 = vunpack.c.h.b16 %v226
    %v584 = vunpack.c.l.b16 %v227
    %v585 = vunpack.c.h.b16 %v227
    %v586 = vunpack.c.l.b16 %v228
    %v587 = vunpack.c.h.b16 %v228
    %v588 = vunpack.c.l.b16 %v229
    %v589 = vunpack.c.h.b16 %v229
    %v590 = vunpack.c.l.b16 %v230
    %v591 = vunpack.c.h.b16 %v230
    %v592 = vunpack.c.l.b16 %v231
    %v593 = vunpack.c.h.b16 %v231
    %v594 = vunpack.c.l.b16 %v232
    %v595 = vunpack.c.h.b16 %v232
    %v596 = vunpack.c.l.b16 %v233
    %v597 = vunpack.c.h.b16 %v233
    %v598 = vunpack.c.l.b16 %v234
    %v599 = vunpack.c.h.b16 %v234
    %v600 = vunpack.c.l.b16 %v235
    %v601 = vunpack.c.h.b16 %v235
    %v602 = vunpack.c.l.b16 %v236
    %v603 = vunpack.c.h.b16 %v236
    %v604 = vunpack.c.l.b16 %v237
    %v605 = vunpack.c.h.b16 %v237
    %v606 = vunpack.c.l.b16 %v238
    %v607 = vunpack.c.h.b16 %v238
    %v608 = vunpack.c.l.b16 %v239
    %v609 = vunpack.c.h.b16 %v239
    %v610 = vunpack.c.l.b16 %v240
    %v611 = vunpack.c.h.b16 %v240
    %v612 = vunpack.c.l.b16 %v241
    %v613 = vunpack.c.h.b16 %v241
    %v614 = vunpack.c.l.b16 %v242
    %v615 = vunpack.c.h.b16 %v242
    %v616 = vunpack.c.l.b16 %v243
    %v617 = vunpack.c.h.b16 %v243
    %v618 = vunpack.c.l.b16 %v244
    %v619 = vunpack.c.h.b16 %v244
    %v620 = vunpack.c.l.b16 %v245
    %v621 = vunpack.c.h.b16 %v245
    %v622 = vunpack.c.l.b16 %v246
    %v623 = vunpack.c.h.b16 %v246
    %v624 = vunpack.c.l.b16 %v247
    %v625 = vunpack.c.h.b16 %v247
    %v626 = vunpack.c.l.b16 %v248
    %v627 = vunpack.c.h.b16 %v248
    %v628 = vunpack.c.l.b16 %v249
    %v629 = vunpack.c.h.b16 %v249
    %v630 = vunpack.c.l.b16 %v250
    %v631 = vunpack.c.h.b16 %v250
    %v632 = vunpack.c.l.b16 %v251
    %v633 = vunpack.c.h.b16 %v251
    %v634 = vunpack.c.l.b16 %v252
    %v635 = vunpack.c.h.b16 %v252
    %v636 = vunpack.c.l.b16 %v253
    %v637 = vunpack.c.h.b16 %v253
    %v638 = vunpack.c.l.b16 %v254
    %v639 = vunpack.c.h.b16 %v254
    %v640 = vunpack.c.l.b16 %v255
    %v641 = vunpack.c.h.b16 %v255
    %v642 = vunpack.c.l.b16 %v256
    %v643 = vunpack.c.h.b16 %v256
    %v644 = vunpack.c.l.b16 %v257
    %v645 = vunpack.c.h.b16 %v257
    %v646 = vunpack.c.l.b16 %v258
    %v647 = vunpack.c.h.b16 %v258
    %v648 = vunpack.c.l.b16 %v259
    %v649 = vunpack.c.h.b16 %v259
    %v650 = vunpack.c.l.b16 %v260
    %v651 = vunpack.c.h.b16 %v260
    %v652 = vunpack.c.l.b16 %v261
    %v653 = vunpack.c.h.b16 %v261
    %v654 = vunpack.c.l.b16 %v262
    %v655 = vunpack.c.h.b16 %v262
    %v656 = vunpack.c.l.b16 %v263
    %v657 = vunpack.c.h.b16 %v263
    %v658 = vunpack.c.l.b16 %v264
    %v659 = vunpack.c.h.b16 %v264
    %v660 = vunpack.c.l.b16 %v265
    %v661 = vunpack.c.h.b16 %v265
    %v662 = vunpack.c.l.b16 %v266
    %v663 = vunpack.c.h.b16 %v266
    %v664 = vunpack.c.l.b16 %v267
    %v665 = vunpack.c.h.b16 %v267
    %v666 = vunpack.c.l.b16 %v268
    %v667 = vunpack.c.h.b16 %v268
    %v668 = vunpack.c.l.b16 %v269
    %v669 = vunpack.c.h.b16 %v269
    %v670 = vunpack.c.l.b16 %v270
    %v671 = vunpack.c.h.b16 %v270
    %v672 = vunpack.c.l.b16 %v271
    %v673 = vunpack.c.h.b16 %v271
    %v674 = vunpack.c.l.b16 %v272
    %v675 = vunpack.c.h.b16 %v272
    %v676 = vunpack.c.l.b16 %v273
    %v677 = vunpack.c.h.b16 %v273
    %v678 = vunpack.c.l.b16 %v274
    %v679 = vunpack.c.h.b16 %v274
    %v680 = vunpack.c.l.b16 %v275
    %v681 = vunpack.c.h.b16 %v275
    %v682 = vunpack.c.l.b16 %v276
    %v683 = vunpack.c.h.b16 %v276
    %v684 = vunpack.c.l.b16 %v277
    %v685 = vunpack.c.h.b16 %v277
    %v686 = vunpack.c.l.b16 %v278
    %v687 = vunpack.c.h.b16 %v278
    %v688 = vunpack.c.l.b16 %v279
    %v689 = vunpack.c.h.b16 %v279
    %v690 = vunpack.c.l.b16 %v280
    %v691 = vunpack.c.h.b16 %v280
    %v692 = vunpack.c.l.b16 %v281
    %v693 = vunpack.c.h.b16 %v281
    %v694 = vunpack.c.l.b16 %v282
    %v695 = vunpack.c.h.b16 %v282
    %v696 = vunpack.c.l.b16 %v283
    %v697 = vunpack.c.h.b16 %v283
    %v698 = vunpack.c.l.b16 %v284
    %v699 = vunpack.c.h.b16 %v284
    %v700 = vunpack.c.l.b16 %v285
    %v701 = vunpack.c.h.b16 %v285
    %v702 = vunpack.c.l.b16 %v286
    %v703 = vunpack.c.h.b16 %v286
    %v704 = vunpack.c.l.b16 %v287
    %v705 = vunpack.c.h.b16 %v287
    %v706 = vunpack.c.l.b16 %v288
    %v707 = vunpack.c.h.b16 %v288
    %v708 = vunpack.c.l.b16 %v289
    %v709 = vunpack.c.h.b16 %v289
    %v710 = vpack.c.b16 %v586, %v582
    %v711 = vpack.c.b16 %v587, %v583
    %v712 = vpack.c.b16 %v588, %v584
    %v713 = vpack.c.b16 %v589, %v585
    %v714 = vpack.c.b16 %v594, %v590
    %v715 = vpack.c.b16 %v595, %v591
    %v716 = vpack.c.b16 %v596, %v592
    %v717 = vpack.c.b16 %v597, %v593
    %v718 = vpack.c.b16 %v602, %v598
    %v719 = vpack.c.b16 %v603, %v599
    %v720 = vpack.c.b16 %v604, %v600
    %v721 = vpack.c.b16 %v605, %v601
    %v722 = vpack.c.b16 %v610, %v606
    %v723 = vpack.c.b16 %v611, %v607
    %v724 = vpack.c.b16 %v612, %v608
    %v725 = vpack.c.b16 %v613, %v609
    %v726 = vpack.c.b16 %v618, %v614
    %v727 = vpack.c.b16 %v619, %v615
    %v728 = vpack.c.b16 %v620, %v616
    %v729 = vpack.c.b16 %v621, %v617
    %v730 = vpack.c.b16 %v626, %v622
    %v731 = vpack.c.b16 %v627, %v623
    %v732 = vpack.c.b16 %v628, %v624
    %v733 = vpack.c.b16 %v629, %v625
    %v734 = vpack.c.b16 %v634, %v630
    %v735 = vpack.c.b16 %v635, %v631
    %v736 = vpack.c.b16 %v636, %v632
    %v737 = vpack.c.b16 %v637, %v633
    %v738 = vpack.c.b16 %v642, %v638
    %v739 = vpack.c.b16 %v643, %v639
    %v740 = vpack.c.b16 %v644, %v640
    %v741 = vpack.c.b16 %v645, %v641
    %v742 = vpack.c.b16 %v650, %v646
    %v743 = vpack.c.b16 %v651, %v647
    %v744 = vpack.c.b16 %v652, %v648
    %v745 = vpack.c.b16 %v653, %v649
    %v746 = vpack.c.b16 %v658, %v654
    %v747 = vpack.c.b16 %v659, %v655
    %v748 = vpack.c.b16 %v660, %v656
    %v749 = vpack.c.b16 %v661, %v657
    %v750 = vpack.c.b16 %v666, %v662
    %v751 = vpack.c.b16 %v667, %v663
    %v752 = vpack.c.b16 %v668, %v664
    %v753 = vpack.c.b16 %v669, %v665
    %v754 = vpack.c.b16 %v674, %v670
    %v755 = vpack.c.b16 %v675, %v671
    %v756 = vpack.c.b16 %v676, %v672
    %v757 = vpack.c.b16 %v677, %v673
    %v758 = vpack.c.b16 %v682, %v678
    %v759 = vpack.c.b16 %v683, %v679
    %v760 = vpack.c.b16 %v684, %v680
    %v761 = vpack.c.b16 %v685, %v681
    %v762 = vpack.c.b16 %v690, %v686
    %v763 = vpack.c.b16 %v691, %v687
    %v764 = vpack.c.b16 %v692, %v688
    %v765 = vpack.c.b16 %v693, %v689
    %v766 = vpack.c.b16 %v698, %v694
    %v767 = vpack.c.b16 %v699, %v695
    %v768 = vpack.c.b16 %v700, %v696
    %v769 = vpack.c.b16 %v701, %v697
    %v770 = vpack.c.b16 %v706, %v702
    %v771 = vpack.c.b16 %v707, %v703
    %v772 = vpack.c.b16 %v708, %v704
    %v773 = vpack.c.b16 %v709, %v705
    %838 = vmatpush.bf16.msra.mxu0 %v738
    %839 = vmatpush.bf16.msra.mxu0 %v734
    %840 = vmatpush.bf16.msra.mxu0 %v730
    %841 = vmatpush.bf16.msra.mxu0 %v726
    %842 = vmatpush.bf16.msra.mxu0 %v722
    %843 = vmatpush.bf16.msra.mxu0 %v718
    %844 = vmatpush.bf16.msra.mxu0 %v714
    %845 = vmatpush.bf16.msra.mxu0 %v710
    %846 = vmatmul.bf16.gmra.mxu0 %v371
    %v847 = vpop.f32.mrf.mxu0
    %v848 = vadd.f32 0.0, %v847
    %v849 = vpop.f32.mrf.mxu0
    %v850 = vadd.f32 0.0, %v849
    %851 = vmatmul.bf16.gmra.mxu0 %v391
    %v852 = vpop.f32.mrf.mxu0
    %v853 = vadd.f32 0.0, %v852
    %v854 = vpop.f32.mrf.mxu0
    %v855 = vadd.f32 0.0, %v854
    %856 = vmatmul.bf16.gmra.mxu0 %v407
    %v857 = vpop.f32.mrf.mxu0
    %v858 = vadd.f32 0.0, %v857
    %v859 = vpop.f32.mrf.mxu0
    %v860 = vadd.f32 0.0, %v859
    %861 = vmatmul.bf16.gmra.mxu0 %v423
    %v862 = vpop.f32.mrf.mxu0
    %v863 = vadd.f32 0.0, %v862
    %v864 = vpop.f32.mrf.mxu0
    %v865 = vadd.f32 0.0, %v864
    %866 = vmatmul.bf16.gmra.mxu0 %v439
    %v867 = vpop.f32.mrf.mxu0
    %v868 = vadd.f32 0.0, %v867
    %v869 = vpop.f32.mrf.mxu0
    %v870 = vadd.f32 0.0, %v869
    %871 = vmatmul.bf16.gmra.mxu0 %v455
    %v872 = vpop.f32.mrf.mxu0
    %v873 = vadd.f32 0.0, %v872
    %v874 = vpop.f32.mrf.mxu0
    %v875 = vadd.f32 0.0, %v874
    %876 = vmatmul.bf16.gmra.mxu0 %v471
    %v877 = vpop.f32.mrf.mxu0
    %v878 = vadd.f32 0.0, %v877
    %v879 = vpop.f32.mrf.mxu0
    %v880 = vadd.f32 0.0, %v879
    %881 = vmatmul.bf16.gmra.mxu0 %v487
    %v882 = vpop.f32.mrf.mxu0
    %v883 = vadd.f32 0.0, %v882
    %v884 = vpop.f32.mrf.mxu0
    %v885 = vadd.f32 0.0, %v884
    %886 = vmatmul.bf16.gmra.mxu0 %v496
    %v887 = vpop.f32.mrf.mxu0
    %v888 = vadd.f32 0.0, %v887
    %v889 = vpop.f32.mrf.mxu0
    %890 = vdwg.mxu0
    %891 = vmatpush.bf16.msra.mxu0 %v770
    %892 = vmatpush.bf16.msra.mxu0 %v766
    %893 = vmatpush.bf16.msra.mxu0 %v762
    %894 = vmatpush.bf16.msra.mxu0 %v758
    %895 = vmatpush.bf16.msra.mxu0 %v754
    %896 = vmatpush.bf16.msra.mxu0 %v750
    %897 = vmatpush.bf16.msra.mxu0 %v746
    %898 = vmatpush.bf16.msra.mxu0 %v742
    %899 = vmatmul.bf16.gmra.mxu0 %v383
    %v900 = vpop.f32.mrf.mxu0
    %v901 = vadd.f32 %v848, %v900
    %v902 = vpop.f32.mrf.mxu0
    %v903 = vadd.f32 %v850, %v902
    %904 = vmatmul.bf16.gmra.mxu0 %v399
    %v905 = vpop.f32.mrf.mxu0
    %v906 = vadd.f32 %v853, %v905
    %v907 = vpop.f32.mrf.mxu0
    %v908 = vadd.f32 %v855, %v907
    %909 = vmatmul.bf16.gmra.mxu0 %v415
    %v910 = vpop.f32.mrf.mxu0
    %v911 = vadd.f32 %v858, %v910
    %v912 = vpop.f32.mrf.mxu0
    %v913 = vadd.f32 %v860, %v912
    %914 = vmatmul.bf16.gmra.mxu0 %v431
    %v915 = vpop.f32.mrf.mxu0
    %v916 = vadd.f32 %v863, %v915
    %v917 = vpop.f32.mrf.mxu0
    %v918 = vadd.f32 %v865, %v917
    %919 = vmatmul.bf16.gmra.mxu0 %v447
    %v920 = vpop.f32.mrf.mxu0
    %v921 = vadd.f32 %v868, %v920
    %v922 = vpop.f32.mrf.mxu0
    %v923 = vadd.f32 %v870, %v922
    %924 = vmatmul.bf16.gmra.mxu0 %v463
    %v925 = vpop.f32.mrf.mxu0
    %v926 = vadd.f32 %v873, %v925
    %v927 = vpop.f32.mrf.mxu0
    %v928 = vadd.f32 %v875, %v927
    %929 = vmatmul.bf16.gmra.mxu0 %v479
    %v930 = vpop.f32.mrf.mxu0
    %v931 = vadd.f32 %v878, %v930
    %v932 = vpop.f32.mrf.mxu0
    %v933 = vadd.f32 %v880, %v932
    %934 = vmatmul.bf16.gmra.mxu0 %v495
    %v935 = vpop.f32.mrf.mxu0
    %v936 = vadd.f32 %v883, %v935
    %v937 = vpop.f32.mrf.mxu0
    %v938 = vadd.f32 %v885, %v937
    %939 = vmatmul.bf16.gmra.mxu0 %v498
    %v940 = vpop.f32.mrf.mxu0
    %v941 = vadd.f32 %v888, %v940
    %v942 = vpop.f32.mrf.mxu0
    %943 = vdwg.mxu0
    %944 = vmatpush.bf16.msra.mxu0 %v739
    %945 = vmatpush.bf16.msra.mxu0 %v735
    %946 = vmatpush.bf16.msra.mxu0 %v731
    %947 = vmatpush.bf16.msra.mxu0 %v727
    %948 = vmatpush.bf16.msra.mxu0 %v723
    %949 = vmatpush.bf16.msra.mxu0 %v719
    %950 = vmatpush.bf16.msra.mxu0 %v715
    %951 = vmatpush.bf16.msra.mxu0 %v711
    %952 = vmatmul.bf16.gmra.mxu0 %v371
    %v953 = vpop.f32.mrf.mxu0
    %v954 = vadd.f32 0.0, %v953
    %v955 = vpop.f32.mrf.mxu0
    %v956 = vadd.f32 0.0, %v955
    %957 = vmatmul.bf16.gmra.mxu0 %v391
    %v958 = vpop.f32.mrf.mxu0
    %v959 = vadd.f32 0.0, %v958
    %v960 = vpop.f32.mrf.mxu0
    %v961 = vadd.f32 0.0, %v960
    %962 = vmatmul.bf16.gmra.mxu0 %v407
    %v963 = vpop.f32.mrf.mxu0
    %v964 = vadd.f32 0.0, %v963
    %v965 = vpop.f32.mrf.mxu0
    %v966 = vadd.f32 0.0, %v965
    %967 = vmatmul.bf16.gmra.mxu0 %v423
    %v968 = vpop.f32.mrf.mxu0
    %v969 = vadd.f32 0.0, %v968
    %v970 = vpop.f32.mrf.mxu0
    %v971 = vadd.f32 0.0, %v970
    %972 = vmatmul.bf16.gmra.mxu0 %v439
    %v973 = vpop.f32.mrf.mxu0
    %v974 = vadd.f32 0.0, %v973
    %v975 = vpop.f32.mrf.mxu0
    %v976 = vadd.f32 0.0, %v975
    %977 = vmatmul.bf16.gmra.mxu0 %v455
    %v978 = vpop.f32.mrf.mxu0
    %v979 = vadd.f32 0.0, %v978
    %v980 = vpop.f32.mrf.mxu0
    %v981 = vadd.f32 0.0, %v980
    %982 = vmatmul.bf16.gmra.mxu0 %v471
    %v983 = vpop.f32.mrf.mxu0
    %v984 = vadd.f32 0.0, %v983
    %v985 = vpop.f32.mrf.mxu0
    %v986 = vadd.f32 0.0, %v985
    %987 = vmatmul.bf16.gmra.mxu0 %v487
    %v988 = vpop.f32.mrf.mxu0
    %v989 = vadd.f32 0.0, %v988
    %v990 = vpop.f32.mrf.mxu0
    %v991 = vadd.f32 0.0, %v990
    %992 = vmatmul.bf16.gmra.mxu0 %v496
    %v993 = vpop.f32.mrf.mxu0
    %v994 = vadd.f32 0.0, %v993
    %v995 = vpop.f32.mrf.mxu0
    %996 = vdwg.mxu0
    %997 = vmatpush.bf16.msra.mxu0 %v771
    %998 = vmatpush.bf16.msra.mxu0 %v767
    %999 = vmatpush.bf16.msra.mxu0 %v763
    %1000 = vmatpush.bf16.msra.mxu0 %v759
    %1001 = vmatpush.bf16.msra.mxu0 %v755
    %1002 = vmatpush.bf16.msra.mxu0 %v751
    %1003 = vmatpush.bf16.msra.mxu0 %v747
    %1004 = vmatpush.bf16.msra.mxu0 %v743
    %1005 = vmatmul.bf16.gmra.mxu0 %v383
    %v1006 = vpop.f32.mrf.mxu0
    %v1007 = vadd.f32 %v954, %v1006
    %v1008 = vpop.f32.mrf.mxu0
    %v1009 = vadd.f32 %v956, %v1008
    %1010 = vmatmul.bf16.gmra.mxu0 %v399
    %v1011 = vpop.f32.mrf.mxu0
    %v1012 = vadd.f32 %v959, %v1011
    %v1013 = vpop.f32.mrf.mxu0
    %v1014 = vadd.f32 %v961, %v1013
    %1015 = vmatmul.bf16.gmra.mxu0 %v415
    %v1016 = vpop.f32.mrf.mxu0
    %v1017 = vadd.f32 %v964, %v1016
    %v1018 = vpop.f32.mrf.mxu0
    %v1019 = vadd.f32 %v966, %v1018
    %1020 = vmatmul.bf16.gmra.mxu0 %v431
    %v1021 = vpop.f32.mrf.mxu0
    %v1022 = vadd.f32 %v969, %v1021
    %v1023 = vpop.f32.mrf.mxu0
    %v1024 = vadd.f32 %v971, %v1023
    %1025 = vmatmul.bf16.gmra.mxu0 %v447
    %v1026 = vpop.f32.mrf.mxu0
    %v1027 = vadd.f32 %v974, %v1026
    %v1028 = vpop.f32.mrf.mxu0
    %v1029 = vadd.f32 %v976, %v1028
    %1030 = vmatmul.bf16.gmra.mxu0 %v463
    %v1031 = vpop.f32.mrf.mxu0
    %v1032 = vadd.f32 %v979, %v1031
    %v1033 = vpop.f32.mrf.mxu0
    %v1034 = vadd.f32 %v981, %v1033
    %1035 = vmatmul.bf16.gmra.mxu0 %v479
    %v1036 = vpop.f32.mrf.mxu0
    %v1037 = vadd.f32 %v984, %v1036
    %v1038 = vpop.f32.mrf.mxu0
    %v1039 = vadd.f32 %v986, %v1038
    %1040 = vmatmul.bf16.gmra.mxu0 %v495
    %v1041 = vpop.f32.mrf.mxu0
    %v1042 = vadd.f32 %v989, %v1041
    %v1043 = vpop.f32.mrf.mxu0
    %v1044 = vadd.f32 %v991, %v1043
    %1045 = vmatmul.bf16.gmra.mxu0 %v498
    %v1046 = vpop.f32.mrf.mxu0
    %v1047 = vadd.f32 %v994, %v1046
    %v1048 = vpop.f32.mrf.mxu0
    %1049 = vdwg.mxu0
    %1050 = vmatpush.bf16.msra.mxu0 %v740
    %1051 = vmatpush.bf16.msra.mxu0 %v736
    %1052 = vmatpush.bf16.msra.mxu0 %v732
    %1053 = vmatpush.bf16.msra.mxu0 %v728
    %1054 = vmatpush.bf16.msra.mxu0 %v724
    %1055 = vmatpush.bf16.msra.mxu0 %v720
    %1056 = vmatpush.bf16.msra.mxu0 %v716
    %1057 = vmatpush.bf16.msra.mxu0 %v712
    %1058 = vmatmul.bf16.gmra.mxu0 %v371
    %v1059 = vpop.f32.mrf.mxu0
    %v1060 = vadd.f32 0.0, %v1059
    %v1061 = vpop.f32.mrf.mxu0
    %v1062 = vadd.f32 0.0, %v1061
    %1063 = vmatmul.bf16.gmra.mxu0 %v391
    %v1064 = vpop.f32.mrf.mxu0
    %v1065 = vadd.f32 0.0, %v1064
    %v1066 = vpop.f32.mrf.mxu0
    %v1067 = vadd.f32 0.0, %v1066
    %1068 = vmatmul.bf16.gmra.mxu0 %v407
    %v1069 = vpop.f32.mrf.mxu0
    %v1070 = vadd.f32 0.0, %v1069
    %v1071 = vpop.f32.mrf.mxu0
    %v1072 = vadd.f32 0.0, %v1071
    %1073 = vmatmul.bf16.gmra.mxu0 %v423
    %v1074 = vpop.f32.mrf.mxu0
    %v1075 = vadd.f32 0.0, %v1074
    %v1076 = vpop.f32.mrf.mxu0
    %v1077 = vadd.f32 0.0, %v1076
    %1078 = vmatmul.bf16.gmra.mxu0 %v439
    %v1079 = vpop.f32.mrf.mxu0
    %v1080 = vadd.f32 0.0, %v1079
    %v1081 = vpop.f32.mrf.mxu0
    %v1082 = vadd.f32 0.0, %v1081
    %1083 = vmatmul.bf16.gmra.mxu0 %v455
    %v1084 = vpop.f32.mrf.mxu0
    %v1085 = vadd.f32 0.0, %v1084
    %v1086 = vpop.f32.mrf.mxu0
    %v1087 = vadd.f32 0.0, %v1086
    %1088 = vmatmul.bf16.gmra.mxu0 %v471
    %v1089 = vpop.f32.mrf.mxu0
    %v1090 = vadd.f32 0.0, %v1089
    %v1091 = vpop.f32.mrf.mxu0
    %v1092 = vadd.f32 0.0, %v1091
    %1093 = vmatmul.bf16.gmra.mxu0 %v487
    %v1094 = vpop.f32.mrf.mxu0
    %v1095 = vadd.f32 0.0, %v1094
    %v1096 = vpop.f32.mrf.mxu0
    %v1097 = vadd.f32 0.0, %v1096
    %1098 = vmatmul.bf16.gmra.mxu0 %v496
    %v1099 = vpop.f32.mrf.mxu0
    %v1100 = vadd.f32 0.0, %v1099
    %v1101 = vpop.f32.mrf.mxu0
    %1102 = vdwg.mxu0
    %1103 = vmatpush.bf16.msra.mxu0 %v772
    %1104 = vmatpush.bf16.msra.mxu0 %v768
    %1105 = vmatpush.bf16.msra.mxu0 %v764
    %1106 = vmatpush.bf16.msra.mxu0 %v760
    %1107 = vmatpush.bf16.msra.mxu0 %v756
    %1108 = vmatpush.bf16.msra.mxu0 %v752
    %1109 = vmatpush.bf16.msra.mxu0 %v748
    %1110 = vmatpush.bf16.msra.mxu0 %v744
    %1111 = vmatmul.bf16.gmra.mxu0 %v383
    %v1112 = vpop.f32.mrf.mxu0
    %v1113 = vadd.f32 %v1060, %v1112
    %v1114 = vpop.f32.mrf.mxu0
    %v1115 = vadd.f32 %v1062, %v1114
    %1116 = vmatmul.bf16.gmra.mxu0 %v399
    %v1117 = vpop.f32.mrf.mxu0
    %v1118 = vadd.f32 %v1065, %v1117
    %v1119 = vpop.f32.mrf.mxu0
    %v1120 = vadd.f32 %v1067, %v1119
    %1121 = vmatmul.bf16.gmra.mxu0 %v415
    %v1122 = vpop.f32.mrf.mxu0
    %v1123 = vadd.f32 %v1070, %v1122
    %v1124 = vpop.f32.mrf.mxu0
    %v1125 = vadd.f32 %v1072, %v1124
    %1126 = vmatmul.bf16.gmra.mxu0 %v431
    %v1127 = vpop.f32.mrf.mxu0
    %v1128 = vadd.f32 %v1075, %v1127
    %v1129 = vpop.f32.mrf.mxu0
    %v1130 = vadd.f32 %v1077, %v1129
    %1131 = vmatmul.bf16.gmra.mxu0 %v447
    %v1132 = vpop.f32.mrf.mxu0
    %v1133 = vadd.f32 %v1080, %v1132
    %v1134 = vpop.f32.mrf.mxu0
    %v1135 = vadd.f32 %v1082, %v1134
    %1136 = vmatmul.bf16.gmra.mxu0 %v463
    %v1137 = vpop.f32.mrf.mxu0
    %v1138 = vadd.f32 %v1085, %v1137
    %v1139 = vpop.f32.mrf.mxu0
    %v1140 = vadd.f32 %v1087, %v1139
    %1141 = vmatmul.bf16.gmra.mxu0 %v479
    %v1142 = vpop.f32.mrf.mxu0
    %v1143 = vadd.f32 %v1090, %v1142
    %v1144 = vpop.f32.mrf.mxu0
    %v1145 = vadd.f32 %v1092, %v1144
    %1146 = vmatmul.bf16.gmra.mxu0 %v495
    %v1147 = vpop.f32.mrf.mxu0
    %v1148 = vadd.f32 %v1095, %v1147
    %v1149 = vpop.f32.mrf.mxu0
    %v1150 = vadd.f32 %v1097, %v1149
    %1151 = vmatmul.bf16.gmra.mxu0 %v498
    %v1152 = vpop.f32.mrf.mxu0
    %v1153 = vadd.f32 %v1100, %v1152
    %v1154 = vpop.f32.mrf.mxu0
    %1155 = vdwg.mxu0
    %1156 = vmatpush.bf16.msra.mxu0 %v741
    %1157 = vmatpush.bf16.msra.mxu0 %v737
    %1158 = vmatpush.bf16.msra.mxu0 %v733
    %1159 = vmatpush.bf16.msra.mxu0 %v729
    %1160 = vmatpush.bf16.msra.mxu0 %v725
    %1161 = vmatpush.bf16.msra.mxu0 %v721
    %1162 = vmatpush.bf16.msra.mxu0 %v717
    %1163 = vmatpush.bf16.msra.mxu0 %v713
    %1164 = vmatmul.bf16.gmra.mxu0 %v371
    %v1165 = vpop.f32.mrf.mxu0
    %v1166 = vadd.f32 0.0, %v1165
    %v1167 = vpop.f32.mrf.mxu0
    %v1168 = vadd.f32 0.0, %v1167
    %1169 = vmatmul.bf16.gmra.mxu0 %v391
    %v1170 = vpop.f32.mrf.mxu0
    %v1171 = vadd.f32 0.0, %v1170
    %v1172 = vpop.f32.mrf.mxu0
    %v1173 = vadd.f32 0.0, %v1172
    %1174 = vmatmul.bf16.gmra.mxu0 %v407
    %v1175 = vpop.f32.mrf.mxu0
    %v1176 = vadd.f32 0.0, %v1175
    %v1177 = vpop.f32.mrf.mxu0
    %v1178 = vadd.f32 0.0, %v1177
    %1179 = vmatmul.bf16.gmra.mxu0 %v423
    %v1180 = vpop.f32.mrf.mxu0
    %v1181 = vadd.f32 0.0, %v1180
    %v1182 = vpop.f32.mrf.mxu0
    %v1183 = vadd.f32 0.0, %v1182
    %1184 = vmatmul.bf16.gmra.mxu0 %v439
    %v1185 = vpop.f32.mrf.mxu0
    %v1186 = vadd.f32 0.0, %v1185
    %v1187 = vpop.f32.mrf.mxu0
    %v1188 = vadd.f32 0.0, %v1187
    %1189 = vmatmul.bf16.gmra.mxu0 %v455
    %v1190 = vpop.f32.mrf.mxu0
    %v1191 = vadd.f32 0.0, %v1190
    %v1192 = vpop.f32.mrf.mxu0
    %v1193 = vadd.f32 0.0, %v1192
    %1194 = vmatmul.bf16.gmra.mxu0 %v471
    %v1195 = vpop.f32.mrf.mxu0
    %v1196 = vadd.f32 0.0, %v1195
    %v1197 = vpop.f32.mrf.mxu0
    %v1198 = vadd.f32 0.0, %v1197
    %1199 = vmatmul.bf16.gmra.mxu0 %v487
    %v1200 = vpop.f32.mrf.mxu0
    %v1201 = vadd.f32 0.0, %v1200
    %v1202 = vpop.f32.mrf.mxu0
    %v1203 = vadd.f32 0.0, %v1202
    %1204 = vmatmul.bf16.gmra.mxu0 %v496
    %v1205 = vpop.f32.mrf.mxu0
    %v1206 = vadd.f32 0.0, %v1205
    %v1207 = vpop.f32.mrf.mxu0
    %1208 = vdwg.mxu0
    %1209 = vmatpush.bf16.msra.mxu0 %v773
    %1210 = vmatpush.bf16.msra.mxu0 %v769
    %1211 = vmatpush.bf16.msra.mxu0 %v765
    %1212 = vmatpush.bf16.msra.mxu0 %v761
    %1213 = vmatpush.bf16.msra.mxu0 %v757
    %1214 = vmatpush.bf16.msra.mxu0 %v753
    %1215 = vmatpush.bf16.msra.mxu0 %v749
    %1216 = vmatpush.bf16.msra.mxu0 %v745
    %1217 = vmatmul.bf16.gmra.mxu0 %v383
    %v1218 = vpop.f32.mrf.mxu0
    %v1219 = vadd.f32 %v1166, %v1218
    %v1220 = vpop.f32.mrf.mxu0
    %v1221 = vadd.f32 %v1168, %v1220
    %1222 = vmatmul.bf16.gmra.mxu0 %v399
    %v1223 = vpop.f32.mrf.mxu0
    %v1224 = vadd.f32 %v1171, %v1223
    %v1225 = vpop.f32.mrf.mxu0
    %v1226 = vadd.f32 %v1173, %v1225
    %1227 = vmatmul.bf16.gmra.mxu0 %v415
    %v1228 = vpop.f32.mrf.mxu0
    %v1229 = vadd.f32 %v1176, %v1228
    %v1230 = vpop.f32.mrf.mxu0
    %v1231 = vadd.f32 %v1178, %v1230
    %1232 = vmatmul.bf16.gmra.mxu0 %v431
    %v1233 = vpop.f32.mrf.mxu0
    %v1234 = vadd.f32 %v1181, %v1233
    %v1235 = vpop.f32.mrf.mxu0
    %v1236 = vadd.f32 %v1183, %v1235
    %1237 = vmatmul.bf16.gmra.mxu0 %v447
    %v1238 = vpop.f32.mrf.mxu0
    %v1239 = vadd.f32 %v1186, %v1238
    %v1240 = vpop.f32.mrf.mxu0
    %v1241 = vadd.f32 %v1188, %v1240
    %1242 = vmatmul.bf16.gmra.mxu0 %v463
    %v1243 = vpop.f32.mrf.mxu0
    %v1244 = vadd.f32 %v1191, %v1243
    %v1245 = vpop.f32.mrf.mxu0
    %v1246 = vadd.f32 %v1193, %v1245
    %1247 = vmatmul.bf16.gmra.mxu0 %v479
    %v1248 = vpop.f32.mrf.mxu0
    %v1249 = vadd.f32 %v1196, %v1248
    %v1250 = vpop.f32.mrf.mxu0
    %v1251 = vadd.f32 %v1198, %v1250
    %1252 = vmatmul.bf16.gmra.mxu0 %v495
    %v1253 = vpop.f32.mrf.mxu0
    %v1254 = vadd.f32 %v1201, %v1253
    %v1255 = vpop.f32.mrf.mxu0
    %v1256 = vadd.f32 %v1203, %v1255
    %1257 = vmatmul.bf16.gmra.mxu0 %v498
    %v1258 = vpop.f32.mrf.mxu0
    %v1259 = vadd.f32 %v1206, %v1258
    %v1260 = vpop.f32.mrf.mxu0
    %1261 = vdwg.mxu0
    %v1344 = vunpack.c.l.b16 %v162
    %v1345 = vunpack.c.h.b16 %v162
    %v1346 = vunpack.c.l.b16 %v163
    %v1347 = vunpack.c.h.b16 %v163
    %v1348 = vunpack.c.l.b16 %v164
    %v1349 = vunpack.c.h.b16 %v164
    %v1350 = vunpack.c.l.b16 %v165
    %v1351 = vunpack.c.h.b16 %v165
    %v1352 = vunpack.c.l.b16 %v166
    %v1353 = vunpack.c.h.b16 %v166
    %v1354 = vunpack.c.l.b16 %v167
    %v1355 = vunpack.c.h.b16 %v167
    %v1356 = vunpack.c.l.b16 %v168
    %v1357 = vunpack.c.h.b16 %v168
    %v1358 = vunpack.c.l.b16 %v169
    %v1359 = vunpack.c.h.b16 %v169
    %v1360 = vunpack.c.l.b16 %v170
    %v1361 = vunpack.c.h.b16 %v170
    %v1362 = vunpack.c.l.b16 %v171
    %v1363 = vunpack.c.h.b16 %v171
    %v1364 = vunpack.c.l.b16 %v172
    %v1365 = vunpack.c.h.b16 %v172
    %v1366 = vunpack.c.l.b16 %v173
    %v1367 = vunpack.c.h.b16 %v173
    %v1368 = vunpack.c.l.b16 %v174
    %v1369 = vunpack.c.h.b16 %v174
    %v1370 = vunpack.c.l.b16 %v175
    %v1371 = vunpack.c.h.b16 %v175
    %v1372 = vunpack.c.l.b16 %v176
    %v1373 = vunpack.c.h.b16 %v176
    %v1374 = vunpack.c.l.b16 %v177
    %v1375 = vunpack.c.h.b16 %v177
    %v1376 = vunpack.c.l.b16 %v178
    %v1377 = vunpack.c.h.b16 %v178
    %v1378 = vunpack.c.l.b16 %v179
    %v1379 = vunpack.c.h.b16 %v179
    %v1380 = vunpack.c.l.b16 %v180
    %v1381 = vunpack.c.h.b16 %v180
    %v1382 = vunpack.c.l.b16 %v181
    %v1383 = vunpack.c.h.b16 %v181
    %v1384 = vunpack.c.l.b16 %v182
    %v1385 = vunpack.c.h.b16 %v182
    %v1386 = vunpack.c.l.b16 %v183
    %v1387 = vunpack.c.h.b16 %v183
    %v1388 = vunpack.c.l.b16 %v184
    %v1389 = vunpack.c.h.b16 %v184
    %v1390 = vunpack.c.l.b16 %v185
    %v1391 = vunpack.c.h.b16 %v185
    %v1392 = vunpack.c.l.b16 %v186
    %v1393 = vunpack.c.h.b16 %v186
    %v1394 = vunpack.c.l.b16 %v187
    %v1395 = vunpack.c.h.b16 %v187
    %v1396 = vunpack.c.l.b16 %v188
    %v1397 = vunpack.c.h.b16 %v188
    %v1398 = vunpack.c.l.b16 %v189
    %v1399 = vunpack.c.h.b16 %v189
    %v1400 = vunpack.c.l.b16 %v190
    %v1401 = vunpack.c.h.b16 %v190
    %v1402 = vunpack.c.l.b16 %v191
    %v1403 = vunpack.c.h.b16 %v191
    %v1404 = vunpack.c.l.b16 %v192
    %v1405 = vunpack.c.h.b16 %v192
    %v1406 = vunpack.c.l.b16 %v193
    %v1407 = vunpack.c.h.b16 %v193
    %v1408 = vunpack.c.l.b16 %v194
    %v1409 = vunpack.c.h.b16 %v194
    %v1410 = vunpack.c.l.b16 %v195
    %v1411 = vunpack.c.h.b16 %v195
    %v1412 = vunpack.c.l.b16 %v196
    %v1413 = vunpack.c.h.b16 %v196
    %v1414 = vunpack.c.l.b16 %v197
    %v1415 = vunpack.c.h.b16 %v197
    %v1416 = vunpack.c.l.b16 %v198
    %v1417 = vunpack.c.h.b16 %v198
    %v1418 = vunpack.c.l.b16 %v199
    %v1419 = vunpack.c.h.b16 %v199
    %v1420 = vunpack.c.l.b16 %v200
    %v1421 = vunpack.c.h.b16 %v200
    %v1422 = vunpack.c.l.b16 %v201
    %v1423 = vunpack.c.h.b16 %v201
    %v1424 = vunpack.c.l.b16 %v202
    %v1425 = vunpack.c.h.b16 %v202
    %v1426 = vunpack.c.l.b16 %v203
    %v1427 = vunpack.c.h.b16 %v203
    %v1428 = vunpack.c.l.b16 %v204
    %v1429 = vunpack.c.h.b16 %v204
    %v1430 = vunpack.c.l.b16 %v205
    %v1431 = vunpack.c.h.b16 %v205
    %v1432 = vunpack.c.l.b16 %v206
    %v1433 = vunpack.c.h.b16 %v206
    %v1434 = vunpack.c.l.b16 %v207
    %v1435 = vunpack.c.h.b16 %v207
    %v1436 = vunpack.c.l.b16 %v208
    %v1437 = vunpack.c.h.b16 %v208
    %v1438 = vunpack.c.l.b16 %v209
    %v1439 = vunpack.c.h.b16 %v209
    %v1440 = vunpack.c.l.b16 %v210
    %v1441 = vunpack.c.h.b16 %v210
    %v1442 = vunpack.c.l.b16 %v211
    %v1443 = vunpack.c.h.b16 %v211
    %v1444 = vunpack.c.l.b16 %v212
    %v1445 = vunpack.c.h.b16 %v212
    %v1446 = vunpack.c.l.b16 %v213
    %v1447 = vunpack.c.h.b16 %v213
    %v1448 = vunpack.c.l.b16 %v214
    %v1449 = vunpack.c.h.b16 %v214
    %v1450 = vunpack.c.l.b16 %v215
    %v1451 = vunpack.c.h.b16 %v215
    %v1452 = vunpack.c.l.b16 %v216
    %v1453 = vunpack.c.h.b16 %v216
    %v1454 = vunpack.c.l.b16 %v217
    %v1455 = vunpack.c.h.b16 %v217
    %v1456 = vunpack.c.l.b16 %v218
    %v1457 = vunpack.c.h.b16 %v218
    %v1458 = vunpack.c.l.b16 %v219
    %v1459 = vunpack.c.h.b16 %v219
    %v1460 = vunpack.c.l.b16 %v220
    %v1461 = vunpack.c.h.b16 %v220
    %v1462 = vunpack.c.l.b16 %v221
    %v1463 = vunpack.c.h.b16 %v221
    %v1464 = vunpack.c.l.b16 %v222
    %v1465 = vunpack.c.h.b16 %v222
    %v1466 = vunpack.c.l.b16 %v223
    %v1467 = vunpack.c.h.b16 %v223
    %v1468 = vunpack.c.l.b16 %v224
    %v1469 = vunpack.c.h.b16 %v224
    %v1470 = vunpack.c.l.b16 %v225
    %v1471 = vunpack.c.h.b16 %v225
    %v1472 = vpack.c.b16 %v1348, %v1344
    %v1473 = vpack.c.b16 %v1349, %v1345
    %v1474 = vpack.c.b16 %v1350, %v1346
    %v1475 = vpack.c.b16 %v1351, %v1347
    %v1476 = vpack.c.b16 %v1356, %v1352
    %v1477 = vpack.c.b16 %v1357, %v1353
    %v1478 = vpack.c.b16 %v1358, %v1354
    %v1479 = vpack.c.b16 %v1359, %v1355
    %v1480 = vpack.c.b16 %v1364, %v1360
    %v1481 = vpack.c.b16 %v1365, %v1361
    %v1482 = vpack.c.b16 %v1366, %v1362
    %v1483 = vpack.c.b16 %v1367, %v1363
    %v1484 = vpack.c.b16 %v1372, %v1368
    %v1485 = vpack.c.b16 %v1373, %v1369
    %v1486 = vpack.c.b16 %v1374, %v1370
    %v1487 = vpack.c.b16 %v1375, %v1371
    %v1488 = vpack.c.b16 %v1380, %v1376
    %v1489 = vpack.c.b16 %v1381, %v1377
    %v1490 = vpack.c.b16 %v1382, %v1378
    %v1491 = vpack.c.b16 %v1383, %v1379
    %v1492 = vpack.c.b16 %v1388, %v1384
    %v1493 = vpack.c.b16 %v1389, %v1385
    %v1494 = vpack.c.b16 %v1390, %v1386
    %v1495 = vpack.c.b16 %v1391, %v1387
    %v1496 = vpack.c.b16 %v1396, %v1392
    %v1497 = vpack.c.b16 %v1397, %v1393
    %v1498 = vpack.c.b16 %v1398, %v1394
    %v1499 = vpack.c.b16 %v1399, %v1395
    %v1500 = vpack.c.b16 %v1404, %v1400
    %v1501 = vpack.c.b16 %v1405, %v1401
    %v1502 = vpack.c.b16 %v1406, %v1402
    %v1503 = vpack.c.b16 %v1407, %v1403
    %v1504 = vpack.c.b16 %v1412, %v1408
    %v1505 = vpack.c.b16 %v1413, %v1409
    %v1506 = vpack.c.b16 %v1414, %v1410
    %v1507 = vpack.c.b16 %v1415, %v1411
    %v1508 = vpack.c.b16 %v1420, %v1416
    %v1509 = vpack.c.b16 %v1421, %v1417
    %v1510 = vpack.c.b16 %v1422, %v1418
    %v1511 = vpack.c.b16 %v1423, %v1419
    %v1512 = vpack.c.b16 %v1428, %v1424
    %v1513 = vpack.c.b16 %v1429, %v1425
    %v1514 = vpack.c.b16 %v1430, %v1426
    %v1515 = vpack.c.b16 %v1431, %v1427
    %v1516 = vpack.c.b16 %v1436, %v1432
    %v1517 = vpack.c.b16 %v1437, %v1433
    %v1518 = vpack.c.b16 %v1438, %v1434
    %v1519 = vpack.c.b16 %v1439, %v1435
    %v1520 = vpack.c.b16 %v1444, %v1440
    %v1521 = vpack.c.b16 %v1445, %v1441
    %v1522 = vpack.c.b16 %v1446, %v1442
    %v1523 = vpack.c.b16 %v1447, %v1443
    %v1524 = vpack.c.b16 %v1452, %v1448
    %v1525 = vpack.c.b16 %v1453, %v1449
    %v1526 = vpack.c.b16 %v1454, %v1450
    %v1527 = vpack.c.b16 %v1455, %v1451
    %v1528 = vpack.c.b16 %v1460, %v1456
    %v1529 = vpack.c.b16 %v1461, %v1457
    %v1530 = vpack.c.b16 %v1462, %v1458
    %v1531 = vpack.c.b16 %v1463, %v1459
    %v1532 = vpack.c.b16 %v1468, %v1464
    %v1533 = vpack.c.b16 %v1469, %v1465
    %v1534 = vpack.c.b16 %v1470, %v1466
    %v1535 = vpack.c.b16 %v1471, %v1467
    %1600 = vmatpush.bf16.msra.mxu0 %v1500
    %1601 = vmatpush.bf16.msra.mxu0 %v1496
    %1602 = vmatpush.bf16.msra.mxu0 %v1492
    %1603 = vmatpush.bf16.msra.mxu0 %v1488
    %1604 = vmatpush.bf16.msra.mxu0 %v1484
    %1605 = vmatpush.bf16.msra.mxu0 %v1480
    %1606 = vmatpush.bf16.msra.mxu0 %v1476
    %1607 = vmatpush.bf16.msra.mxu0 %v1472
    %1608 = vmatmul.bf16.gmra.mxu0 %v341
    %v1609 = vpop.f32.mrf.mxu0
    %v1610 = vadd.f32 %v901, %v1609
    %v1611 = vpop.f32.mrf.mxu0
    %v1612 = vadd.f32 %v903, %v1611
    %1613 = vmatmul.bf16.gmra.mxu0 %v343
    %v1614 = vpop.f32.mrf.mxu0
    %v1615 = vadd.f32 %v906, %v1614
    %v1616 = vpop.f32.mrf.mxu0
    %v1617 = vadd.f32 %v908, %v1616
    %1618 = vmatmul.bf16.gmra.mxu0 %v345
    %v1619 = vpop.f32.mrf.mxu0
    %v1620 = vadd.f32 %v911, %v1619
    %v1621 = vpop.f32.mrf.mxu0
    %v1622 = vadd.f32 %v913, %v1621
    %1623 = vmatmul.bf16.gmra.mxu0 %v347
    %v1624 = vpop.f32.mrf.mxu0
    %v1625 = vadd.f32 %v916, %v1624
    %v1626 = vpop.f32.mrf.mxu0
    %v1627 = vadd.f32 %v918, %v1626
    %1628 = vmatmul.bf16.gmra.mxu0 %v349
    %v1629 = vpop.f32.mrf.mxu0
    %v1630 = vadd.f32 %v921, %v1629
    %v1631 = vpop.f32.mrf.mxu0
    %v1632 = vadd.f32 %v923, %v1631
    %1633 = vmatmul.bf16.gmra.mxu0 %v351
    %v1634 = vpop.f32.mrf.mxu0
    %v1635 = vadd.f32 %v926, %v1634
    %v1636 = vpop.f32.mrf.mxu0
    %v1637 = vadd.f32 %v928, %v1636
    %1638 = vmatmul.bf16.gmra.mxu0 %v353
    %v1639 = vpop.f32.mrf.mxu0
    %v1640 = vadd.f32 %v931, %v1639
    %v1641 = vpop.f32.mrf.mxu0
    %v1642 = vadd.f32 %v933, %v1641
    %1643 = vmatmul.bf16.gmra.mxu0 %v355
    %v1644 = vpop.f32.mrf.mxu0
    %v1645 = vadd.f32 %v936, %v1644
    %v1646 = vpop.f32.mrf.mxu0
    %v1647 = vadd.f32 %v938, %v1646
    %1648 = vmatmul.bf16.gmra.mxu0 %v357
    %v1649 = vpop.f32.mrf.mxu0
    %v1650 = vadd.f32 %v941, %v1649
    %v1651 = vpop.f32.mrf.mxu0
    %1652 = vdwg.mxu0
    %1653 = vmatpush.bf16.msra.mxu0 %v1532
    %1654 = vmatpush.bf16.msra.mxu0 %v1528
    %1655 = vmatpush.bf16.msra.mxu0 %v1524
    %1656 = vmatpush.bf16.msra.mxu0 %v1520
    %1657 = vmatpush.bf16.msra.mxu0 %v1516
    %1658 = vmatpush.bf16.msra.mxu0 %v1512
    %1659 = vmatpush.bf16.msra.mxu0 %v1508
    %1660 = vmatpush.bf16.msra.mxu0 %v1504
    %1661 = vmatmul.bf16.gmra.mxu0 %v342
    %v1662 = vpop.f32.mrf.mxu0
    %v1663 = vadd.f32 %v1610, %v1662
    %v1664 = vpop.f32.mrf.mxu0
    %v1665 = vadd.f32 %v1612, %v1664
    %1666 = vmatmul.bf16.gmra.mxu0 %v344
    %v1667 = vpop.f32.mrf.mxu0
    %v1668 = vadd.f32 %v1615, %v1667
    %v1669 = vpop.f32.mrf.mxu0
    %v1670 = vadd.f32 %v1617, %v1669
    %1671 = vmatmul.bf16.gmra.mxu0 %v346
    %v1672 = vpop.f32.mrf.mxu0
    %v1673 = vadd.f32 %v1620, %v1672
    %v1674 = vpop.f32.mrf.mxu0
    %v1675 = vadd.f32 %v1622, %v1674
    %1676 = vmatmul.bf16.gmra.mxu0 %v348
    %v1677 = vpop.f32.mrf.mxu0
    %v1678 = vadd.f32 %v1625, %v1677
    %v1679 = vpop.f32.mrf.mxu0
    %v1680 = vadd.f32 %v1627, %v1679
    %1681 = vmatmul.bf16.gmra.mxu0 %v350
    %v1682 = vpop.f32.mrf.mxu0
    %v1683 = vadd.f32 %v1630, %v1682
    %v1684 = vpop.f32.mrf.mxu0
    %v1685 = vadd.f32 %v1632, %v1684
    %1686 = vmatmul.bf16.gmra.mxu0 %v352
    %v1687 = vpop.f32.mrf.mxu0
    %v1688 = vadd.f32 %v1635, %v1687
    %v1689 = vpop.f32.mrf.mxu0
    %v1690 = vadd.f32 %v1637, %v1689
    %1691 = vmatmul.bf16.gmra.mxu0 %v354
    %v1692 = vpop.f32.mrf.mxu0
    %v1693 = vadd.f32 %v1640, %v1692
    %v1694 = vpop.f32.mrf.mxu0
    %v1695 = vadd.f32 %v1642, %v1694
    %1696 = vmatmul.bf16.gmra.mxu0 %v356
    %v1697 = vpop.f32.mrf.mxu0
    %v1698 = vadd.f32 %v1645, %v1697
    %v1699 = vpop.f32.mrf.mxu0
    %v1700 = vadd.f32 %v1647, %v1699
    %1701 = vmatmul.bf16.gmra.mxu0 %v358
    %v1702 = vpop.f32.mrf.mxu0
    %v1703 = vadd.f32 %v1650, %v1702
    %v1704 = vpop.f32.mrf.mxu0
    %1705 = vdwg.mxu0
    %1706 = vmatpush.bf16.msra.mxu0 %v1501
    %1707 = vmatpush.bf16.msra.mxu0 %v1497
    %1708 = vmatpush.bf16.msra.mxu0 %v1493
    %1709 = vmatpush.bf16.msra.mxu0 %v1489
    %1710 = vmatpush.bf16.msra.mxu0 %v1485
    %1711 = vmatpush.bf16.msra.mxu0 %v1481
    %1712 = vmatpush.bf16.msra.mxu0 %v1477
    %1713 = vmatpush.bf16.msra.mxu0 %v1473
    %1714 = vmatmul.bf16.gmra.mxu0 %v341
    %v1715 = vpop.f32.mrf.mxu0
    %v1716 = vadd.f32 %v1007, %v1715
    %v1717 = vpop.f32.mrf.mxu0
    %v1718 = vadd.f32 %v1009, %v1717
    %1719 = vmatmul.bf16.gmra.mxu0 %v343
    %v1720 = vpop.f32.mrf.mxu0
    %v1721 = vadd.f32 %v1012, %v1720
    %v1722 = vpop.f32.mrf.mxu0
    %v1723 = vadd.f32 %v1014, %v1722
    %1724 = vmatmul.bf16.gmra.mxu0 %v345
    %v1725 = vpop.f32.mrf.mxu0
    %v1726 = vadd.f32 %v1017, %v1725
    %v1727 = vpop.f32.mrf.mxu0
    %v1728 = vadd.f32 %v1019, %v1727
    %1729 = vmatmul.bf16.gmra.mxu0 %v347
    %v1730 = vpop.f32.mrf.mxu0
    %v1731 = vadd.f32 %v1022, %v1730
    %v1732 = vpop.f32.mrf.mxu0
    %v1733 = vadd.f32 %v1024, %v1732
    %1734 = vmatmul.bf16.gmra.mxu0 %v349
    %v1735 = vpop.f32.mrf.mxu0
    %v1736 = vadd.f32 %v1027, %v1735
    %v1737 = vpop.f32.mrf.mxu0
    %v1738 = vadd.f32 %v1029, %v1737
    %1739 = vmatmul.bf16.gmra.mxu0 %v351
    %v1740 = vpop.f32.mrf.mxu0
    %v1741 = vadd.f32 %v1032, %v1740
    %v1742 = vpop.f32.mrf.mxu0
    %v1743 = vadd.f32 %v1034, %v1742
    %1744 = vmatmul.bf16.gmra.mxu0 %v353
    %v1745 = vpop.f32.mrf.mxu0
    %v1746 = vadd.f32 %v1037, %v1745
    %v1747 = vpop.f32.mrf.mxu0
    %v1748 = vadd.f32 %v1039, %v1747
    %1749 = vmatmul.bf16.gmra.mxu0 %v355
    %v1750 = vpop.f32.mrf.mxu0
    %v1751 = vadd.f32 %v1042, %v1750
    %v1752 = vpop.f32.mrf.mxu0
    %v1753 = vadd.f32 %v1044, %v1752
    %1754 = vmatmul.bf16.gmra.mxu0 %v357
    %v1755 = vpop.f32.mrf.mxu0
    %v1756 = vadd.f32 %v1047, %v1755
    %v1757 = vpop.f32.mrf.mxu0
    %1758 = vdwg.mxu0
    %1759 = vmatpush.bf16.msra.mxu0 %v1533
    %1760 = vmatpush.bf16.msra.mxu0 %v1529
    %1761 = vmatpush.bf16.msra.mxu0 %v1525
    %1762 = vmatpush.bf16.msra.mxu0 %v1521
    %1763 = vmatpush.bf16.msra.mxu0 %v1517
    %1764 = vmatpush.bf16.msra.mxu0 %v1513
    %1765 = vmatpush.bf16.msra.mxu0 %v1509
    %1766 = vmatpush.bf16.msra.mxu0 %v1505
    %1767 = vmatmul.bf16.gmra.mxu0 %v342
    %v1768 = vpop.f32.mrf.mxu0
    %v1769 = vadd.f32 %v1716, %v1768
    %v1770 = vpop.f32.mrf.mxu0
    %v1771 = vadd.f32 %v1718, %v1770
    %1772 = vmatmul.bf16.gmra.mxu0 %v344
    %v1773 = vpop.f32.mrf.mxu0
    %v1774 = vadd.f32 %v1721, %v1773
    %v1775 = vpop.f32.mrf.mxu0
    %v1776 = vadd.f32 %v1723, %v1775
    %1777 = vmatmul.bf16.gmra.mxu0 %v346
    %v1778 = vpop.f32.mrf.mxu0
    %v1779 = vadd.f32 %v1726, %v1778
    %v1780 = vpop.f32.mrf.mxu0
    %v1781 = vadd.f32 %v1728, %v1780
    %1782 = vmatmul.bf16.gmra.mxu0 %v348
    %v1783 = vpop.f32.mrf.mxu0
    %v1784 = vadd.f32 %v1731, %v1783
    %v1785 = vpop.f32.mrf.mxu0
    %v1786 = vadd.f32 %v1733, %v1785
    %1787 = vmatmul.bf16.gmra.mxu0 %v350
    %v1788 = vpop.f32.mrf.mxu0
    %v1789 = vadd.f32 %v1736, %v1788
    %v1790 = vpop.f32.mrf.mxu0
    %v1791 = vadd.f32 %v1738, %v1790
    %1792 = vmatmul.bf16.gmra.mxu0 %v352
    %v1793 = vpop.f32.mrf.mxu0
    %v1794 = vadd.f32 %v1741, %v1793
    %v1795 = vpop.f32.mrf.mxu0
    %v1796 = vadd.f32 %v1743, %v1795
    %1797 = vmatmul.bf16.gmra.mxu0 %v354
    %v1798 = vpop.f32.mrf.mxu0
    %v1799 = vadd.f32 %v1746, %v1798
    %v1800 = vpop.f32.mrf.mxu0
    %v1801 = vadd.f32 %v1748, %v1800
    %1802 = vmatmul.bf16.gmra.mxu0 %v356
    %v1803 = vpop.f32.mrf.mxu0
    %v1804 = vadd.f32 %v1751, %v1803
    %v1805 = vpop.f32.mrf.mxu0
    %v1806 = vadd.f32 %v1753, %v1805
    %1807 = vmatmul.bf16.gmra.mxu0 %v358
    %v1808 = vpop.f32.mrf.mxu0
    %v1809 = vadd.f32 %v1756, %v1808
    %v1810 = vpop.f32.mrf.mxu0
    %1811 = vdwg.mxu0
    %1812 = vmatpush.bf16.msra.mxu0 %v1502
    %1813 = vmatpush.bf16.msra.mxu0 %v1498
    %1814 = vmatpush.bf16.msra.mxu0 %v1494
    %1815 = vmatpush.bf16.msra.mxu0 %v1490
    %1816 = vmatpush.bf16.msra.mxu0 %v1486
    %1817 = vmatpush.bf16.msra.mxu0 %v1482
    %1818 = vmatpush.bf16.msra.mxu0 %v1478
    %1819 = vmatpush.bf16.msra.mxu0 %v1474
    %1820 = vmatmul.bf16.gmra.mxu0 %v341
    %v1821 = vpop.f32.mrf.mxu0
    %v1822 = vadd.f32 %v1113, %v1821
    %v1823 = vpop.f32.mrf.mxu0
    %v1824 = vadd.f32 %v1115, %v1823
    %1825 = vmatmul.bf16.gmra.mxu0 %v343
    %v1826 = vpop.f32.mrf.mxu0
    %v1827 = vadd.f32 %v1118, %v1826
    %v1828 = vpop.f32.mrf.mxu0
    %v1829 = vadd.f32 %v1120, %v1828
    %1830 = vmatmul.bf16.gmra.mxu0 %v345
    %v1831 = vpop.f32.mrf.mxu0
    %v1832 = vadd.f32 %v1123, %v1831
    %v1833 = vpop.f32.mrf.mxu0
    %v1834 = vadd.f32 %v1125, %v1833
    %1835 = vmatmul.bf16.gmra.mxu0 %v347
    %v1836 = vpop.f32.mrf.mxu0
    %v1837 = vadd.f32 %v1128, %v1836
    %v1838 = vpop.f32.mrf.mxu0
    %v1839 = vadd.f32 %v1130, %v1838
    %1840 = vmatmul.bf16.gmra.mxu0 %v349
    %v1841 = vpop.f32.mrf.mxu0
    %v1842 = vadd.f32 %v1133, %v1841
    %v1843 = vpop.f32.mrf.mxu0
    %v1844 = vadd.f32 %v1135, %v1843
    %1845 = vmatmul.bf16.gmra.mxu0 %v351
    %v1846 = vpop.f32.mrf.mxu0
    %v1847 = vadd.f32 %v1138, %v1846
    %v1848 = vpop.f32.mrf.mxu0
    %v1849 = vadd.f32 %v1140, %v1848
    %1850 = vmatmul.bf16.gmra.mxu0 %v353
    %v1851 = vpop.f32.mrf.mxu0
    %v1852 = vadd.f32 %v1143, %v1851
    %v1853 = vpop.f32.mrf.mxu0
    %v1854 = vadd.f32 %v1145, %v1853
    %1855 = vmatmul.bf16.gmra.mxu0 %v355
    %v1856 = vpop.f32.mrf.mxu0
    %v1857 = vadd.f32 %v1148, %v1856
    %v1858 = vpop.f32.mrf.mxu0
    %v1859 = vadd.f32 %v1150, %v1858
    %1860 = vmatmul.bf16.gmra.mxu0 %v357
    %v1861 = vpop.f32.mrf.mxu0
    %v1862 = vadd.f32 %v1153, %v1861
    %v1863 = vpop.f32.mrf.mxu0
    %1864 = vdwg.mxu0
    %1865 = vmatpush.bf16.msra.mxu0 %v1534
    %1866 = vmatpush.bf16.msra.mxu0 %v1530
    %1867 = vmatpush.bf16.msra.mxu0 %v1526
    %1868 = vmatpush.bf16.msra.mxu0 %v1522
    %1869 = vmatpush.bf16.msra.mxu0 %v1518
    %1870 = vmatpush.bf16.msra.mxu0 %v1514
    %1871 = vmatpush.bf16.msra.mxu0 %v1510
    %1872 = vmatpush.bf16.msra.mxu0 %v1506
    %1873 = vmatmul.bf16.gmra.mxu0 %v342
    %v1874 = vpop.f32.mrf.mxu0
    %v1875 = vadd.f32 %v1822, %v1874
    %v1876 = vpop.f32.mrf.mxu0
    %v1877 = vadd.f32 %v1824, %v1876
    %1878 = vmatmul.bf16.gmra.mxu0 %v344
    %v1879 = vpop.f32.mrf.mxu0
    %v1880 = vadd.f32 %v1827, %v1879
    %v1881 = vpop.f32.mrf.mxu0
    %v1882 = vadd.f32 %v1829, %v1881
    %1883 = vmatmul.bf16.gmra.mxu0 %v346
    %v1884 = vpop.f32.mrf.mxu0
    %v1885 = vadd.f32 %v1832, %v1884
    %v1886 = vpop.f32.mrf.mxu0
    %v1887 = vadd.f32 %v1834, %v1886
    %1888 = vmatmul.bf16.gmra.mxu0 %v348
    %v1889 = vpop.f32.mrf.mxu0
    %v1890 = vadd.f32 %v1837, %v1889
    %v1891 = vpop.f32.mrf.mxu0
    %v1892 = vadd.f32 %v1839, %v1891
    %1893 = vmatmul.bf16.gmra.mxu0 %v350
    %v1894 = vpop.f32.mrf.mxu0
    %v1895 = vadd.f32 %v1842, %v1894
    %v1896 = vpop.f32.mrf.mxu0
    %v1897 = vadd.f32 %v1844, %v1896
    %1898 = vmatmul.bf16.gmra.mxu0 %v352
    %v1899 = vpop.f32.mrf.mxu0
    %v1900 = vadd.f32 %v1847, %v1899
    %v1901 = vpop.f32.mrf.mxu0
    %v1902 = vadd.f32 %v1849, %v1901
    %1903 = vmatmul.bf16.gmra.mxu0 %v354
    %v1904 = vpop.f32.mrf.mxu0
    %v1905 = vadd.f32 %v1852, %v1904
    %v1906 = vpop.f32.mrf.mxu0
    %v1907 = vadd.f32 %v1854, %v1906
    %1908 = vmatmul.bf16.gmra.mxu0 %v356
    %v1909 = vpop.f32.mrf.mxu0
    %v1910 = vadd.f32 %v1857, %v1909
    %v1911 = vpop.f32.mrf.mxu0
    %v1912 = vadd.f32 %v1859, %v1911
    %1913 = vmatmul.bf16.gmra.mxu0 %v358
    %v1914 = vpop.f32.mrf.mxu0
    %v1915 = vadd.f32 %v1862, %v1914
    %v1916 = vpop.f32.mrf.mxu0
    %1917 = vdwg.mxu0
    %1918 = vmatpush.bf16.msra.mxu0 %v1503
    %1919 = vmatpush.bf16.msra.mxu0 %v1499
    %1920 = vmatpush.bf16.msra.mxu0 %v1495
    %1921 = vmatpush.bf16.msra.mxu0 %v1491
    %1922 = vmatpush.bf16.msra.mxu0 %v1487
    %1923 = vmatpush.bf16.msra.mxu0 %v1483
    %1924 = vmatpush.bf16.msra.mxu0 %v1479
    %1925 = vmatpush.bf16.msra.mxu0 %v1475
    %1926 = vmatmul.bf16.gmra.mxu0 %v341
    %v1927 = vpop.f32.mrf.mxu0
    %v1928 = vadd.f32 %v1219, %v1927
    %v1929 = vpop.f32.mrf.mxu0
    %v1930 = vadd.f32 %v1221, %v1929
    %1931 = vmatmul.bf16.gmra.mxu0 %v343
    %v1932 = vpop.f32.mrf.mxu0
    %v1933 = vadd.f32 %v1224, %v1932
    %v1934 = vpop.f32.mrf.mxu0
    %v1935 = vadd.f32 %v1226, %v1934
    %1936 = vmatmul.bf16.gmra.mxu0 %v345
    %v1937 = vpop.f32.mrf.mxu0
    %v1938 = vadd.f32 %v1229, %v1937
    %v1939 = vpop.f32.mrf.mxu0
    %v1940 = vadd.f32 %v1231, %v1939
    %1941 = vmatmul.bf16.gmra.mxu0 %v347
    %v1942 = vpop.f32.mrf.mxu0
    %v1943 = vadd.f32 %v1234, %v1942
    %v1944 = vpop.f32.mrf.mxu0
    %v1945 = vadd.f32 %v1236, %v1944
    %1946 = vmatmul.bf16.gmra.mxu0 %v349
    %v1947 = vpop.f32.mrf.mxu0
    %v1948 = vadd.f32 %v1239, %v1947
    %v1949 = vpop.f32.mrf.mxu0
    %v1950 = vadd.f32 %v1241, %v1949
    %1951 = vmatmul.bf16.gmra.mxu0 %v351
    %v1952 = vpop.f32.mrf.mxu0
    %v1953 = vadd.f32 %v1244, %v1952
    %v1954 = vpop.f32.mrf.mxu0
    %v1955 = vadd.f32 %v1246, %v1954
    %1956 = vmatmul.bf16.gmra.mxu0 %v353
    %v1957 = vpop.f32.mrf.mxu0
    %v1958 = vadd.f32 %v1249, %v1957
    %v1959 = vpop.f32.mrf.mxu0
    %v1960 = vadd.f32 %v1251, %v1959
    %1961 = vmatmul.bf16.gmra.mxu0 %v355
    %v1962 = vpop.f32.mrf.mxu0
    %v1963 = vadd.f32 %v1254, %v1962
    %v1964 = vpop.f32.mrf.mxu0
    %v1965 = vadd.f32 %v1256, %v1964
    %1966 = vmatmul.bf16.gmra.mxu0 %v357
    %v1967 = vpop.f32.mrf.mxu0
    %v1968 = vadd.f32 %v1259, %v1967
    %v1969 = vpop.f32.mrf.mxu0
    %1970 = vdwg.mxu0
    %1971 = vmatpush.bf16.msra.mxu0 %v1535
    %1972 = vmatpush.bf16.msra.mxu0 %v1531
    %1973 = vmatpush.bf16.msra.mxu0 %v1527
    %1974 = vmatpush.bf16.msra.mxu0 %v1523
    %1975 = vmatpush.bf16.msra.mxu0 %v1519
    %1976 = vmatpush.bf16.msra.mxu0 %v1515
    %1977 = vmatpush.bf16.msra.mxu0 %v1511
    %1978 = vmatpush.bf16.msra.mxu0 %v1507
    %1979 = vmatmul.bf16.gmra.mxu0 %v342
    %v1980 = vpop.f32.mrf.mxu0
    %v1981 = vadd.f32 %v1928, %v1980
    %v1982 = vpop.f32.mrf.mxu0
    %v1983 = vadd.f32 %v1930, %v1982
    %1984 = vmatmul.bf16.gmra.mxu0 %v344
    %v1985 = vpop.f32.mrf.mxu0
    %v1986 = vadd.f32 %v1933, %v1985
    %v1987 = vpop.f32.mrf.mxu0
    %v1988 = vadd.f32 %v1935, %v1987
    %1989 = vmatmul.bf16.gmra.mxu0 %v346
    %v1990 = vpop.f32.mrf.mxu0
    %v1991 = vadd.f32 %v1938, %v1990
    %v1992 = vpop.f32.mrf.mxu0
    %v1993 = vadd.f32 %v1940, %v1992
    %1994 = vmatmul.bf16.gmra.mxu0 %v348
    %v1995 = vpop.f32.mrf.mxu0
    %v1996 = vadd.f32 %v1943, %v1995
    %v1997 = vpop.f32.mrf.mxu0
    %v1998 = vadd.f32 %v1945, %v1997
    %1999 = vmatmul.bf16.gmra.mxu0 %v350
    %v2000 = vpop.f32.mrf.mxu0
    %v2001 = vadd.f32 %v1948, %v2000
    %v2002 = vpop.f32.mrf.mxu0
    %v2003 = vadd.f32 %v1950, %v2002
    %2004 = vmatmul.bf16.gmra.mxu0 %v352
    %v2005 = vpop.f32.mrf.mxu0
    %v2006 = vadd.f32 %v1953, %v2005
    %v2007 = vpop.f32.mrf.mxu0
    %v2008 = vadd.f32 %v1955, %v2007
    %2009 = vmatmul.bf16.gmra.mxu0 %v354
    %v2010 = vpop.f32.mrf.mxu0
    %v2011 = vadd.f32 %v1958, %v2010
    %v2012 = vpop.f32.mrf.mxu0
    %v2013 = vadd.f32 %v1960, %v2012
    %2014 = vmatmul.bf16.gmra.mxu0 %v356
    %v2015 = vpop.f32.mrf.mxu0
    %v2016 = vadd.f32 %v1963, %v2015
    %v2017 = vpop.f32.mrf.mxu0
    %v2018 = vadd.f32 %v1965, %v2017
    %2019 = vmatmul.bf16.gmra.mxu0 %v358
    %v2020 = vpop.f32.mrf.mxu0
    %v2021 = vadd.f32 %v1968, %v2020
    %v2022 = vpop.f32.mrf.mxu0
    %2023 = vdwg.mxu0
    %v2024 = vmul.f32 %v1663, %v1663
    %v2025 = vmul.f32 %v1769, %v1769
    %v2026 = vmul.f32 %v1665, %v1665
    %v2027 = vmul.f32 %v1771, %v1771
    %v2028 = vmul.f32 %v1668, %v1668
    %v2029 = vmul.f32 %v1774, %v1774
    %v2030 = vmul.f32 %v1670, %v1670
    %v2031 = vmul.f32 %v1776, %v1776
    %v2032 = vmul.f32 %v1673, %v1673
    %v2033 = vmul.f32 %v1779, %v1779
    %v2034 = vmul.f32 %v1675, %v1675
    %v2035 = vmul.f32 %v1781, %v1781
    %v2036 = vmul.f32 %v1678, %v1678
    %v2037 = vmul.f32 %v1784, %v1784
    %v2038 = vmul.f32 %v1680, %v1680
    %v2039 = vmul.f32 %v1786, %v1786
    %v2040 = vmul.f32 %v1683, %v1683
    %v2041 = vmul.f32 %v1789, %v1789
    %v2042 = vmul.f32 %v1685, %v1685
    %v2043 = vmul.f32 %v1791, %v1791
    %v2044 = vmul.f32 %v1688, %v1688
    %v2045 = vmul.f32 %v1794, %v1794
    %v2046 = vmul.f32 %v1690, %v1690
    %v2047 = vmul.f32 %v1796, %v1796
    %v2048 = vmul.f32 %v1693, %v1693
    %v2049 = vmul.f32 %v1799, %v1799
    %v2050 = vmul.f32 %v1695, %v1695
    %v2051 = vmul.f32 %v1801, %v1801
    %v2052 = vmul.f32 %v1698, %v1698
    %v2053 = vmul.f32 %v1804, %v1804
    %v2054 = vmul.f32 %v1700, %v1700
    %v2055 = vmul.f32 %v1806, %v1806
    %v2056 = vmul.f32 %v1703, %v1703
    %v2057 = vmul.f32 %v1809, %v1809
    %v2058 = vmul.f32 %v1875, %v1875
    %v2059 = vmul.f32 %v1981, %v1981
    %v2060 = vmul.f32 %v1877, %v1877
    %v2061 = vmul.f32 %v1983, %v1983
    %v2062 = vmul.f32 %v1880, %v1880
    %v2063 = vmul.f32 %v1986, %v1986
    %v2064 = vmul.f32 %v1882, %v1882
    %v2065 = vmul.f32 %v1988, %v1988
    %v2066 = vmul.f32 %v1885, %v1885
    %v2067 = vmul.f32 %v1991, %v1991
    %v2068 = vmul.f32 %v1887, %v1887
    %v2069 = vmul.f32 %v1993, %v1993
    %v2070 = vmul.f32 %v1890, %v1890
    %v2071 = vmul.f32 %v1996, %v1996
    %v2072 = vmul.f32 %v1892, %v1892
    %v2073 = vmul.f32 %v1998, %v1998
    %v2074 = vmul.f32 %v1895, %v1895
    %v2075 = vmul.f32 %v2001, %v2001
    %v2076 = vmul.f32 %v1897, %v1897
    %v2077 = vmul.f32 %v2003, %v2003
    %v2078 = vmul.f32 %v1900, %v1900
    %v2079 = vmul.f32 %v2006, %v2006
    %v2080 = vmul.f32 %v1902, %v1902
    %v2081 = vmul.f32 %v2008, %v2008
    %v2082 = vmul.f32 %v1905, %v1905
    %v2083 = vmul.f32 %v2011, %v2011
    %v2084 = vmul.f32 %v1907, %v1907
    %v2085 = vmul.f32 %v2013, %v2013
    %v2086 = vmul.f32 %v1910, %v1910
    %v2087 = vmul.f32 %v2016, %v2016
    %v2088 = vmul.f32 %v1912, %v1912
    %v2089 = vmul.f32 %v2018, %v2018
    %v2090 = vmul.f32 %v1915, %v1915
    %v2091 = vmul.f32 %v2021, %v2021
    %v2092 = vadd.f32 %v2024, %v2058
    %v2093 = vadd.f32 %v2025, %v2059
    %v2094 = vadd.f32 %v2026, %v2060
    %v2095 = vadd.f32 %v2027, %v2061
    %v2096 = vadd.f32 %v2028, %v2062
    %v2097 = vadd.f32 %v2029, %v2063
    %v2098 = vadd.f32 %v2030, %v2064
    %v2099 = vadd.f32 %v2031, %v2065
    %v2100 = vadd.f32 %v2032, %v2066
    %v2101 = vadd.f32 %v2033, %v2067
    %v2102 = vadd.f32 %v2034, %v2068
    %v2103 = vadd.f32 %v2035, %v2069
    %v2104 = vadd.f32 %v2036, %v2070
    %v2105 = vadd.f32 %v2037, %v2071
    %v2106 = vadd.f32 %v2038, %v2072
    %v2107 = vadd.f32 %v2039, %v2073
    %v2108 = vadd.f32 %v2040, %v2074
    %v2109 = vadd.f32 %v2041, %v2075
    %v2110 = vadd.f32 %v2042, %v2076
    %v2111 = vadd.f32 %v2043, %v2077
    %v2112 = vadd.f32 %v2044, %v2078
    %v2113 = vadd.f32 %v2045, %v2079
    %v2114 = vadd.f32 %v2046, %v2080
    %v2115 = vadd.f32 %v2047, %v2081
    %v2116 = vadd.f32 %v2048, %v2082
    %v2117 = vadd.f32 %v2049, %v2083
    %v2118 = vadd.f32 %v2050, %v2084
    %v2119 = vadd.f32 %v2051, %v2085
    %v2120 = vadd.f32 %v2052, %v2086
    %v2121 = vadd.f32 %v2053, %v2087
    %v2122 = vadd.f32 %v2054, %v2088
    %v2123 = vadd.f32 %v2055, %v2089
    %v2124 = vadd.f32 %v2056, %v2090
    %v2125 = vadd.f32 %v2057, %v2091
    %v2126 = vpack.c.bf16 %v2094, %v2092
    %v2127 = vpack.c.bf16 %v2095, %v2093
    %v2128 = vpack.c.bf16 %v2098, %v2096
    %v2129 = vpack.c.bf16 %v2099, %v2097
    %v2130 = vpack.c.bf16 %v2102, %v2100
    %v2131 = vpack.c.bf16 %v2103, %v2101
    %v2132 = vpack.c.bf16 %v2106, %v2104
    %v2133 = vpack.c.bf16 %v2107, %v2105
    %v2134 = vpack.c.bf16 %v2110, %v2108
    %v2135 = vpack.c.bf16 %v2111, %v2109
    %v2136 = vpack.c.bf16 %v2114, %v2112
    %v2137 = vpack.c.bf16 %v2115, %v2113
    %v2138 = vpack.c.bf16 %v2118, %v2116
    %v2139 = vpack.c.bf16 %v2119, %v2117
    %v2140 = vpack.c.bf16 %v2122, %v2120
    %v2141 = vpack.c.bf16 %v2123, %v2121
    %v2142 = vpack.c.bf16 %v2124, %v2124
    %v2143 = vpack.c.bf16 %v2125, %v2125
    %v2144 = vld [vmem:[#allocation9] sm:$0xf]
    %v2145 = vld [vmem:[#allocation9 + $0x4] sm:$0xf]
    %v2146 = vld [vmem:[#allocation9 + $0x8] sm:$0xf]
    %v2147 = vld [vmem:[#allocation9 + $0xc] sm:$0xf]
    %v2148 = vld [vmem:[#allocation9 + $0x10] sm:$0xf]
    %v2149 = vld [vmem:[#allocation9 + $0x14] sm:$0xf]
    %v2150 = vld [vmem:[#allocation9 + $0x18] sm:$0xf]
    %v2151 = vld [vmem:[#allocation9 + $0x1c] sm:$0xf]
    %v2152 = vld [vmem:[#allocation9 + $0x20] sm:$0xf]
    %v2153 = vld [vmem:[#allocation9 + $0x24] sm:$0xf]
    %v2154 = vld [vmem:[#allocation9 + $0x28] sm:$0xf]
    %v2155 = vld [vmem:[#allocation9 + $0x2c] sm:$0xf]
    %v2156 = vld [vmem:[#allocation9 + $0x30] sm:$0xf]
    %v2157 = vld [vmem:[#allocation9 + $0x34] sm:$0xf]
    %v2158 = vld [vmem:[#allocation9 + $0x38] sm:$0xf]
    %v2159 = vld [vmem:[#allocation9 + $0x3c] sm:$0xf]
    %v2160 = vld [vmem:[#allocation9 + $0x40] sm:$0xf]
    %v2161 = vld [vmem:[#allocation9 + $0x44] sm:$0xf]
    %v2162 = vld [vmem:[#allocation9 + $0x48] sm:$0xf]
    %v2163 = vld [vmem:[#allocation9 + $0x4c] sm:$0xf]
    %v2164 = vld [vmem:[#allocation9 + $0x50] sm:$0xf]
    %v2165 = vld [vmem:[#allocation9 + $0x54] sm:$0xf]
    %v2166 = vld [vmem:[#allocation9 + $0x58] sm:$0xf]
    %v2167 = vld [vmem:[#allocation9 + $0x5c] sm:$0xf]
    %v2168 = vld [vmem:[#allocation9 + $0x60] sm:$0xf]
    %v2169 = vld [vmem:[#allocation9 + $0x64] sm:$0xf]
    %v2170 = vld [vmem:[#allocation9 + $0x68] sm:$0xf]
    %v2171 = vld [vmem:[#allocation9 + $0x6c] sm:$0xf]
    %v2172 = vld [vmem:[#allocation9 + $0x70] sm:$0xf]
    %v2173 = vld [vmem:[#allocation9 + $0x74] sm:$0xf]
    %v2174 = vld [vmem:[#allocation9 + $0x78] sm:$0xf]
    %v2175 = vld [vmem:[#allocation9 + $0x7c] sm:$0xf]
    %v2208 = vunpack.c.l.b16 %v2144
    %v2209 = vunpack.c.l.b16 %v2145
    %v2210 = vunpack.c.l.b16 %v2146
    %v2211 = vunpack.c.l.b16 %v2147
    %v2212 = vunpack.c.l.b16 %v2148
    %v2213 = vunpack.c.l.b16 %v2149
    %v2214 = vunpack.c.l.b16 %v2150
    %v2215 = vunpack.c.l.b16 %v2151
    %v2216 = vunpack.c.l.b16 %v2152
    %v2217 = vunpack.c.l.b16 %v2153
    %v2218 = vunpack.c.l.b16 %v2154
    %v2219 = vunpack.c.l.b16 %v2155
    %v2220 = vunpack.c.l.b16 %v2156
    %v2221 = vunpack.c.l.b16 %v2157
    %v2222 = vunpack.c.l.b16 %v2158
    %v2223 = vunpack.c.l.b16 %v2159
    %v2224 = vunpack.c.l.b16 %v2160
    %v2225 = vunpack.c.l.b16 %v2161
    %v2226 = vunpack.c.l.b16 %v2162
    %v2227 = vunpack.c.l.b16 %v2163
    %v2228 = vunpack.c.l.b16 %v2164
    %v2229 = vunpack.c.l.b16 %v2165
    %v2230 = vunpack.c.l.b16 %v2166
    %v2231 = vunpack.c.l.b16 %v2167
    %v2232 = vunpack.c.l.b16 %v2168
    %v2233 = vunpack.c.l.b16 %v2169
    %v2234 = vunpack.c.l.b16 %v2170
    %v2235 = vunpack.c.l.b16 %v2171
    %v2236 = vunpack.c.l.b16 %v2172
    %v2237 = vunpack.c.l.b16 %v2173
    %v2238 = vunpack.c.l.b16 %v2174
    %v2239 = vunpack.c.l.b16 %v2175
    %v2240 = vpack.c.b16 %v2209, %v2208
    %v2241 = vpack.c.b16 %v2211, %v2210
    %v2242 = vpack.c.b16 %v2213, %v2212
    %v2243 = vpack.c.b16 %v2215, %v2214
    %v2244 = vpack.c.b16 %v2217, %v2216
    %v2245 = vpack.c.b16 %v2219, %v2218
    %v2246 = vpack.c.b16 %v2221, %v2220
    %v2247 = vpack.c.b16 %v2223, %v2222
    %v2248 = vpack.c.b16 %v2225, %v2224
    %v2249 = vpack.c.b16 %v2227, %v2226
    %v2250 = vpack.c.b16 %v2229, %v2228
    %v2251 = vpack.c.b16 %v2231, %v2230
    %v2252 = vpack.c.b16 %v2233, %v2232
    %v2253 = vpack.c.b16 %v2235, %v2234
    %v2254 = vpack.c.b16 %v2237, %v2236
    %v2255 = vpack.c.b16 %v2239, %v2238
    %2272 = vmatpush.bf16.msra.mxu0 %v2247
    %2273 = vmatpush.bf16.msra.mxu0 %v2246
    %2274 = vmatpush.bf16.msra.mxu0 %v2245
    %2275 = vmatpush.bf16.msra.mxu0 %v2244
    %2276 = vmatpush.bf16.msra.mxu0 %v2243
    %2277 = vmatpush.bf16.msra.mxu0 %v2242
    %2278 = vmatpush.bf16.msra.mxu0 %v2241
    %2279 = vmatpush.bf16.msra.mxu0 %v2240
    %2280 = vmatmul.bf16.gmra.mxu0 %v2126
    %v2281 = vpop.f32.mrf.mxu0
    %v2282 = vadd.f32 0.0, %v2281
    %v2283 = vpop.f32.mrf.mxu0
    %v2284 = vadd.f32 0.0, %v2283
    %2285 = vmatmul.bf16.gmra.mxu0 %v2128
    %v2286 = vpop.f32.mrf.mxu0
    %v2287 = vadd.f32 0.0, %v2286
    %v2288 = vpop.f32.mrf.mxu0
    %v2289 = vadd.f32 0.0, %v2288
    %2290 = vmatmul.bf16.gmra.mxu0 %v2130
    %v2291 = vpop.f32.mrf.mxu0
    %v2292 = vadd.f32 0.0, %v2291
    %v2293 = vpop.f32.mrf.mxu0
    %v2294 = vadd.f32 0.0, %v2293
    %2295 = vmatmul.bf16.gmra.mxu0 %v2132
    %v2296 = vpop.f32.mrf.mxu0
    %v2297 = vadd.f32 0.0, %v2296
    %v2298 = vpop.f32.mrf.mxu0
    %v2299 = vadd.f32 0.0, %v2298
    %2300 = vmatmul.bf16.gmra.mxu0 %v2134
    %v2301 = vpop.f32.mrf.mxu0
    %v2302 = vadd.f32 0.0, %v2301
    %v2303 = vpop.f32.mrf.mxu0
    %v2304 = vadd.f32 0.0, %v2303
    %2305 = vmatmul.bf16.gmra.mxu0 %v2136
    %v2306 = vpop.f32.mrf.mxu0
    %v2307 = vadd.f32 0.0, %v2306
    %v2308 = vpop.f32.mrf.mxu0
    %v2309 = vadd.f32 0.0, %v2308
    %2310 = vmatmul.bf16.gmra.mxu0 %v2138
    %v2311 = vpop.f32.mrf.mxu0
    %v2312 = vadd.f32 0.0, %v2311
    %v2313 = vpop.f32.mrf.mxu0
    %v2314 = vadd.f32 0.0, %v2313
    %2315 = vmatmul.bf16.gmra.mxu0 %v2140
    %v2316 = vpop.f32.mrf.mxu0
    %v2317 = vadd.f32 0.0, %v2316
    %v2318 = vpop.f32.mrf.mxu0
    %v2319 = vadd.f32 0.0, %v2318
    %2320 = vmatmul.bf16.gmra.mxu0 %v2142
    %v2321 = vpop.f32.mrf.mxu0
    %v2322 = vadd.f32 0.0, %v2321
    %v2323 = vpop.f32.mrf.mxu0
    %2324 = vdwg.mxu0
    %2325 = vmatpush.bf16.msra.mxu0 %v2255
    %2326 = vmatpush.bf16.msra.mxu0 %v2254
    %2327 = vmatpush.bf16.msra.mxu0 %v2253
    %2328 = vmatpush.bf16.msra.mxu0 %v2252
    %2329 = vmatpush.bf16.msra.mxu0 %v2251
    %2330 = vmatpush.bf16.msra.mxu0 %v2250
    %2331 = vmatpush.bf16.msra.mxu0 %v2249
    %2332 = vmatpush.bf16.msra.mxu0 %v2248
    %2333 = vmatmul.bf16.gmra.mxu0 %v2127
    %v2334 = vpop.f32.mrf.mxu0
    %v2335 = vadd.f32 %v2282, %v2334
    %v2336 = vpop.f32.mrf.mxu0
    %v2337 = vadd.f32 %v2284, %v2336
    %2338 = vmatmul.bf16.gmra.mxu0 %v2129
    %v2339 = vpop.f32.mrf.mxu0
    %v2340 = vadd.f32 %v2287, %v2339
    %v2341 = vpop.f32.mrf.mxu0
    %v2342 = vadd.f32 %v2289, %v2341
    %2343 = vmatmul.bf16.gmra.mxu0 %v2131
    %v2344 = vpop.f32.mrf.mxu0
    %v2345 = vadd.f32 %v2292, %v2344
    %v2346 = vpop.f32.mrf.mxu0
    %v2347 = vadd.f32 %v2294, %v2346
    %2348 = vmatmul.bf16.gmra.mxu0 %v2133
    %v2349 = vpop.f32.mrf.mxu0
    %v2350 = vadd.f32 %v2297, %v2349
    %v2351 = vpop.f32.mrf.mxu0
    %v2352 = vadd.f32 %v2299, %v2351
    %2353 = vmatmul.bf16.gmra.mxu0 %v2135
    %v2354 = vpop.f32.mrf.mxu0
    %v2355 = vadd.f32 %v2302, %v2354
    %v2356 = vpop.f32.mrf.mxu0
    %v2357 = vadd.f32 %v2304, %v2356
    %2358 = vmatmul.bf16.gmra.mxu0 %v2137
    %v2359 = vpop.f32.mrf.mxu0
    %v2360 = vadd.f32 %v2307, %v2359
    %v2361 = vpop.f32.mrf.mxu0
    %v2362 = vadd.f32 %v2309, %v2361
    %2363 = vmatmul.bf16.gmra.mxu0 %v2139
    %v2364 = vpop.f32.mrf.mxu0
    %v2365 = vadd.f32 %v2312, %v2364
    %v2366 = vpop.f32.mrf.mxu0
    %v2367 = vadd.f32 %v2314, %v2366
    %2368 = vmatmul.bf16.gmra.mxu0 %v2141
    %v2369 = vpop.f32.mrf.mxu0
    %v2370 = vadd.f32 %v2317, %v2369
    %v2371 = vpop.f32.mrf.mxu0
    %v2372 = vadd.f32 %v2319, %v2371
    %2373 = vmatmul.bf16.gmra.mxu0 %v2143
    %v2374 = vpop.f32.mrf.mxu0
    %v2375 = vadd.f32 %v2322, %v2374
    %v2376 = vpop.f32.mrf.mxu0
    %2377 = vdwg.mxu0
    %v2378 = vadd.f32 %v2335, 1e-06
    %v2379 = vadd.f32 %v2337, 1e-06
    %v2380 = vadd.f32 %v2340, 1e-06
    %v2381 = vadd.f32 %v2342, 1e-06
    %v2382 = vadd.f32 %v2345, 1e-06
    %v2383 = vadd.f32 %v2347, 1e-06
    %v2384 = vadd.f32 %v2350, 1e-06
    %v2385 = vadd.f32 %v2352, 1e-06
    %v2386 = vadd.f32 %v2355, 1e-06
    %v2387 = vadd.f32 %v2357, 1e-06
    %v2388 = vadd.f32 %v2360, 1e-06
    %v2389 = vadd.f32 %v2362, 1e-06
    %v2390 = vadd.f32 %v2365, 1e-06
    %v2391 = vadd.f32 %v2367, 1e-06
    %v2392 = vadd.f32 %v2370, 1e-06
    %v2393 = vadd.f32 %v2372, 1e-06
    %v2394 = vlog2.pop %v2378
    %v2395 = vmul.f32 %v2394, 0.6931472
    %v2396 = vlog2.pop %v2379
    %v2397 = vmul.f32 %v2396, 0.6931472
    %v2398 = vlog2.pop %v2380
    %v2399 = vmul.f32 %v2398, 0.6931472
    %v2400 = vlog2.pop %v2381
    %v2401 = vmul.f32 %v2400, 0.6931472
    %v2402 = vlog2.pop %v2382
    %v2403 = vmul.f32 %v2402, 0.6931472
    %v2404 = vlog2.pop %v2383
    %v2405 = vmul.f32 %v2404, 0.6931472
    %v2406 = vlog2.pop %v2384
    %v2407 = vmul.f32 %v2406, 0.6931472
    %v2408 = vlog2.pop %v2385
    %v2409 = vmul.f32 %v2408, 0.6931472
    %v2410 = vlog2.pop %v2386
    %v2411 = vmul.f32 %v2410, 0.6931472
    %v2412 = vlog2.pop %v2387
    %v2413 = vmul.f32 %v2412, 0.6931472
    %v2414 = vlog2.pop %v2388
    %v2415 = vmul.f32 %v2414, 0.6931472
    %v2416 = vlog2.pop %v2389
    %v2417 = vmul.f32 %v2416, 0.6931472
    %v2418 = vlog2.pop %v2390
    %v2419 = vmul.f32 %v2418, 0.6931472
    %v2420 = vlog2.pop %v2391
    %v2421 = vmul.f32 %v2420, 0.6931472
    %v2422 = vlog2.pop %v2392
    %v2423 = vmul.f32 %v2422, 0.6931472
    %v2424 = vlog2.pop %v2393
    %v2425 = vmul.f32 %v2424, 0.6931472
    %v2426 = vrcp.pop 0.6931472
    %v2427 = vmul.f32 0.6931472, %v2426
    %v2428 = vsub.f32 1.0, %v2427
    %v2429 = vmul.f32 %v2426, %v2428
    %v2430 = vadd.f32 %v2426, %v2429
    %vm2431 = vweird.f32 %v2426
    %v2432 = vsel %vm2431, %v2426, %v2430
    %v2433 = vmul.f32 %v2395, %v2432
    %v2434 = vmul.f32 %v2397, %v2432
    %v2435 = vmul.f32 %v2399, %v2432
    %v2436 = vmul.f32 %v2401, %v2432
    %v2437 = vmul.f32 %v2403, %v2432
    %v2438 = vmul.f32 %v2405, %v2432
    %v2439 = vmul.f32 %v2407, %v2432
    %v2440 = vmul.f32 %v2409, %v2432
    %v2441 = vmul.f32 %v2411, %v2432
    %v2442 = vmul.f32 %v2413, %v2432
    %v2443 = vmul.f32 %v2415, %v2432
    %v2444 = vmul.f32 %v2417, %v2432
    %v2445 = vmul.f32 %v2419, %v2432
    %v2446 = vmul.f32 %v2421, %v2432
    %v2447 = vmul.f32 %v2423, %v2432
    %v2448 = vmul.f32 %v2425, %v2432
    %2449 = vst [vmem:[#allocation2] sm:$0xff] %v2433
    %2450 = vst [vmem:[#allocation2 + $0x8] sm:$0xff] %v2434
    %2451 = vst [vmem:[#allocation2 + $0x10] sm:$0xff] %v2435
    %2452 = vst [vmem:[#allocation2 + $0x18] sm:$0xff] %v2436
    %2453 = vst [vmem:[#allocation2 + $0x20] sm:$0xff] %v2437
    %2454 = vst [vmem:[#allocation2 + $0x28] sm:$0xff] %v2438
    %2455 = vst [vmem:[#allocation2 + $0x30] sm:$0xff] %v2439
    %2456 = vst [vmem:[#allocation2 + $0x38] sm:$0xff] %v2440
    %2457 = vst [vmem:[#allocation2 + $0x40] sm:$0xff] %v2441
    %2458 = vst [vmem:[#allocation2 + $0x48] sm:$0xff] %v2442
    %2459 = vst [vmem:[#allocation2 + $0x50] sm:$0xff] %v2443
    %2460 = vst [vmem:[#allocation2 + $0x58] sm:$0xff] %v2444
    %2461 = vst [vmem:[#allocation2 + $0x60] sm:$0xff] %v2445
    %2462 = vst [vmem:[#allocation2 + $0x68] sm:$0xff] %v2446
    %2463 = vst [vmem:[#allocation2 + $0x70] sm:$0xff] %v2447
    %2464 = vst [vmem:[#allocation2 + $0x78] sm:$0xff] %v2448
    %v2465 = vmax.f32 %v2335, 1e-10
    %v2466 = vmax.f32 %v2337, 1e-10
    %v2467 = vmax.f32 %v2340, 1e-10
    %v2468 = vmax.f32 %v2342, 1e-10
    %v2469 = vmax.f32 %v2345, 1e-10
    %v2470 = vmax.f32 %v2347, 1e-10
    %v2471 = vmax.f32 %v2350, 1e-10
    %v2472 = vmax.f32 %v2352, 1e-10
    %v2473 = vmax.f32 %v2355, 1e-10
    %v2474 = vmax.f32 %v2357, 1e-10
    %v2475 = vmax.f32 %v2360, 1e-10
    %v2476 = vmax.f32 %v2362, 1e-10
    %v2477 = vmax.f32 %v2365, 1e-10
    %v2478 = vmax.f32 %v2367, 1e-10
    %v2479 = vmax.f32 %v2370, 1e-10
    %v2480 = vmax.f32 %v2372, 1e-10
    %v2481 = vmax.f32 %v2375, 1e-10
    %v2482 = vlog2.pop %v2465
    %v2483 = vmul.f32 %v2482, 0.6931472
    %v2484 = vlog2.pop %v2466
    %v2485 = vmul.f32 %v2484, 0.6931472
    %v2486 = vlog2.pop %v2467
    %v2487 = vmul.f32 %v2486, 0.6931472
    %v2488 = vlog2.pop %v2468
    %v2489 = vmul.f32 %v2488, 0.6931472
    %v2490 = vlog2.pop %v2469
    %v2491 = vmul.f32 %v2490, 0.6931472
    %v2492 = vlog2.pop %v2470
    %v2493 = vmul.f32 %v2492, 0.6931472
    %v2494 = vlog2.pop %v2471
    %v2495 = vmul.f32 %v2494, 0.6931472
    %v2496 = vlog2.pop %v2472
    %v2497 = vmul.f32 %v2496, 0.6931472
    %v2498 = vlog2.pop %v2473
    %v2499 = vmul.f32 %v2498, 0.6931472
    %v2500 = vlog2.pop %v2474
    %v2501 = vmul.f32 %v2500, 0.6931472
    %v2502 = vlog2.pop %v2475
    %v2503 = vmul.f32 %v2502, 0.6931472
    %v2504 = vlog2.pop %v2476
    %v2505 = vmul.f32 %v2504, 0.6931472
    %v2506 = vlog2.pop %v2477
    %v2507 = vmul.f32 %v2506, 0.6931472
    %v2508 = vlog2.pop %v2478
    %v2509 = vmul.f32 %v2508, 0.6931472
    %v2510 = vlog2.pop %v2479
    %v2511 = vmul.f32 %v2510, 0.6931472
    %v2512 = vlog2.pop %v2480
    %v2513 = vmul.f32 %v2512, 0.6931472
    %v2514 = vlog2.pop %v2481
    %v2515 = vmul.f32 %v2514, 0.6931472
    %v2516 = vmul.f32 %v2483, 0.4342945
    %v2517 = vmul.f32 %v2485, 0.4342945
    %v2518 = vmul.f32 %v2487, 0.4342945
    %v2519 = vmul.f32 %v2489, 0.4342945
    %v2520 = vmul.f32 %v2491, 0.4342945
    %v2521 = vmul.f32 %v2493, 0.4342945
    %v2522 = vmul.f32 %v2495, 0.4342945
    %v2523 = vmul.f32 %v2497, 0.4342945
    %v2524 = vmul.f32 %v2499, 0.4342945
    %v2525 = vmul.f32 %v2501, 0.4342945
    %v2526 = vmul.f32 %v2503, 0.4342945
    %v2527 = vmul.f32 %v2505, 0.4342945
    %v2528 = vmul.f32 %v2507, 0.4342945
    %v2529 = vmul.f32 %v2509, 0.4342945
    %v2530 = vmul.f32 %v2511, 0.4342945
    %v2531 = vmul.f32 %v2513, 0.4342945
    %v2532 = vmul.f32 %v2515, 0.4342945
    %v2533 = vmul.f32 %v2516, 10.0
    %v2534 = vmul.f32 %v2517, 10.0
    %v2535 = vmul.f32 %v2518, 10.0
    %v2536 = vmul.f32 %v2519, 10.0
    %v2537 = vmul.f32 %v2520, 10.0
    %v2538 = vmul.f32 %v2521, 10.0
    %v2539 = vmul.f32 %v2522, 10.0
    %v2540 = vmul.f32 %v2523, 10.0
    %v2541 = vmul.f32 %v2524, 10.0
    %v2542 = vmul.f32 %v2525, 10.0
    %v2543 = vmul.f32 %v2526, 10.0
    %v2544 = vmul.f32 %v2527, 10.0
    %v2545 = vmul.f32 %v2528, 10.0
    %v2546 = vmul.f32 %v2529, 10.0
    %v2547 = vmul.f32 %v2530, 10.0
    %v2548 = vmul.f32 %v2531, 10.0
    %v2549 = vmul.f32 %v2532, 10.0
    %v2550 = vmax.f32 %v2533, %v2537
    %v2551 = vmax.f32 %v2534, %v2538
    %v2552 = vmax.f32 %v2535, %v2539
    %v2553 = vmax.f32 %v2536, %v2540
    %v2554 = vmax.f32 %v2550, %v2541
    %v2555 = vmax.f32 %v2551, %v2542
    %v2556 = vmax.f32 %v2552, %v2543
    %v2557 = vmax.f32 %v2553, %v2544
    %v2558 = vmax.f32 %v2554, %v2545
    %v2559 = vmax.f32 %v2555, %v2546
    %v2560 = vmax.f32 %v2556, %v2547
    %v2561 = vmax.f32 %v2557, %v2548
    %vm2562 = vcmask 1040384
    %v2563 = vsel %vm2562, %v2549, -inf
    %v2564 = vmax.f32 %v2558, %v2563
    %v2565 = vmax.f32 %v2564, %v2559
    %v2566 = vmax.f32 %v2560, %v2561
    %v2567 = vmax.f32 %v2565, %v2566
    %2568 = vmax.xlane.f32.xlu0 %v2567
    %v2569 = vpop.xlane.xlu0 %2568
    %v2570 = vrot.slane %v2569, 4
    %v2571 = vmax.f32 %v2569, %v2570
    %v2572 = vrot.slane %v2571, 2
    %v2573 = vmax.f32 %v2571, %v2572
    %v2574 = vrot.slane %v2573, 1
    %v2575 = vmax.f32 %v2573, %v2574
    %s2576 = vtos %v2575
    %s2577 = ssub.f32 %s2576, 80.0
    %v2578 = vstv %s2577
    %v2579 = vmax.f32 %v2533, %v2578
    %v2580 = vmax.f32 %v2534, %v2578
    %v2581 = vmax.f32 %v2535, %v2578
    %v2582 = vmax.f32 %v2536, %v2578
    %v2583 = vmax.f32 %v2537, %v2578
    %v2584 = vmax.f32 %v2538, %v2578
    %v2585 = vmax.f32 %v2539, %v2578
    %v2586 = vmax.f32 %v2540, %v2578
    %v2587 = vmax.f32 %v2541, %v2578
    %v2588 = vmax.f32 %v2542, %v2578
    %v2589 = vmax.f32 %v2543, %v2578
    %v2590 = vmax.f32 %v2544, %v2578
    %v2591 = vmax.f32 %v2545, %v2578
    %v2592 = vmax.f32 %v2546, %v2578
    %v2593 = vmax.f32 %v2547, %v2578
    %v2594 = vmax.f32 %v2548, %v2578
    %v2595 = vmax.f32 %v2549, %v2578
    %v2596 = vpack.c.bf16 %v2580, %v2579
    %v2597 = vpack.c.bf16 %v2582, %v2581
    %v2598 = vpack.c.bf16 %v2584, %v2583
    %v2599 = vpack.c.bf16 %v2586, %v2585
    %v2600 = vpack.c.bf16 %v2588, %v2587
    %v2601 = vpack.c.bf16 %v2590, %v2589
    %v2602 = vpack.c.bf16 %v2592, %v2591
    %v2603 = vpack.c.bf16 %v2594, %v2593
    %v2604 = vpack.c.bf16 %v2595, %v2595
    %v2605 = vld [vmem:[#allocation11] sm:$0xf]
    %v2606 = vld [vmem:[#allocation11 + $0x4] sm:$0xf]
    %v2607 = vld [vmem:[#allocation11 + $0x8] sm:$0xf]
    %v2608 = vld [vmem:[#allocation11 + $0xc] sm:$0xf]
    %v2609 = vld [vmem:[#allocation11 + $0x10] sm:$0xf]
    %v2610 = vld [vmem:[#allocation11 + $0x14] sm:$0xf]
    %v2611 = vld [vmem:[#allocation11 + $0x18] sm:$0xf]
    %v2612 = vld [vmem:[#allocation11 + $0x1c] sm:$0xf]
    %v2613 = vld [vmem:[#allocation11 + $0x20] sm:$0xf]
    %v2614 = vld [vmem:[#allocation11 + $0x24] sm:$0xf]
    %v2615 = vld [vmem:[#allocation11 + $0x28] sm:$0xf]
    %v2616 = vld [vmem:[#allocation11 + $0x2c] sm:$0xf]
    %v2617 = vld [vmem:[#allocation11 + $0x30] sm:$0xf]
    %v2618 = vld [vmem:[#allocation11 + $0x34] sm:$0xf]
    %v2619 = vld [vmem:[#allocation11 + $0x38] sm:$0xf]
    %v2620 = vld [vmem:[#allocation11 + $0x3c] sm:$0xf]
    %v2621 = vld [vmem:[%s5] sm:$0x1]
    %v2623 = vperm.slane %v2621, 0
    %v2641 = vunpack.c.l.b16 %v2605
    %v2642 = vunpack.c.l.b16 %v2606
    %v2643 = vunpack.c.l.b16 %v2607
    %v2644 = vunpack.c.l.b16 %v2608
    %v2645 = vunpack.c.l.b16 %v2609
    %v2646 = vunpack.c.l.b16 %v2610
    %v2647 = vunpack.c.l.b16 %v2611
    %v2648 = vunpack.c.l.b16 %v2612
    %v2649 = vunpack.c.l.b16 %v2613
    %v2650 = vunpack.c.l.b16 %v2614
    %v2651 = vunpack.c.l.b16 %v2615
    %v2652 = vunpack.c.l.b16 %v2616
    %v2653 = vunpack.c.l.b16 %v2617
    %v2654 = vunpack.c.l.b16 %v2618
    %v2655 = vunpack.c.l.b16 %v2619
    %v2656 = vunpack.c.l.b16 %v2620
    %v2657 = vpack.c.b16 %v2642, %v2641
    %v2658 = vpack.c.b16 %v2644, %v2643
    %v2659 = vpack.c.b16 %v2646, %v2645
    %v2660 = vpack.c.b16 %v2648, %v2647
    %v2661 = vpack.c.b16 %v2650, %v2649
    %v2662 = vpack.c.b16 %v2652, %v2651
    %v2663 = vpack.c.b16 %v2654, %v2653
    %v2664 = vpack.c.b16 %v2656, %v2655
    %2673 = vmatpush.bf16.msra.mxu0 %v2664
    %2674 = vmatpush.bf16.msra.mxu0 %v2663
    %2675 = vmatpush.bf16.msra.mxu0 %v2662
    %2676 = vmatpush.bf16.msra.mxu0 %v2661
    %2677 = vmatpush.bf16.msra.mxu0 %v2660
    %2678 = vmatpush.bf16.msra.mxu0 %v2659
    %2679 = vmatpush.bf16.msra.mxu0 %v2658
    %2680 = vmatpush.bf16.msra.mxu0 %v2657
    %2681 = vmatmul.bf16.gmra.mxu0 %v2596
    %v2682 = vpop.f32.mrf.mxu0
    %v2683 = vadd.f32 %v2623, %v2682
    %v2684 = vpop.f32.mrf.mxu0
    %v2685 = vadd.f32 %v2623, %v2684
    %2686 = vmatmul.bf16.gmra.mxu0 %v2597
    %v2687 = vpop.f32.mrf.mxu0
    %v2688 = vadd.f32 %v2623, %v2687
    %v2689 = vpop.f32.mrf.mxu0
    %v2690 = vadd.f32 %v2623, %v2689
    %2691 = vmatmul.bf16.gmra.mxu0 %v2598
    %v2692 = vpop.f32.mrf.mxu0
    %v2693 = vadd.f32 %v2623, %v2692
    %v2694 = vpop.f32.mrf.mxu0
    %v2695 = vadd.f32 %v2623, %v2694
    %2696 = vmatmul.bf16.gmra.mxu0 %v2599
    %v2697 = vpop.f32.mrf.mxu0
    %v2698 = vadd.f32 %v2623, %v2697
    %v2699 = vpop.f32.mrf.mxu0
    %v2700 = vadd.f32 %v2623, %v2699
    %2701 = vmatmul.bf16.gmra.mxu0 %v2600
    %v2702 = vpop.f32.mrf.mxu0
    %v2703 = vadd.f32 %v2623, %v2702
    %v2704 = vpop.f32.mrf.mxu0
    %v2705 = vadd.f32 %v2623, %v2704
    %2706 = vmatmul.bf16.gmra.mxu0 %v2601
    %v2707 = vpop.f32.mrf.mxu0
    %v2708 = vadd.f32 %v2623, %v2707
    %v2709 = vpop.f32.mrf.mxu0
    %v2710 = vadd.f32 %v2623, %v2709
    %2711 = vmatmul.bf16.gmra.mxu0 %v2602
    %v2712 = vpop.f32.mrf.mxu0
    %v2713 = vadd.f32 %v2623, %v2712
    %v2714 = vpop.f32.mrf.mxu0
    %v2715 = vadd.f32 %v2623, %v2714
    %2716 = vmatmul.bf16.gmra.mxu0 %v2603
    %v2717 = vpop.f32.mrf.mxu0
    %v2718 = vadd.f32 %v2623, %v2717
    %v2719 = vpop.f32.mrf.mxu0
    %v2720 = vadd.f32 %v2623, %v2719
    %2721 = vmatmul.bf16.gmra.mxu0 %v2604
    %v2722 = vpop.f32.mrf.mxu0
    %v2723 = vpop.f32.mrf.mxu0
    %2724 = vdwg.mxu0
    %v2725 = vlaneseq
    %v2726 = vand.u32 %v2725, 127
    %vm2727 = vcmp.lt.s32.totalorder %v2726, 16
    %v2728 = vsel %vm2727, 0.0625, 0.0
    %2729 = vmatpush.xpose.msra.mxu0 %v2720
    %2730 = vmatpush.xpose.msra.mxu0 %v2718
    %2731 = vmatpush.xpose.msra.mxu0 %v2715
    %2732 = vmatpush.xpose.msra.mxu0 %v2713
    %2733 = vmatpush.xpose.msra.mxu0 %v2710
    %2734 = vmatpush.xpose.msra.mxu0 %v2708
    %2735 = vmatpush.xpose.msra.mxu0 %v2705
    %2736 = vmatpush.xpose.msra.mxu0 %v2703
    %2737 = vmatpush.xpose.msra.mxu0 %v2700
    %2738 = vmatpush.xpose.msra.mxu0 %v2698
    %2739 = vmatpush.xpose.msra.mxu0 %v2695
    %2740 = vmatpush.xpose.msra.mxu0 %v2693
    %2741 = vmatpush.xpose.msra.mxu0 %v2690
    %2742 = vmatpush.xpose.msra.mxu0 %v2688
    %2743 = vmatpush.xpose.msra.mxu0 %v2685
    %2744 = vmatpush.xpose.msra.mxu0 %v2683
    %2745 = vmatmul.f32.gmra.mxu0 %v2728
    %v2746 = vpop.f32.mrf.mxu0
    %v2747 = vadd.f32 0.0, %v2746
    %2748 = vdwg.mxu0
    %2749 = vmatpush.xpose.msra.mxu0 %v2448
    %2750 = vmatpush.xpose.msra.mxu0 %v2447
    %2751 = vmatpush.xpose.msra.mxu0 %v2446
    %2752 = vmatpush.xpose.msra.mxu0 %v2445
    %2753 = vmatpush.xpose.msra.mxu0 %v2444
    %2754 = vmatpush.xpose.msra.mxu0 %v2443
    %2755 = vmatpush.xpose.msra.mxu0 %v2442
    %2756 = vmatpush.xpose.msra.mxu0 %v2441
    %2757 = vmatpush.xpose.msra.mxu0 %v2440
    %2758 = vmatpush.xpose.msra.mxu0 %v2439
    %2759 = vmatpush.xpose.msra.mxu0 %v2438
    %2760 = vmatpush.xpose.msra.mxu0 %v2437
    %2761 = vmatpush.xpose.msra.mxu0 %v2436
    %2762 = vmatpush.xpose.msra.mxu0 %v2435
    %2763 = vmatpush.xpose.msra.mxu0 %v2434
    %2764 = vmatpush.xpose.msra.mxu0 %v2433
    %2765 = vmatmul.f32.gmra.mxu0 %v2728
    %v2766 = vpop.f32.mrf.mxu0
    %v2767 = vadd.f32 0.0, %v2766
    %2768 = vdwg.mxu0
    %v2769 = vld [vmem:[#allocation2] ss:$8 sm:$0xf]
    %v2770 = vld [vmem:[#allocation2] ss:$8 sm:$0xf0]
    %v2771 = vor.u32 %v2769, %v2770
    %s2772 = scalar_lea.vmem [#allocation2], 64
    %v2773 = vld [vmem:[%s2772] ss:$8 sm:$0xf]
    %v2774 = vld [vmem:[%s2772] ss:$8 sm:$0xf0]
    %v2775 = vor.u32 %v2773, %v2774
    %v2776 = vpack.c.bf16 %v2775, %v2771
    %v2777 = vld [vmem:[#allocation12] sm:$0xf]
    %v2778 = vld [vmem:[#allocation12 + $0x4] sm:$0xf]
    %v2779 = vld [vmem:[#allocation12 + $0x8] sm:$0xf]
    %v2780 = vld [vmem:[#allocation12 + $0xc] sm:$0xf]
    %v2781 = vld [vmem:[#allocation12 + $0x10] sm:$0xf]
    %v2782 = vld [vmem:[#allocation12 + $0x14] sm:$0xf]
    %v2783 = vld [vmem:[#allocation12 + $0x18] sm:$0xf]
    %v2784 = vld [vmem:[#allocation12 + $0x1c] sm:$0xf]
    %v2785 = vld [vmem:[#allocation12 + $0x20] sm:$0xf]
    %v2786 = vld [vmem:[#allocation12 + $0x24] sm:$0xf]
    %v2787 = vld [vmem:[#allocation12 + $0x28] sm:$0xf]
    %v2788 = vld [vmem:[#allocation12 + $0x2c] sm:$0xf]
    %v2789 = vld [vmem:[#allocation12 + $0x30] sm:$0xf]
    %v2790 = vld [vmem:[#allocation12 + $0x34] sm:$0xf]
    %v2791 = vld [vmem:[#allocation12 + $0x38] sm:$0xf]
    %v2792 = vld [vmem:[#allocation12 + $0x3c] sm:$0xf]
    %s2793 = scalar_lea.vmem [#allocation2], 1
    %v2794 = vld [vmem:[%s2793] ss:$8 sm:$0xf]
    %v2795 = vld [vmem:[%s2793] ss:$8 sm:$0xf0]
    %v2796 = vor.u32 %v2794, %v2795
    %s2797 = scalar_lea.vmem [#allocation2], 65
    %v2798 = vld [vmem:[%s2797] ss:$8 sm:$0xf]
    %v2799 = vld [vmem:[%s2797] ss:$8 sm:$0xf0]
    %v2800 = vor.u32 %v2798, %v2799
    %v2801 = vpack.c.bf16 %v2800, %v2796
    %s2802 = scalar_lea.vmem [#allocation12], 64
    %v2803 = vld [vmem:[%s2802] sm:$0xf]
    %v2804 = vld [vmem:[%s2802 + $0x4] sm:$0xf]
    %v2805 = vld [vmem:[%s2802 + $0x8] sm:$0xf]
    %v2806 = vld [vmem:[%s2802 + $0xc] sm:$0xf]
    %v2807 = vld [vmem:[%s2802 + $0x10] sm:$0xf]
    %v2808 = vld [vmem:[%s2802 + $0x14] sm:$0xf]
    %v2809 = vld [vmem:[%s2802 + $0x18] sm:$0xf]
    %v2810 = vld [vmem:[%s2802 + $0x1c] sm:$0xf]
    %v2811 = vld [vmem:[%s2802 + $0x20] sm:$0xf]
    %v2812 = vld [vmem:[%s2802 + $0x24] sm:$0xf]
    %v2813 = vld [vmem:[%s2802 + $0x28] sm:$0xf]
    %v2814 = vld [vmem:[%s2802 + $0x2c] sm:$0xf]
    %v2815 = vld [vmem:[%s2802 + $0x30] sm:$0xf]
    %v2816 = vld [vmem:[%s2802 + $0x34] sm:$0xf]
    %v2817 = vld [vmem:[%s2802 + $0x38] sm:$0xf]
    %v2818 = vld [vmem:[%s2802 + $0x3c] sm:$0xf]
    %v2835 = vunpack.c.l.b16 %v2803
    %v2836 = vunpack.c.l.b16 %v2804
    %v2837 = vunpack.c.l.b16 %v2805
    %v2838 = vunpack.c.l.b16 %v2806
    %v2839 = vunpack.c.l.b16 %v2807
    %v2840 = vunpack.c.l.b16 %v2808
    %v2841 = vunpack.c.l.b16 %v2809
    %v2842 = vunpack.c.l.b16 %v2810
    %v2843 = vunpack.c.l.b16 %v2811
    %v2844 = vunpack.c.l.b16 %v2812
    %v2845 = vunpack.c.l.b16 %v2813
    %v2846 = vunpack.c.l.b16 %v2814
    %v2847 = vunpack.c.l.b16 %v2815
    %v2848 = vunpack.c.l.b16 %v2816
    %v2849 = vunpack.c.l.b16 %v2817
    %v2850 = vunpack.c.l.b16 %v2818
    %v2851 = vpack.c.b16 %v2836, %v2835
    %v2852 = vpack.c.b16 %v2838, %v2837
    %v2853 = vpack.c.b16 %v2840, %v2839
    %v2854 = vpack.c.b16 %v2842, %v2841
    %v2855 = vpack.c.b16 %v2844, %v2843
    %v2856 = vpack.c.b16 %v2846, %v2845
    %v2857 = vpack.c.b16 %v2848, %v2847
    %v2858 = vpack.c.b16 %v2850, %v2849
    %2867 = vmatpush.bf16.msra.mxu0 %v2858
    %2868 = vmatpush.bf16.msra.mxu0 %v2857
    %2869 = vmatpush.bf16.msra.mxu0 %v2856
    %2870 = vmatpush.bf16.msra.mxu0 %v2855
    %2871 = vmatpush.bf16.msra.mxu0 %v2854
    %2872 = vmatpush.bf16.msra.mxu0 %v2853
    %2873 = vmatpush.bf16.msra.mxu0 %v2852
    %2874 = vmatpush.bf16.msra.mxu0 %v2851
    %2875 = vmatmul.bf16.gmra.mxu0 %v2801
    %v2876 = vpop.f32.mrf.mxu0
    %v2877 = vadd.f32 0.0, %v2876
    %v2878 = vpop.f32.mrf.mxu0
    %v2879 = vadd.f32 0.0, %v2878
    %2880 = vdwg.mxu0
    %v2897 = vunpack.c.l.b16 %v2777
    %v2898 = vunpack.c.l.b16 %v2778
    %v2899 = vunpack.c.l.b16 %v2779
    %v2900 = vunpack.c.l.b16 %v2780
    %v2901 = vunpack.c.l.b16 %v2781
    %v2902 = vunpack.c.l.b16 %v2782
    %v2903 = vunpack.c.l.b16 %v2783
    %v2904 = vunpack.c.l.b16 %v2784
    %v2905 = vunpack.c.l.b16 %v2785
    %v2906 = vunpack.c.l.b16 %v2786
    %v2907 = vunpack.c.l.b16 %v2787
    %v2908 = vunpack.c.l.b16 %v2788
    %v2909 = vunpack.c.l.b16 %v2789
    %v2910 = vunpack.c.l.b16 %v2790
    %v2911 = vunpack.c.l.b16 %v2791
    %v2912 = vunpack.c.l.b16 %v2792
    %v2913 = vpack.c.b16 %v2898, %v2897
    %v2914 = vpack.c.b16 %v2900, %v2899
    %v2915 = vpack.c.b16 %v2902, %v2901
    %v2916 = vpack.c.b16 %v2904, %v2903
    %v2917 = vpack.c.b16 %v2906, %v2905
    %v2918 = vpack.c.b16 %v2908, %v2907
    %v2919 = vpack.c.b16 %v2910, %v2909
    %v2920 = vpack.c.b16 %v2912, %v2911
    %2929 = vmatpush.bf16.msra.mxu0 %v2920
    %2930 = vmatpush.bf16.msra.mxu0 %v2919
    %2931 = vmatpush.bf16.msra.mxu0 %v2918
    %2932 = vmatpush.bf16.msra.mxu0 %v2917
    %2933 = vmatpush.bf16.msra.mxu0 %v2916
    %2934 = vmatpush.bf16.msra.mxu0 %v2915
    %2935 = vmatpush.bf16.msra.mxu0 %v2914
    %2936 = vmatpush.bf16.msra.mxu0 %v2913
    %2937 = vmatmul.bf16.gmra.mxu0 %v2776
    %v2938 = vpop.f32.mrf.mxu0
    %v2939 = vadd.f32 %v2877, %v2938
    %v2940 = vpop.f32.mrf.mxu0
    %v2941 = vadd.f32 %v2879, %v2940
    %2942 = vdwg.mxu0
    %s2943 = scalar_lea.vmem [#allocation2], 2
    %v2944 = vld [vmem:[%s2943] ss:$8 sm:$0xf]
    %v2945 = vld [vmem:[%s2943] ss:$8 sm:$0xf0]
    %v2946 = vor.u32 %v2944, %v2945
    %s2947 = scalar_lea.vmem [#allocation2], 66
    %v2948 = vld [vmem:[%s2947] ss:$8 sm:$0xf]
    %v2949 = vld [vmem:[%s2947] ss:$8 sm:$0xf0]
    %v2950 = vor.u32 %v2948, %v2949
    %v2951 = vpack.c.bf16 %v2950, %v2946
    %s2952 = scalar_lea.vmem [#allocation12], 128
    %v2953 = vld [vmem:[%s2952] sm:$0xf]
    %v2954 = vld [vmem:[%s2952 + $0x4] sm:$0xf]
    %v2955 = vld [vmem:[%s2952 + $0x8] sm:$0xf]
    %v2956 = vld [vmem:[%s2952 + $0xc] sm:$0xf]
    %v2957 = vld [vmem:[%s2952 + $0x10] sm:$0xf]
    %v2958 = vld [vmem:[%s2952 + $0x14] sm:$0xf]
    %v2959 = vld [vmem:[%s2952 + $0x18] sm:$0xf]
    %v2960 = vld [vmem:[%s2952 + $0x1c] sm:$0xf]
    %v2961 = vld [vmem:[%s2952 + $0x20] sm:$0xf]
    %v2962 = vld [vmem:[%s2952 + $0x24] sm:$0xf]
    %v2963 = vld [vmem:[%s2952 + $0x28] sm:$0xf]
    %v2964 = vld [vmem:[%s2952 + $0x2c] sm:$0xf]
    %v2965 = vld [vmem:[%s2952 + $0x30] sm:$0xf]
    %v2966 = vld [vmem:[%s2952 + $0x34] sm:$0xf]
    %v2967 = vld [vmem:[%s2952 + $0x38] sm:$0xf]
    %v2968 = vld [vmem:[%s2952 + $0x3c] sm:$0xf]
    %v2985 = vunpack.c.l.b16 %v2953
    %v2986 = vunpack.c.l.b16 %v2954
    %v2987 = vunpack.c.l.b16 %v2955
    %v2988 = vunpack.c.l.b16 %v2956
    %v2989 = vunpack.c.l.b16 %v2957
    %v2990 = vunpack.c.l.b16 %v2958
    %v2991 = vunpack.c.l.b16 %v2959
    %v2992 = vunpack.c.l.b16 %v2960
    %v2993 = vunpack.c.l.b16 %v2961
    %v2994 = vunpack.c.l.b16 %v2962
    %v2995 = vunpack.c.l.b16 %v2963
    %v2996 = vunpack.c.l.b16 %v2964
    %v2997 = vunpack.c.l.b16 %v2965
    %v2998 = vunpack.c.l.b16 %v2966
    %v2999 = vunpack.c.l.b16 %v2967
    %v3000 = vunpack.c.l.b16 %v2968
    %v3001 = vpack.c.b16 %v2986, %v2985
    %v3002 = vpack.c.b16 %v2988, %v2987
    %v3003 = vpack.c.b16 %v2990, %v2989
    %v3004 = vpack.c.b16 %v2992, %v2991
    %v3005 = vpack.c.b16 %v2994, %v2993
    %v3006 = vpack.c.b16 %v2996, %v2995
    %v3007 = vpack.c.b16 %v2998, %v2997
    %v3008 = vpack.c.b16 %v3000, %v2999
    %3017 = vmatpush.bf16.msra.mxu0 %v3008
    %3018 = vmatpush.bf16.msra.mxu0 %v3007
    %3019 = vmatpush.bf16.msra.mxu0 %v3006
    %3020 = vmatpush.bf16.msra.mxu0 %v3005
    %3021 = vmatpush.bf16.msra.mxu0 %v3004
    %3022 = vmatpush.bf16.msra.mxu0 %v3003
    %3023 = vmatpush.bf16.msra.mxu0 %v3002
    %3024 = vmatpush.bf16.msra.mxu0 %v3001
    %3025 = vmatmul.bf16.gmra.mxu0 %v2951
    %v3026 = vpop.f32.mrf.mxu0
    %v3027 = vadd.f32 0.0, %v3026
    %v3028 = vpop.f32.mrf.mxu0
    %v3029 = vadd.f32 0.0, %v3028
    %3030 = vdwg.mxu0
    %v3031 = vadd.f32 %v2939, %v3027
    %v3032 = vadd.f32 %v2941, %v3029
    %s3033 = scalar_lea.vmem [#allocation2], 3
    %v3034 = vld [vmem:[%s3033] ss:$8 sm:$0xf]
    %v3035 = vld [vmem:[%s3033] ss:$8 sm:$0xf0]
    %v3036 = vor.u32 %v3034, %v3035
    %s3037 = scalar_lea.vmem [#allocation2], 67
    %v3038 = vld [vmem:[%s3037] ss:$8 sm:$0xf]
    %v3039 = vld [vmem:[%s3037] ss:$8 sm:$0xf0]
    %v3040 = vor.u32 %v3038, %v3039
    %v3041 = vpack.c.bf16 %v3040, %v3036
    %s3042 = scalar_lea.vmem [#allocation12], 192
    %v3043 = vld [vmem:[%s3042] sm:$0xf]
    %v3044 = vld [vmem:[%s3042 + $0x4] sm:$0xf]
    %v3045 = vld [vmem:[%s3042 + $0x8] sm:$0xf]
    %v3046 = vld [vmem:[%s3042 + $0xc] sm:$0xf]
    %v3047 = vld [vmem:[%s3042 + $0x10] sm:$0xf]
    %v3048 = vld [vmem:[%s3042 + $0x14] sm:$0xf]
    %v3049 = vld [vmem:[%s3042 + $0x18] sm:$0xf]
    %v3050 = vld [vmem:[%s3042 + $0x1c] sm:$0xf]
    %v3051 = vld [vmem:[%s3042 + $0x20] sm:$0xf]
    %v3052 = vld [vmem:[%s3042 + $0x24] sm:$0xf]
    %v3053 = vld [vmem:[%s3042 + $0x28] sm:$0xf]
    %v3054 = vld [vmem:[%s3042 + $0x2c] sm:$0xf]
    %v3055 = vld [vmem:[%s3042 + $0x30] sm:$0xf]
    %v3056 = vld [vmem:[%s3042 + $0x34] sm:$0xf]
    %v3057 = vld [vmem:[%s3042 + $0x38] sm:$0xf]
    %v3058 = vld [vmem:[%s3042 + $0x3c] sm:$0xf]
    %v3075 = vunpack.c.l.b16 %v3043
    %v3076 = vunpack.c.l.b16 %v3044
    %v3077 = vunpack.c.l.b16 %v3045
    %v3078 = vunpack.c.l.b16 %v3046
    %v3079 = vunpack.c.l.b16 %v3047
    %v3080 = vunpack.c.l.b16 %v3048
    %v3081 = vunpack.c.l.b16 %v3049
    %v3082 = vunpack.c.l.b16 %v3050
    %v3083 = vunpack.c.l.b16 %v3051
    %v3084 = vunpack.c.l.b16 %v3052
    %v3085 = vunpack.c.l.b16 %v3053
    %v3086 = vunpack.c.l.b16 %v3054
    %v3087 = vunpack.c.l.b16 %v3055
    %v3088 = vunpack.c.l.b16 %v3056
    %v3089 = vunpack.c.l.b16 %v3057
    %v3090 = vunpack.c.l.b16 %v3058
    %v3091 = vpack.c.b16 %v3076, %v3075
    %v3092 = vpack.c.b16 %v3078, %v3077
    %v3093 = vpack.c.b16 %v3080, %v3079
    %v3094 = vpack.c.b16 %v3082, %v3081
    %v3095 = vpack.c.b16 %v3084, %v3083
    %v3096 = vpack.c.b16 %v3086, %v3085
    %v3097 = vpack.c.b16 %v3088, %v3087
    %v3098 = vpack.c.b16 %v3090, %v3089
    %3107 = vmatpush.bf16.msra.mxu0 %v3098
    %3108 = vmatpush.bf16.msra.mxu0 %v3097
    %3109 = vmatpush.bf16.msra.mxu0 %v3096
    %3110 = vmatpush.bf16.msra.mxu0 %v3095
    %3111 = vmatpush.bf16.msra.mxu0 %v3094
    %3112 = vmatpush.bf16.msra.mxu0 %v3093
    %3113 = vmatpush.bf16.msra.mxu0 %v3092
    %3114 = vmatpush.bf16.msra.mxu0 %v3091
    %3115 = vmatmul.bf16.gmra.mxu0 %v3041
    %v3116 = vpop.f32.mrf.mxu0
    %v3117 = vadd.f32 0.0, %v3116
    %v3118 = vpop.f32.mrf.mxu0
    %v3119 = vadd.f32 0.0, %v3118
    %3120 = vdwg.mxu0
    %v3121 = vadd.f32 %v3031, %v3117
    %v3122 = vadd.f32 %v3032, %v3119
    %s3123 = scalar_lea.vmem [#allocation2], 4
    %v3124 = vld [vmem:[%s3123] ss:$8 sm:$0xf]
    %v3125 = vld [vmem:[%s3123] ss:$8 sm:$0xf0]
    %v3126 = vor.u32 %v3124, %v3125
    %s3127 = scalar_lea.vmem [#allocation2], 68
    %v3128 = vld [vmem:[%s3127] ss:$8 sm:$0xf]
    %v3129 = vld [vmem:[%s3127] ss:$8 sm:$0xf0]
    %v3130 = vor.u32 %v3128, %v3129
    %v3131 = vpack.c.bf16 %v3130, %v3126
    %s3132 = scalar_lea.vmem [#allocation12], 256
    %v3133 = vld [vmem:[%s3132] sm:$0xf]
    %v3134 = vld [vmem:[%s3132 + $0x4] sm:$0xf]
    %v3135 = vld [vmem:[%s3132 + $0x8] sm:$0xf]
    %v3136 = vld [vmem:[%s3132 + $0xc] sm:$0xf]
    %v3137 = vld [vmem:[%s3132 + $0x10] sm:$0xf]
    %v3138 = vld [vmem:[%s3132 + $0x14] sm:$0xf]
    %v3139 = vld [vmem:[%s3132 + $0x18] sm:$0xf]
    %v3140 = vld [vmem:[%s3132 + $0x1c] sm:$0xf]
    %v3141 = vld [vmem:[%s3132 + $0x20] sm:$0xf]
    %v3142 = vld [vmem:[%s3132 + $0x24] sm:$0xf]
    %v3143 = vld [vmem:[%s3132 + $0x28] sm:$0xf]
    %v3144 = vld [vmem:[%s3132 + $0x2c] sm:$0xf]
    %v3145 = vld [vmem:[%s3132 + $0x30] sm:$0xf]
    %v3146 = vld [vmem:[%s3132 + $0x34] sm:$0xf]
    %v3147 = vld [vmem:[%s3132 + $0x38] sm:$0xf]
    %v3148 = vld [vmem:[%s3132 + $0x3c] sm:$0xf]
    %v3165 = vunpack.c.l.b16 %v3133
    %v3166 = vunpack.c.l.b16 %v3134
    %v3167 = vunpack.c.l.b16 %v3135
    %v3168 = vunpack.c.l.b16 %v3136
    %v3169 = vunpack.c.l.b16 %v3137
    %v3170 = vunpack.c.l.b16 %v3138
    %v3171 = vunpack.c.l.b16 %v3139
    %v3172 = vunpack.c.l.b16 %v3140
    %v3173 = vunpack.c.l.b16 %v3141
    %v3174 = vunpack.c.l.b16 %v3142
    %v3175 = vunpack.c.l.b16 %v3143
    %v3176 = vunpack.c.l.b16 %v3144
    %v3177 = vunpack.c.l.b16 %v3145
    %v3178 = vunpack.c.l.b16 %v3146
    %v3179 = vunpack.c.l.b16 %v3147
    %v3180 = vunpack.c.l.b16 %v3148
    %v3181 = vpack.c.b16 %v3166, %v3165
    %v3182 = vpack.c.b16 %v3168, %v3167
    %v3183 = vpack.c.b16 %v3170, %v3169
    %v3184 = vpack.c.b16 %v3172, %v3171
    %v3185 = vpack.c.b16 %v3174, %v3173
    %v3186 = vpack.c.b16 %v3176, %v3175
    %v3187 = vpack.c.b16 %v3178, %v3177
    %v3188 = vpack.c.b16 %v3180, %v3179
    %3197 = vmatpush.bf16.msra.mxu0 %v3188
    %3198 = vmatpush.bf16.msra.mxu0 %v3187
    %3199 = vmatpush.bf16.msra.mxu0 %v3186
    %3200 = vmatpush.bf16.msra.mxu0 %v3185
    %3201 = vmatpush.bf16.msra.mxu0 %v3184
    %3202 = vmatpush.bf16.msra.mxu0 %v3183
    %3203 = vmatpush.bf16.msra.mxu0 %v3182
    %3204 = vmatpush.bf16.msra.mxu0 %v3181
    %3205 = vmatmul.bf16.gmra.mxu0 %v3131
    %v3206 = vpop.f32.mrf.mxu0
    %v3207 = vadd.f32 0.0, %v3206
    %v3208 = vpop.f32.mrf.mxu0
    %v3209 = vadd.f32 0.0, %v3208
    %3210 = vdwg.mxu0
    %v3211 = vadd.f32 %v3121, %v3207
    %v3212 = vadd.f32 %v3122, %v3209
    %s3213 = scalar_lea.vmem [#allocation2], 5
    %v3214 = vld [vmem:[%s3213] ss:$8 sm:$0xf]
    %v3215 = vld [vmem:[%s3213] ss:$8 sm:$0xf0]
    %v3216 = vor.u32 %v3214, %v3215
    %s3217 = scalar_lea.vmem [#allocation2], 69
    %v3218 = vld [vmem:[%s3217] ss:$8 sm:$0xf]
    %v3219 = vld [vmem:[%s3217] ss:$8 sm:$0xf0]
    %v3220 = vor.u32 %v3218, %v3219
    %v3221 = vpack.c.bf16 %v3220, %v3216
    %s3222 = scalar_lea.vmem [#allocation12], 320
    %v3223 = vld [vmem:[%s3222] sm:$0xf]
    %v3224 = vld [vmem:[%s3222 + $0x4] sm:$0xf]
    %v3225 = vld [vmem:[%s3222 + $0x8] sm:$0xf]
    %v3226 = vld [vmem:[%s3222 + $0xc] sm:$0xf]
    %v3227 = vld [vmem:[%s3222 + $0x10] sm:$0xf]
    %v3228 = vld [vmem:[%s3222 + $0x14] sm:$0xf]
    %v3229 = vld [vmem:[%s3222 + $0x18] sm:$0xf]
    %v3230 = vld [vmem:[%s3222 + $0x1c] sm:$0xf]
    %v3231 = vld [vmem:[%s3222 + $0x20] sm:$0xf]
    %v3232 = vld [vmem:[%s3222 + $0x24] sm:$0xf]
    %v3233 = vld [vmem:[%s3222 + $0x28] sm:$0xf]
    %v3234 = vld [vmem:[%s3222 + $0x2c] sm:$0xf]
    %v3235 = vld [vmem:[%s3222 + $0x30] sm:$0xf]
    %v3236 = vld [vmem:[%s3222 + $0x34] sm:$0xf]
    %v3237 = vld [vmem:[%s3222 + $0x38] sm:$0xf]
    %v3238 = vld [vmem:[%s3222 + $0x3c] sm:$0xf]
    %v3255 = vunpack.c.l.b16 %v3223
    %v3256 = vunpack.c.l.b16 %v3224
    %v3257 = vunpack.c.l.b16 %v3225
    %v3258 = vunpack.c.l.b16 %v3226
    %v3259 = vunpack.c.l.b16 %v3227
    %v3260 = vunpack.c.l.b16 %v3228
    %v3261 = vunpack.c.l.b16 %v3229
    %v3262 = vunpack.c.l.b16 %v3230
    %v3263 = vunpack.c.l.b16 %v3231
    %v3264 = vunpack.c.l.b16 %v3232
    %v3265 = vunpack.c.l.b16 %v3233
    %v3266 = vunpack.c.l.b16 %v3234
    %v3267 = vunpack.c.l.b16 %v3235
    %v3268 = vunpack.c.l.b16 %v3236
    %v3269 = vunpack.c.l.b16 %v3237
    %v3270 = vunpack.c.l.b16 %v3238
    %v3271 = vpack.c.b16 %v3256, %v3255
    %v3272 = vpack.c.b16 %v3258, %v3257
    %v3273 = vpack.c.b16 %v3260, %v3259
    %v3274 = vpack.c.b16 %v3262, %v3261
    %v3275 = vpack.c.b16 %v3264, %v3263
    %v3276 = vpack.c.b16 %v3266, %v3265
    %v3277 = vpack.c.b16 %v3268, %v3267
    %v3278 = vpack.c.b16 %v3270, %v3269
    %3287 = vmatpush.bf16.msra.mxu0 %v3278
    %3288 = vmatpush.bf16.msra.mxu0 %v3277
    %3289 = vmatpush.bf16.msra.mxu0 %v3276
    %3290 = vmatpush.bf16.msra.mxu0 %v3275
    %3291 = vmatpush.bf16.msra.mxu0 %v3274
    %3292 = vmatpush.bf16.msra.mxu0 %v3273
    %3293 = vmatpush.bf16.msra.mxu0 %v3272
    %3294 = vmatpush.bf16.msra.mxu0 %v3271
    %3295 = vmatmul.bf16.gmra.mxu0 %v3221
    %v3296 = vpop.f32.mrf.mxu0
    %v3297 = vadd.f32 0.0, %v3296
    %v3298 = vpop.f32.mrf.mxu0
    %v3299 = vadd.f32 0.0, %v3298
    %3300 = vdwg.mxu0
    %v3301 = vadd.f32 %v3211, %v3297
    %v3302 = vadd.f32 %v3212, %v3299
    %s3303 = scalar_lea.vmem [#allocation2], 6
    %v3304 = vld [vmem:[%s3303] ss:$8 sm:$0xf]
    %v3305 = vld [vmem:[%s3303] ss:$8 sm:$0xf0]
    %v3306 = vor.u32 %v3304, %v3305
    %s3307 = scalar_lea.vmem [#allocation2], 70
    %v3308 = vld [vmem:[%s3307] ss:$8 sm:$0xf]
    %v3309 = vld [vmem:[%s3307] ss:$8 sm:$0xf0]
    %v3310 = vor.u32 %v3308, %v3309
    %v3311 = vpack.c.bf16 %v3310, %v3306
    %s3312 = scalar_lea.vmem [#allocation12], 384
    %v3313 = vld [vmem:[%s3312] sm:$0xf]
    %v3314 = vld [vmem:[%s3312 + $0x4] sm:$0xf]
    %v3315 = vld [vmem:[%s3312 + $0x8] sm:$0xf]
    %v3316 = vld [vmem:[%s3312 + $0xc] sm:$0xf]
    %v3317 = vld [vmem:[%s3312 + $0x10] sm:$0xf]
    %v3318 = vld [vmem:[%s3312 + $0x14] sm:$0xf]
    %v3319 = vld [vmem:[%s3312 + $0x18] sm:$0xf]
    %v3320 = vld [vmem:[%s3312 + $0x1c] sm:$0xf]
    %v3321 = vld [vmem:[%s3312 + $0x20] sm:$0xf]
    %v3322 = vld [vmem:[%s3312 + $0x24] sm:$0xf]
    %v3323 = vld [vmem:[%s3312 + $0x28] sm:$0xf]
    %v3324 = vld [vmem:[%s3312 + $0x2c] sm:$0xf]
    %v3325 = vld [vmem:[%s3312 + $0x30] sm:$0xf]
    %v3326 = vld [vmem:[%s3312 + $0x34] sm:$0xf]
    %v3327 = vld [vmem:[%s3312 + $0x38] sm:$0xf]
    %v3328 = vld [vmem:[%s3312 + $0x3c] sm:$0xf]
    %v3345 = vunpack.c.l.b16 %v3313
    %v3346 = vunpack.c.l.b16 %v3314
    %v3347 = vunpack.c.l.b16 %v3315
    %v3348 = vunpack.c.l.b16 %v3316
    %v3349 = vunpack.c.l.b16 %v3317
    %v3350 = vunpack.c.l.b16 %v3318
    %v3351 = vunpack.c.l.b16 %v3319
    %v3352 = vunpack.c.l.b16 %v3320
    %v3353 = vunpack.c.l.b16 %v3321
    %v3354 = vunpack.c.l.b16 %v3322
    %v3355 = vunpack.c.l.b16 %v3323
    %v3356 = vunpack.c.l.b16 %v3324
    %v3357 = vunpack.c.l.b16 %v3325
    %v3358 = vunpack.c.l.b16 %v3326
    %v3359 = vunpack.c.l.b16 %v3327
    %v3360 = vunpack.c.l.b16 %v3328
    %v3361 = vpack.c.b16 %v3346, %v3345
    %v3362 = vpack.c.b16 %v3348, %v3347
    %v3363 = vpack.c.b16 %v3350, %v3349
    %v3364 = vpack.c.b16 %v3352, %v3351
    %v3365 = vpack.c.b16 %v3354, %v3353
    %v3366 = vpack.c.b16 %v3356, %v3355
    %v3367 = vpack.c.b16 %v3358, %v3357
    %v3368 = vpack.c.b16 %v3360, %v3359
    %3377 = vmatpush.bf16.msra.mxu0 %v3368
    %3378 = vmatpush.bf16.msra.mxu0 %v3367
    %3379 = vmatpush.bf16.msra.mxu0 %v3366
    %3380 = vmatpush.bf16.msra.mxu0 %v3365
    %3381 = vmatpush.bf16.msra.mxu0 %v3364
    %3382 = vmatpush.bf16.msra.mxu0 %v3363
    %3383 = vmatpush.bf16.msra.mxu0 %v3362
    %3384 = vmatpush.bf16.msra.mxu0 %v3361
    %3385 = vmatmul.bf16.gmra.mxu0 %v3311
    %v3386 = vpop.f32.mrf.mxu0
    %v3387 = vadd.f32 0.0, %v3386
    %v3388 = vpop.f32.mrf.mxu0
    %v3389 = vadd.f32 0.0, %v3388
    %3390 = vdwg.mxu0
    %v3391 = vadd.f32 %v3301, %v3387
    %v3392 = vadd.f32 %v3302, %v3389
    %s3393 = scalar_lea.vmem [#allocation2], 7
    %v3394 = vld [vmem:[%s3393] ss:$8 sm:$0xf]
    %v3395 = vld [vmem:[%s3393] ss:$8 sm:$0xf0]
    %v3396 = vor.u32 %v3394, %v3395
    %s3397 = scalar_lea.vmem [#allocation2], 71
    %v3398 = vld [vmem:[%s3397] ss:$8 sm:$0xf]
    %v3399 = vld [vmem:[%s3397] ss:$8 sm:$0xf0]
    %v3400 = vor.u32 %v3398, %v3399
    %v3401 = vpack.c.bf16 %v3400, %v3396
    %s3402 = scalar_lea.vmem [#allocation12], 448
    %v3403 = vld [vmem:[%s3402] sm:$0xf]
    %v3404 = vld [vmem:[%s3402 + $0x4] sm:$0xf]
    %v3405 = vld [vmem:[%s3402 + $0x8] sm:$0xf]
    %v3406 = vld [vmem:[%s3402 + $0xc] sm:$0xf]
    %v3407 = vld [vmem:[%s3402 + $0x10] sm:$0xf]
    %v3408 = vld [vmem:[%s3402 + $0x14] sm:$0xf]
    %v3409 = vld [vmem:[%s3402 + $0x18] sm:$0xf]
    %v3410 = vld [vmem:[%s3402 + $0x1c] sm:$0xf]
    %v3411 = vld [vmem:[%s3402 + $0x20] sm:$0xf]
    %v3412 = vld [vmem:[%s3402 + $0x24] sm:$0xf]
    %v3413 = vld [vmem:[%s3402 + $0x28] sm:$0xf]
    %v3414 = vld [vmem:[%s3402 + $0x2c] sm:$0xf]
    %v3415 = vld [vmem:[%s3402 + $0x30] sm:$0xf]
    %v3416 = vld [vmem:[%s3402 + $0x34] sm:$0xf]
    %v3417 = vld [vmem:[%s3402 + $0x38] sm:$0xf]
    %v3418 = vld [vmem:[%s3402 + $0x3c] sm:$0xf]
    %v3435 = vunpack.c.l.b16 %v3403
    %v3436 = vunpack.c.l.b16 %v3404
    %v3437 = vunpack.c.l.b16 %v3405
    %v3438 = vunpack.c.l.b16 %v3406
    %v3439 = vunpack.c.l.b16 %v3407
    %v3440 = vunpack.c.l.b16 %v3408
    %v3441 = vunpack.c.l.b16 %v3409
    %v3442 = vunpack.c.l.b16 %v3410
    %v3443 = vunpack.c.l.b16 %v3411
    %v3444 = vunpack.c.l.b16 %v3412
    %v3445 = vunpack.c.l.b16 %v3413
    %v3446 = vunpack.c.l.b16 %v3414
    %v3447 = vunpack.c.l.b16 %v3415
    %v3448 = vunpack.c.l.b16 %v3416
    %v3449 = vunpack.c.l.b16 %v3417
    %v3450 = vunpack.c.l.b16 %v3418
    %v3451 = vpack.c.b16 %v3436, %v3435
    %v3452 = vpack.c.b16 %v3438, %v3437
    %v3453 = vpack.c.b16 %v3440, %v3439
    %v3454 = vpack.c.b16 %v3442, %v3441
    %v3455 = vpack.c.b16 %v3444, %v3443
    %v3456 = vpack.c.b16 %v3446, %v3445
    %v3457 = vpack.c.b16 %v3448, %v3447
    %v3458 = vpack.c.b16 %v3450, %v3449
    %3467 = vmatpush.bf16.msra.mxu0 %v3458
    %3468 = vmatpush.bf16.msra.mxu0 %v3457
    %3469 = vmatpush.bf16.msra.mxu0 %v3456
    %3470 = vmatpush.bf16.msra.mxu0 %v3455
    %3471 = vmatpush.bf16.msra.mxu0 %v3454
    %3472 = vmatpush.bf16.msra.mxu0 %v3453
    %3473 = vmatpush.bf16.msra.mxu0 %v3452
    %3474 = vmatpush.bf16.msra.mxu0 %v3451
    %3475 = vmatmul.bf16.gmra.mxu0 %v3401
    %v3476 = vpop.f32.mrf.mxu0
    %v3477 = vadd.f32 0.0, %v3476
    %v3478 = vpop.f32.mrf.mxu0
    %v3479 = vadd.f32 0.0, %v3478
    %3480 = vdwg.mxu0
    %v3481 = vadd.f32 %v3391, %v3477
    %v3482 = vadd.f32 %v3392, %v3479
    %v3483 = vld [vmem:[%s7] sm:$0x1]
    %v3485 = vperm.slane %v3483, 0
    %v3487 = vadd.f32 %v3481, %v3485
    %v3488 = vadd.f32 %v3482, %v3485
    %v3489 = vmax.f32 %v3487, 0.0
    %v3490 = vmax.f32 %v3488, 0.0
    %v3491 = vadd.f32 %v3489, %v3490
    %v3492 = vrot.slane %v3491, 4
    %v3493 = vadd.f32 %v3491, %v3492
    %v3494 = vrot.slane %v3493, 2
    %v3495 = vadd.f32 %v3493, %v3494
    %v3496 = vrot.slane %v3495, 1
    %v3497 = vadd.f32 %v3495, %v3496
    %v3498 = vrcp.pop 16.0
    %v3499 = vmul.f32 16.0, %v3498
    %v3500 = vsub.f32 1.0, %v3499
    %v3501 = vmul.f32 %v3498, %v3500
    %v3502 = vadd.f32 %v3498, %v3501
    %vm3503 = vweird.f32 %v3498
    %v3504 = vsel %vm3503, %v3498, %v3502
    %v3505 = vmul.f32 %v3497, %v3504
    %v3506 = vpack.c.bf16 %v3505, %v3505
    %v3507 = vld [vmem:[#allocation14] sm:$0xf]
    %v3508 = vld [vmem:[#allocation14 + $0x4] sm:$0xf]
    %v3509 = vld [vmem:[#allocation14 + $0x8] sm:$0xf]
    %v3510 = vld [vmem:[#allocation14 + $0xc] sm:$0xf]
    %v3511 = vld [vmem:[#allocation14 + $0x10] sm:$0xf]
    %v3512 = vld [vmem:[#allocation14 + $0x14] sm:$0xf]
    %v3513 = vld [vmem:[#allocation14 + $0x18] sm:$0xf]
    %v3514 = vld [vmem:[#allocation14 + $0x1c] sm:$0xf]
    %v3515 = vld [vmem:[#allocation14 + $0x20] sm:$0xf]
    %v3516 = vld [vmem:[#allocation14 + $0x24] sm:$0xf]
    %v3517 = vld [vmem:[#allocation14 + $0x28] sm:$0xf]
    %v3518 = vld [vmem:[#allocation14 + $0x2c] sm:$0xf]
    %v3519 = vld [vmem:[#allocation14 + $0x30] sm:$0xf]
    %v3520 = vld [vmem:[#allocation14 + $0x34] sm:$0xf]
    %v3521 = vld [vmem:[#allocation14 + $0x38] sm:$0xf]
    %v3522 = vld [vmem:[#allocation14 + $0x3c] sm:$0xf]
    %v3523 = vld [vmem:[%s9] sm:$0x1]
    %v3540 = vunpack.c.l.b16 %v3507
    %v3541 = vunpack.c.l.b16 %v3508
    %v3542 = vunpack.c.l.b16 %v3509
    %v3543 = vunpack.c.l.b16 %v3510
    %v3544 = vunpack.c.l.b16 %v3511
    %v3545 = vunpack.c.l.b16 %v3512
    %v3546 = vunpack.c.l.b16 %v3513
    %v3547 = vunpack.c.l.b16 %v3514
    %v3548 = vunpack.c.l.b16 %v3515
    %v3549 = vunpack.c.l.b16 %v3516
    %v3550 = vunpack.c.l.b16 %v3517
    %v3551 = vunpack.c.l.b16 %v3518
    %v3552 = vunpack.c.l.b16 %v3519
    %v3553 = vunpack.c.l.b16 %v3520
    %v3554 = vunpack.c.l.b16 %v3521
    %v3555 = vunpack.c.l.b16 %v3522
    %v3556 = vpack.c.b16 %v3541, %v3540
    %v3557 = vpack.c.b16 %v3543, %v3542
    %v3558 = vpack.c.b16 %v3545, %v3544
    %v3559 = vpack.c.b16 %v3547, %v3546
    %v3560 = vpack.c.b16 %v3549, %v3548
    %v3561 = vpack.c.b16 %v3551, %v3550
    %v3562 = vpack.c.b16 %v3553, %v3552
    %v3563 = vpack.c.b16 %v3555, %v3554
    %3572 = vmatpush.bf16.msra.mxu0 %v3563
    %3573 = vmatpush.bf16.msra.mxu0 %v3562
    %3574 = vmatpush.bf16.msra.mxu0 %v3561
    %3575 = vmatpush.bf16.msra.mxu0 %v3560
    %3576 = vmatpush.bf16.msra.mxu0 %v3559
    %3577 = vmatpush.bf16.msra.mxu0 %v3558
    %3578 = vmatpush.bf16.msra.mxu0 %v3557
    %3579 = vmatpush.bf16.msra.mxu0 %v3556
    %3580 = vmatmul.bf16.gmra.mxu0 %v3506
    %v3581 = vpop.f32.mrf.mxu0
    %v3582 = vadd.f32 %v3523, %v3581
    %v3583 = vpop.f32.mrf.mxu0
    %3584 = vdwg.mxu0
    %v3588 = vrot.slane %v2767, 7
    %v3589 = vrot.slane %v3582, 6
    %v3590 = vsel %vm2562, %v2747, %v3588
    %vm3591 = vcmask 1041408
    %v3592 = vsel %vm3591, %v3590, %v3589
    %v3594 = vlaneseq
    %vm3595 = vcmp.ge.s32.totalorder %v3594, 0
    %vm3596 = vcmp.lt.s32.totalorder %v3594, 384
    %vm3597 = vmand %vm3595, %vm3596
    %3598 = vst.msk [vmem:[#allocation15] sm:$0x7] %vm3597, %v3592
    // Predicated region
    $region70: #{tpu_custom_call.1} parent=1 // pred_check
      _
    $region71: #{tpu_custom_call.1} parent=1 // pred_check_branch
      %3600 = sbr.rel (0) target = $region73
    $region72: #{tpu_custom_call.1} parent=1 // pred_region
      %3602 = vsyncadd [#allocation5], 0
      %s3604 = sshll.u32 [#allocation15], 4
      %s3605 = int_to_ptr.vmem [resolvable:$true] %s3604
      %s3606 = sshll.u32 %s10, 4
      %s3607 = int_to_ptr.hbm [resolvable:$true] %s3606
      %3609 = dma.vmem_to_hbm [thread:$0]  %s3605, 48, %s3607, [#allocation5]
    $region73: #{tpu_custom_call.1} parent=1 // pred_fallthru
      _
    // Predicated region
    $region74: #{tpu_custom_call.1} parent=1 // pred_check
      _
    $region75: #{tpu_custom_call.1} parent=1 // pred_check_branch
      %3611 = sbr.rel (0) target = $region77
    $region76: #{tpu_custom_call.1} parent=1 // pred_region
      %3613 = dma.done [#allocation5], 48
    $region77: #{tpu_custom_call.1} parent=1 // pred_fallthru
      _
    %3614 = vsyncpa [#allocation4], 1
    %3615 = vsyncpa [#allocation7], 1
    %3616 = vsyncpa [#allocation10], 1
    %3617 = vsyncpa [#allocation13], 1
    %3618 = vsyncpa [#allocation5], 1

</llo_original>
